<compile_context>
chip_gen: v6e
topology: v6e:2x2x1
jax: 0.10.0
libtpu: 0.0.40
codegen_flags: <defaults>
</compile_context>

<pallas_src>
import functools
import math

import jax
import jax.numpy as jnp
from jax.experimental import pallas as pl
from jax.experimental.pallas import tpu as pltpu


_VMEM_LIMIT = 32 * 1024 * 1024   # explicit scoped-VMEM budget (safe on v5e/v6e/v7x)


def _round_up(v, m):
    return ((v + m - 1) // m) * m


def _pick_conv_row_tile(H, W, Cin, Cout, budget=20 * 1024 * 1024):
    """Largest even divisor of H whose per-step VMEM stays under `budget`,
    preferring >= 2 row tiles so both v7x TensorCores get work at batch 1."""
    divs = [r for r in range(2, H + 1, 2) if H % r == 0]

    def vmem(r):
        bf = 2
        main = 2 * r * (W + 2) * Cin * bf            # double-buffered input rows
        halo = 2 * 2 * (W + 2) * Cin * bf
        wgt = 2 * 9 * Cin * Cout * bf
        out = 2 * (r // 2) * W * Cout * bf
        xbuf = (r + 2) * (W + 2) * Cin * bf
        patch = r * W * 3 * Cin * bf
        acc = r * W * Cout * 4
        return main + halo + wgt + out + xbuf + patch + acc

    ok = [r for r in divs if vmem(r) <= budget] or divs[:1]
    multi = [r for r in ok if H // r >= 2]
    return max(multi) if multi else max(ok)


def _pick_rows_block(rows, cap=256):
    """Row-block size for the w-pool kernel: divides `rows`, <= cap, >=2 steps."""
    cands = [b for b in range(1, min(rows, cap) + 1) if rows % b == 0]
    multi = [b for b in cands if rows // b >= 2]
    if multi:
        return max(multi)
    return max(cands) if cands else rows


# ----------------------------------------------------------------------------
# Pallas kernels
# ----------------------------------------------------------------------------
def _conv3x3_relu_hpool_kernel(xm_ref, xh_ref, w_ref, b_ref, o_ref, xbuf, patch):
    """Fused 3x3 conv + bias + ReLU + h-pair max for one (image, row-tile) step.

    xm_ref: (1, R, W+2, Cin)  bf16 -- R main rows of the zero-padded input
    xh_ref: (1, 2, W+2, Cin)  bf16 -- 2-row halo (first padded rows of next tile)
    w_ref : (3, 3*Cin, Cout)  bf16 -- one K-slab per kh tap, K ordered (kw, cin)
    b_ref : (1, Cout)         f32
    o_ref : (1, R//2, W, Cout) bf16 -- conv+ReLU output with the h-pair max applied
    xbuf  : VMEM (R+2, W+2, Cin) bf16 scratch
    patch : VMEM (R*W, 3*Cin)    bf16 scratch (in-VMEM im2col, no HBM staging)
    """
    R = xm_ref.shape[1]
    Cin = xm_ref.shape[3]
    _, Rh, W, Cout = o_ref.shape                     # Rh == R // 2

    # Stitch the row tile and its 2-row halo into one contiguous VMEM buffer.
    xbuf[0:R] = xm_ref[0]
    xbuf[R:R + 2] = xh_ref[0]

    acc = jnp.zeros((R * W, Cout), jnp.float32)
    for kh in range(3):
        rows = xbuf[kh:kh + R]                       # (R, W+2, Cin), leading slice
        for kw in range(3):
            patch[:, kw * Cin:(kw + 1) * Cin] = (
                rows[:, kw:kw + W, :].reshape(R * W, Cin))
        acc = acc + jnp.dot(patch[...], w_ref[kh],
                            preferred_element_type=jnp.float32)

    y = jnp.maximum(acc + b_ref[...], 0.0)           # (R*W, Cout), f32
    y = y.reshape(Rh, 2, W, Cout)
    yh = jnp.maximum(y[:, 0], y[:, 1])               # max over the h pair
    o_ref[...] = yh.reshape(1, Rh, W, Cout).astype(o_ref.dtype)


def _maxpool_w_kernel(x_ref, o_ref):
    """x_ref: (rows, W/2, 2*C) -- w-pair interleaved on the lane axis."""
    C = o_ref.shape[-1]
    x = x_ref[...]
    o_ref[...] = jnp.maximum(x[:, :, :C], x[:, :, C:])


def _matmul_bias_single_k_kernel(x_ref, w_ref, b_ref, o_ref, *, apply_relu):
    """Whole K in one block: no K grid axis, no accumulator scratch."""
    y = jnp.dot(x_ref[...], w_ref[...], preferred_element_type=jnp.float32)
    y = y + b_ref[...]
    if apply_relu:                                   # trace-time constant
        y = jnp.maximum(y, 0.0)
    o_ref[...] = y.astype(o_ref.dtype)


def _matmul_bias_acc_kernel(x_ref, w_ref, b_ref, o_ref, acc_ref, *, apply_relu):
    """General path (large K, e.g. the real 46592->4096 classifier layer)."""
    k = pl.program_id(2)

    @pl.when(k == 0)
    def _():
        acc_ref[...] = jnp.zeros_like(acc_ref)

    acc_ref[...] += jnp.dot(x_ref[...], w_ref[...],
                            preferred_element_type=jnp.float32)

    @pl.when(k == pl.num_programs(2) - 1)
    def _():
        y = acc_ref[...] + b_ref[...]
        if apply_relu:
            y = jnp.maximum(y, 0.0)
        o_ref[...] = y.astype(o_ref.dtype)


# ----------------------------------------------------------------------------
# Wrappers
# ----------------------------------------------------------------------------
def conv3x3_relu_hpool_pallas(x_nhwc, w3, b):
    """3x3 conv (stride 1, pad 1) + ReLU + max over the h pair of the 2x2 pool.

    x_nhwc: (N, H, W, Cin) bf16; w3: (3, 3*Cin, Cout) bf16; b: (1, Cout) f32.
    Returns (N, H//2, W, Cout) bf16 (h-pooled, w not yet pooled).
    """
    N, H, W, Cin = x_nhwc.shape
    Cout = w3.shape[-1]
    # TODO(synk): odd H/W (e.g. the real 14x14 stage) needs explicit handling;
    # all shapes produced in this script are even and W is a multiple of 8.
    assert H % 2 == 0 and W % 2 == 0
    R = _pick_conv_row_tile(H, W, Cin, Cout)
    T = H // R
    xpad = jnp.pad(x_nhwc, ((0, 0), (1, 1), (1, 1), (0, 0)))   # (N, H+2, W+2, Cin)
    Wp2 = W + 2
    K = 3 * Cin
    cost = pl.CostEstimate(
        flops=2 * N * H * W * 9 * Cin * Cout, transcendentals=0,
        bytes_accessed=xpad.size * 2 + w3.size * 2 + b.size * 4
        + N * (H // 2) * W * Cout * 2)
    return pl.pallas_call(
        _conv3x3_relu_hpool_kernel,
        out_shape=jax.ShapeDtypeStruct((N, H // 2, W, Cout), jnp.bfloat16),
        grid=(N, T),
        in_specs=[
            # main rows of this tile
            pl.BlockSpec((1, R, Wp2, Cin), lambda n, t: (n, t, 0, 0)),
            # 2-row halo = the first 2 padded rows after this tile (always in bounds)
            pl.BlockSpec((1, 2, Wp2, Cin),
                         lambda n, t: (n, (t + 1) * (R // 2), 0, 0)),
            pl.BlockSpec((3, K, Cout), lambda n, t: (0, 0, 0)),
            pl.BlockSpec((1, Cout), lambda n, t: (0, 0)),
        ],
        out_specs=pl.BlockSpec((1, R // 2, W, Cout), lambda n, t: (n, t, 0, 0)),
        scratch_shapes=[
            pltpu.VMEM((R + 2, Wp2, Cin), jnp.bfloat16),
            pltpu.VMEM((R * W, K), jnp.bfloat16),
        ],
        compiler_params=pltpu.CompilerParams(
            dimension_semantics=("parallel", "parallel"),
            vmem_limit_bytes=_VMEM_LIMIT),
        cost_estimate=cost,
    )(xpad, xpad, w3, b)


def maxpool_w_pallas(x):
    """Finish the 2x2 max pool along W on the already h-pooled feature map."""
    N, Hh, W, C = x.shape
    assert W % 2 == 0
    Wh = W // 2
    rows = N * Hh
    # Free (contiguous) reshape: w-pair interleaved on the lane axis as 2*C.
    xr = x.reshape(rows, Wh, 2 * C)
    bm = _pick_rows_block(rows)
    # TODO(synk): output last dim C < 128 means masked stores; a lane-dense
    # (rows, Wh*C) output would need an in-kernel sublane->lane reshape.
    out = pl.pallas_call(
        _maxpool_w_kernel,
        out_shape=jax.ShapeDtypeStruct((rows, Wh, C), x.dtype),
        grid=(rows // bm,),
        in_specs=[pl.BlockSpec((bm, Wh, 2 * C), lambda i: (i, 0, 0))],
        out_specs=pl.BlockSpec((bm, Wh, C), lambda i: (i, 0, 0)),
        compiler_params=pltpu.CompilerParams(
            dimension_semantics=("parallel",),
            vmem_limit_bytes=_VMEM_LIMIT),
    )(xr)
    return out.reshape(N, Hh, Wh, C)


def linear_pallas(x, w, b, *, relu, out_dtype=jnp.bfloat16):
    """y = relu?(x @ w + b).  x: (M, K), w: (K, N), b: (N,).  bf16 MXU, f32 acc."""
    M, K = x.shape
    K2, N = w.shape
    assert K == K2
    bm = min(_round_up(M, 16), 256)          # bf16 packs 16 rows per sublane group
    bn = min(_round_up(N, 128), 2048)        # big N tiles: few grid steps, dense vst
    bk = min(_round_up(K, 128), 1024)        # weight tile (bk*bn*2B) stays <= 4 MiB
    Mp, Np, Kp = _round_up(M, bm), _round_up(N, bn), _round_up(K, bk)

    xp = jnp.pad(x.astype(jnp.bfloat16), ((0, Mp - M), (0, Kp - K)))
    wp = jnp.pad(w.astype(jnp.bfloat16), ((0, Kp - K), (0, Np - N)))
    bp = jnp.pad(b.astype(jnp.float32).reshape(1, N), ((0, 0), (0, Np - N)))

    out_itemsize = jnp.dtype(out_dtype).itemsize
    cost = pl.CostEstimate(
        flops=2 * M * K * N, transcendentals=0,
        bytes_accessed=xp.size * 2 + wp.size * 2 + bp.size * 4 + Mp * Np * out_itemsize)

    nk = Kp // bk
    if nk == 1:
        out = pl.pallas_call(
            functools.partial(_matmul_bias_single_k_kernel, apply_relu=relu),
            out_shape=jax.ShapeDtypeStruct((Mp, Np), out_dtype),
            grid=(Mp // bm, Np // bn),
            in_specs=[
                pl.BlockSpec((bm, Kp), lambda i, j: (i, 0)),
                pl.BlockSpec((Kp, bn), lambda i, j: (0, j)),
                pl.BlockSpec((1, bn), lambda i, j: (0, j)),
            ],
            out_specs=pl.BlockSpec((bm, bn), lambda i, j: (i, j)),
            compiler_params=pltpu.CompilerParams(
                dimension_semantics=("parallel", "parallel"),
                vmem_limit_bytes=_VMEM_LIMIT),
            cost_estimate=cost,
        )(xp, wp, bp)
    else:
        # TODO(synk): optional int8 (v6e) / fp8 (v7x) classifier-weight
        # quantization would halve the dominant weight-streaming bytes here.
        out = pl.pallas_call(
            functools.partial(_matmul_bias_acc_kernel, apply_relu=relu),
            out_shape=jax.ShapeDtypeStruct((Mp, Np), out_dtype),
            grid=(Mp // bm, Np // bn, nk),
            in_specs=[
                pl.BlockSpec((bm, bk), lambda i, j, k: (i, k)),
                pl.BlockSpec((bk, bn), lambda i, j, k: (k, j),
                             pipeline_mode=pl.Buffered(3)),
                pl.BlockSpec((1, bn), lambda i, j, k: (0, j)),
            ],
            out_specs=pl.BlockSpec((bm, bn), lambda i, j, k: (i, j)),
            scratch_shapes=[pltpu.VMEM((bm, bn), jnp.float32)],
            compiler_params=pltpu.CompilerParams(
                dimension_semantics=("parallel", "parallel", "arbitrary"),
                vmem_limit_bytes=_VMEM_LIMIT),
            cost_estimate=cost,
        )(xp, wp, bp)
    return out[:M, :N]


# ----------------------------------------------------------------------------
# VGG model (scaled-down: features = [conv-relu-pool] x 2, classifier MLP)
# ----------------------------------------------------------------------------
def init_vgg_params(key, in_channels, conv_channels, flat_dim, hidden, num_classes):
    """PyTorch-convention params: conv weights OIHW, linear weights (din, dout)."""
    keys = iter(jax.random.split(key, 2 * (len(conv_channels) + 3)))
    convs = []
    cin = in_channels
    for cout in conv_channels:
        fan_out = cout * 3 * 3                       # kaiming_normal_, fan_out, relu
        std = math.sqrt(2.0 / fan_out)
        w = jax.random.normal(next(keys), (cout, cin, 3, 3), jnp.float32) * std
        b = jnp.zeros((cout,), jnp.float32)
        convs.append((w, b))
        cin = cout
    lins = []
    for din, dout in [(flat_dim, hidden), (hidden, hidden), (hidden, num_classes)]:
        w = jax.random.normal(next(keys), (din, dout), jnp.float32) * 0.01
        b = jnp.zeros((dout,), jnp.float32)
        lins.append((w, b))
    return convs, lins


def prepare_params(convs, lins, feat_hw, feat_c):
    """One-time prep: bf16 casts, conv-weight re-layout, flatten-perm fold."""
    Hf, Wf = feat_hw
    conv_p = []
    for w, b in convs:                               # w: (Cout, Cin, 3, 3)
        cout, cin = w.shape[0], w.shape[1]
        # (KH, KW, Cin, Cout) -> one (3*Cin, Cout) slab per kh, K ordered (kw, cin)
        w3 = jnp.transpose(w, (2, 3, 1, 0)).reshape(3, 3 * cin, cout)
        conv_p.append((w3.astype(jnp.bfloat16),
                       b.astype(jnp.float32).reshape(1, cout)))
    # First linear expects NCHW-flat rows (c, h, w); permute rows once so it can
    # consume the NHWC-flat (h, w, c) features directly (no runtime transpose).
    (w0, b0) = lins[0]
    hidden = w0.shape[1]
    w0p = (w0.reshape(feat_c, Hf, Wf, hidden)
              .transpose(1, 2, 0, 3)
              .reshape(Hf * Wf * feat_c, hidden))
    lin_p = [(w0p.astype(jnp.bfloat16), b0.astype(jnp.float32))]
    for w, b in lins[1:]:
        lin_p.append((w.astype(jnp.bfloat16), b.astype(jnp.float32)))
    return conv_p, lin_p


def vgg_forward(x_nchw, conv_params, lin_params):
    x = jnp.transpose(x_nchw, (0, 2, 3, 1)).astype(jnp.bfloat16)   # NCHW -> NHWC
    # features: each stage is Conv3x3(pad=1) + ReLU + MaxPool2x2
    # (bias + ReLU + the h half of the pool are fused into the conv kernel;
    #  max/cast commute, so this matches pooling after the bf16 cast exactly).
    for w3, b in conv_params:
        x = conv3x3_relu_hpool_pallas(x, w3, b)      # conv + ReLU + h-pair max
        x = maxpool_w_pallas(x)                      # w-pair max
    # NHWC flatten (free reshape); the NCHW ordering lives in the permuted weight.
    x = x.reshape(x.shape[0], -1)
    # classifier: Linear -> ReLU -> Dropout -> Linear -> ReLU -> Dropout -> Linear
    # TODO(synk): nn.Dropout is treated as inference-mode identity (no RNG masking).
    (w0, b0), (w1, b1), (w2, b2) = lin_params
    x = linear_pallas(x, w0, b0, relu=True, out_dtype=jnp.bfloat16)
    x = linear_pallas(x, w1, b1, relu=True, out_dtype=jnp.bfloat16)
    x = linear_pallas(x, w2, b2, relu=False, out_dtype=jnp.float32)
    return x


def vgg_reference(x_nchw, convs, lins):
    """Pure-JAX reference with matching bf16-input / f32-accumulate numerics."""
    f32, bf16 = jnp.float32, jnp.bfloat16
    x = x_nchw.astype(bf16)
    for w, b in convs:
        y = jax.lax.conv_general_dilated(
            x.astype(bf16), w.astype(bf16), (1, 1), ((1, 1), (1, 1)),
            dimension_numbers=("NCHW", "OIHW", "NCHW"),
            preferred_element_type=f32)
        x = jnp.maximum(y + b.reshape(1, -1, 1, 1), 0.0).astype(bf16)
        x = jax.lax.reduce_window(x, jnp.asarray(-jnp.inf, x.dtype), jax.lax.max,
                                  (1, 1, 2, 2), (1, 1, 2, 2), "VALID")
    x = x.reshape(x.shape[0], -1)
    for i, (w, b) in enumerate(lins):
        x = jnp.dot(x.astype(bf16), w.astype(bf16),
                    preferred_element_type=f32) + b.astype(f32)
        if i < 2:
            x = jnp.maximum(x, 0.0).astype(bf16)
    return x


if __name__ == "__main__":
    key = jax.random.PRNGKey(0)
    k_x, k_p = jax.random.split(key)

    # Small shapes consistent with the module (full VGG uses 46592->4096->1000;
    # here: 2 conv stages, flat 16*4*4 = 256, hidden 128, 10 classes).
    N, C, H, W = 2, 3, 16, 16
    conv_channels = [8, 16]
    hidden, num_classes = 128, 10
    flat_dim = conv_channels[-1] * (H // 4) * (W // 4)   # 256

    x = jax.random.normal(k_x, (N, C, H, W), jnp.float32)
    convs, lins = init_vgg_params(k_p, C, conv_channels, flat_dim, hidden, num_classes)
    conv_p, lin_p = prepare_params(convs, lins, feat_hw=(H // 4, W // 4),
                                   feat_c=conv_channels[-1])

    fwd = jax.jit(vgg_forward)
    out = jax.block_until_ready(fwd(x, conv_p, lin_p))

    ref = jax.block_until_ready(vgg_reference(x, convs, lins))
    assert out.shape == (N, num_classes), out.shape
    assert bool(jnp.all(jnp.isfinite(out)))
    max_err = float(jnp.max(jnp.abs(out - ref.astype(jnp.float32))))
    scale = float(jnp.max(jnp.abs(ref)))
    assert max_err <= 2e-2 * scale + 1e-5, (max_err, scale)
    print("KERNEL_OK")
</pallas_src>

<mosaic_0001>
module attributes {stable_mosaic.version = 11 : i64} {
  func.func @_maxpool_w_kernel(%arg0: i32, %arg1: memref<8x8x16xbf16, #tpu.memory_space<vmem>>, %arg2: memref<8x8x8xbf16, #tpu.memory_space<vmem>>) attributes {dimension_semantics = [#tpu.dimension_semantics<parallel>], iteration_bounds = array<i64: 2>, scalar_prefetch = 0 : i64, scratch_operands = 0 : i64, tpu.core_type = #tpu.core_type<tc>, window_params = [{transform_indices = @transform_0, window_bounds = array<i64: 8, 8, 16>}, {transform_indices = @transform_1, window_bounds = array<i64: 8, 8, 8>}]} {
    %c0 = arith.constant 0 : index
    %c0_0 = arith.constant 0 : index
    %c0_1 = arith.constant 0 : index
    %0 = vector.load %arg1[%c0, %c0_0, %c0_1] : memref<8x8x16xbf16, #tpu.memory_space<vmem>>, vector<8x8x16xbf16>
    %1 = vector.extract_strided_slice %0 {offsets = [0, 0, 0], sizes = [8, 8, 8], strides = [1, 1, 1]} : vector<8x8x16xbf16> to vector<8x8x8xbf16>
    %2 = vector.extract_strided_slice %0 {offsets = [0, 0, 8], sizes = [8, 8, 8], strides = [1, 1, 1]} : vector<8x8x16xbf16> to vector<8x8x8xbf16>
    %3 = arith.maximumf %1, %2 : vector<8x8x8xbf16>
    %c0_2 = arith.constant 0 : index
    %c0_3 = arith.constant 0 : index
    %c0_4 = arith.constant 0 : index
    %4 = vector.load %arg2[%c0_2, %c0_3, %c0_4] : memref<8x8x8xbf16, #tpu.memory_space<vmem>>, vector<8x8x8xbf16>
    tpu.vector_store %arg2[%c0_2, %c0_3, %c0_4], %3 {strides = array<i32>} : memref<8x8x8xbf16, #tpu.memory_space<vmem>>, vector<8x8x8xbf16>,
    return
  }
  func.func @transform_0(%arg0: i32) -> (i32, i32, i32) {
    %c0_i32 = arith.constant 0 : i32
    %c0_i32_0 = arith.constant 0 : i32
    %c0_i32_1 = arith.constant 0 : i32
    return %arg0, %c0_i32, %c0_i32_0 : i32, i32, i32
  }
  func.func @transform_1(%arg0: i32) -> (i32, i32, i32) {
    %c0_i32 = arith.constant 0 : i32
    %c0_i32_0 = arith.constant 0 : i32
    %c0_i32_1 = arith.constant 0 : i32
    return %arg0, %c0_i32, %c0_i32_0 : i32, i32, i32
  }
}

module attributes {stable_mosaic.version = 11 : i64} {
  func.func @_conv3x3_relu_hpool_kernel(%arg0: i32, %arg1: i32, %arg2: memref<1x8x18x3xbf16, #tpu.memory_space<vmem>>, %arg3: memref<1x2x18x3xbf16, #tpu.memory_space<vmem>>, %arg4: memref<3x9x8xbf16, #tpu.memory_space<vmem>>, %arg5: memref<1x8xf32, #tpu.memory_space<vmem>>, %arg6: memref<1x4x16x8xbf16, #tpu.memory_space<vmem>>, %arg7: memref<10x18x3xbf16, #tpu.memory_space<vmem>>, %arg8: memref<128x9xbf16, #tpu.memory_space<vmem>>) attributes {dimension_semantics = [#tpu.dimension_semantics<parallel>, #tpu.dimension_semantics<parallel>], iteration_bounds = array<i64: 2, 2>, scalar_prefetch = 0 : i64, scratch_operands = 2 : i64, tpu.core_type = #tpu.core_type<tc>, window_params = [{transform_indices = @transform_0, window_bounds = array<i64: 1, 8, 18, 3>}, {transform_indices = @transform_1, window_bounds = array<i64: 1, 2, 18, 3>}, {pipeline_mode = #tpu.pipeline_mode<synchronous>, transform_indices = @transform_2, window_bounds = array<i64: 3, 9, 8>}, {pipeline_mode = #tpu.pipeline_mode<synchronous>, transform_indices = @transform_3, window_bounds = array<i64: 1, 8>}, {transform_indices = @transform_4, window_bounds = array<i64: 1, 4, 16, 8>}]} {
    %c0 = arith.constant 0 : index
    %c0_0 = arith.constant 0 : index
    %c0_1 = arith.constant 0 : index
    %c0_2 = arith.constant 0 : index
    %0 = vector.load %arg2[%c0, %c0_0, %c0_1, %c0_2] : memref<1x8x18x3xbf16, #tpu.memory_space<vmem>>, vector<1x8x18x3xbf16>
    %1 = vector.shape_cast %0 : vector<1x8x18x3xbf16> to vector<8x18x3xbf16>
    %c0_3 = arith.constant 0 : index
    %c0_4 = arith.constant 0 : index
    %c0_5 = arith.constant 0 : index
    %2 = vector.load %arg7[%c0_3, %c0_4, %c0_5] : memref<10x18x3xbf16, #tpu.memory_space<vmem>>, vector<8x18x3xbf16>
    tpu.vector_store %arg7[%c0_3, %c0_4, %c0_5], %1 {strides = array<i32>} : memref<10x18x3xbf16, #tpu.memory_space<vmem>>, vector<8x18x3xbf16>,
    %c0_6 = arith.constant 0 : index
    %c0_7 = arith.constant 0 : index
    %c0_8 = arith.constant 0 : index
    %c0_9 = arith.constant 0 : index
    %3 = vector.load %arg3[%c0_6, %c0_7, %c0_8, %c0_9] : memref<1x2x18x3xbf16, #tpu.memory_space<vmem>>, vector<1x2x18x3xbf16>
    %4 = vector.shape_cast %3 : vector<1x2x18x3xbf16> to vector<2x18x3xbf16>
    %c8 = arith.constant 8 : index
    %c0_10 = arith.constant 0 : index
    %c0_11 = arith.constant 0 : index
    %5 = vector.load %arg7[%c8, %c0_10, %c0_11] : memref<10x18x3xbf16, #tpu.memory_space<vmem>>, vector<2x18x3xbf16>
    tpu.vector_store %arg7[%c8, %c0_10, %c0_11], %4 {strides = array<i32>} : memref<10x18x3xbf16, #tpu.memory_space<vmem>>, vector<2x18x3xbf16>,
    %cst = arith.constant 0.000000e+00 : f32
    %6 = vector.broadcast %cst : f32 to vector<128x8xf32>
    %c0_12 = arith.constant 0 : index
    %c0_13 = arith.constant 0 : index
    %c0_14 = arith.constant 0 : index
    %7 = vector.load %arg7[%c0_12, %c0_13, %c0_14] : memref<10x18x3xbf16, #tpu.memory_space<vmem>>, vector<8x18x3xbf16>
    %8 = vector.extract_strided_slice %7 {offsets = [0, 0, 0], sizes = [8, 16, 3], strides = [1, 1, 1]} : vector<8x18x3xbf16> to vector<8x16x3xbf16>
    %9 = vector.shape_cast %8 : vector<8x16x3xbf16> to vector<128x3xbf16>
    %c0_15 = arith.constant 0 : index
    %c0_16 = arith.constant 0 : index
    %10 = vector.load %arg8[%c0_15, %c0_16] : memref<128x9xbf16, #tpu.memory_space<vmem>>, vector<128x3xbf16>
    tpu.vector_store %arg8[%c0_15, %c0_16], %9 {strides = array<i32>} : memref<128x9xbf16, #tpu.memory_space<vmem>>, vector<128x3xbf16>,
    %11 = vector.extract_strided_slice %7 {offsets = [0, 1, 0], sizes = [8, 16, 3], strides = [1, 1, 1]} : vector<8x18x3xbf16> to vector<8x16x3xbf16>
    %12 = vector.shape_cast %11 : vector<8x16x3xbf16> to vector<128x3xbf16>
    %c0_17 = arith.constant 0 : index
    %c3 = arith.constant 3 : index
    %13 = vector.load %arg8[%c0_17, %c3] : memref<128x9xbf16, #tpu.memory_space<vmem>>, vector<128x3xbf16>
    tpu.vector_store %arg8[%c0_17, %c3], %12 {strides = array<i32>} : memref<128x9xbf16, #tpu.memory_space<vmem>>, vector<128x3xbf16>,
    %14 = vector.extract_strided_slice %7 {offsets = [0, 2, 0], sizes = [8, 16, 3], strides = [1, 1, 1]} : vector<8x18x3xbf16> to vector<8x16x3xbf16>
    %15 = vector.shape_cast %14 : vector<8x16x3xbf16> to vector<128x3xbf16>
    %c0_18 = arith.constant 0 : index
    %c6 = arith.constant 6 : index
    %16 = vector.load %arg8[%c0_18, %c6] : memref<128x9xbf16, #tpu.memory_space<vmem>>, vector<128x3xbf16>
    tpu.vector_store %arg8[%c0_18, %c6], %15 {strides = array<i32>} : memref<128x9xbf16, #tpu.memory_space<vmem>>, vector<128x3xbf16>,
    %c0_19 = arith.constant 0 : index
    %c0_20 = arith.constant 0 : index
    %17 = vector.load %arg8[%c0_19, %c0_20] : memref<128x9xbf16, #tpu.memory_space<vmem>>, vector<128x9xbf16>
    %c0_21 = arith.constant 0 : index
    %c0_22 = arith.constant 0 : index
    %c0_23 = arith.constant 0 : index
    %18 = vector.load %arg4[%c0_21, %c0_22, %c0_23] : memref<3x9x8xbf16, #tpu.memory_space<vmem>>, vector<1x9x8xbf16>
    %19 = vector.shape_cast %18 : vector<1x9x8xbf16> to vector<9x8xbf16>
    %cst_24 = arith.constant dense<0.000000e+00> : vector<128x8xf32>
    %20 = tpu.matmul %17, %19, %cst_24 {dimension_numbers = #tpu.dot_dimension_numbers<[1], [0], [0], [1], [0, 0, 1, 1], [], []>} : vector<128x9xbf16>, vector<9x8xbf16>, vector<128x8xf32> -> vector<128x8xf32>
    %21 = arith.addf %6, %20 : vector<128x8xf32>
    %c1 = arith.constant 1 : index
    %c0_25 = arith.constant 0 : index
    %c0_26 = arith.constant 0 : index
    %22 = vector.load %arg7[%c1, %c0_25, %c0_26] : memref<10x18x3xbf16, #tpu.memory_space<vmem>>, vector<8x18x3xbf16>
    %23 = vector.extract_strided_slice %22 {offsets = [0, 0, 0], sizes = [8, 16, 3], strides = [1, 1, 1]} : vector<8x18x3xbf16> to vector<8x16x3xbf16>
    %24 = vector.shape_cast %23 : vector<8x16x3xbf16> to vector<128x3xbf16>
    %c0_27 = arith.constant 0 : index
    %c0_28 = arith.constant 0 : index
    %25 = vector.load %arg8[%c0_27, %c0_28] : memref<128x9xbf16, #tpu.memory_space<vmem>>, vector<128x3xbf16>
    tpu.vector_store %arg8[%c0_27, %c0_28], %24 {strides = array<i32>} : memref<128x9xbf16, #tpu.memory_space<vmem>>, vector<128x3xbf16>,
    %26 = vector.extract_strided_slice %22 {offsets = [0, 1, 0], sizes = [8, 16, 3], strides = [1, 1, 1]} : vector<8x18x3xbf16> to vector<8x16x3xbf16>
    %27 = vector.shape_cast %26 : vector<8x16x3xbf16> to vector<128x3xbf16>
    %c0_29 = arith.constant 0 : index
    %c3_30 = arith.constant 3 : index
    %28 = vector.load %arg8[%c0_29, %c3_30] : memref<128x9xbf16, #tpu.memory_space<vmem>>, vector<128x3xbf16>
    tpu.vector_store %arg8[%c0_29, %c3_30], %27 {strides = array<i32>} : memref<128x9xbf16, #tpu.memory_space<vmem>>, vector<128x3xbf16>,
    %29 = vector.extract_strided_slice %22 {offsets = [0, 2, 0], sizes = [8, 16, 3], strides = [1, 1, 1]} : vector<8x18x3xbf16> to vector<8x16x3xbf16>
    %30 = vector.shape_cast %29 : vector<8x16x3xbf16> to vector<128x3xbf16>
    %c0_31 = arith.constant 0 : index
    %c6_32 = arith.constant 6 : index
    %31 = vector.load %arg8[%c0_31, %c6_32] : memref<128x9xbf16, #tpu.memory_space<vmem>>, vector<128x3xbf16>
    tpu.vector_store %arg8[%c0_31, %c6_32], %30 {strides = array<i32>} : memref<128x9xbf16, #tpu.memory_space<vmem>>, vector<128x3xbf16>,
    %c0_33 = arith.constant 0 : index
    %c0_34 = arith.constant 0 : index
    %32 = vector.load %arg8[%c0_33, %c0_34] : memref<128x9xbf16, #tpu.memory_space<vmem>>, vector<128x9xbf16>
    %c1_35 = arith.constant 1 : index
    %c0_36 = arith.constant 0 : index
    %c0_37 = arith.constant 0 : index
    %33 = vector.load %arg4[%c1_35, %c0_36, %c0_37] : memref<3x9x8xbf16, #tpu.memory_space<vmem>>, vector<1x9x8xbf16>
    %34 = vector.shape_cast %33 : vector<1x9x8xbf16> to vector<9x8xbf16>
    %cst_38 = arith.constant dense<0.000000e+00> : vector<128x8xf32>
    %35 = tpu.matmul %32, %34, %cst_38 {dimension_numbers = #tpu.dot_dimension_numbers<[1], [0], [0], [1], [0, 0, 1, 1], [], []>} : vector<128x9xbf16>, vector<9x8xbf16>, vector<128x8xf32> -> vector<128x8xf32>
    %36 = arith.addf %21, %35 : vector<128x8xf32>
    %c2 = arith.constant 2 : index
    %c0_39 = arith.constant 0 : index
    %c0_40 = arith.constant 0 : index
    %37 = vector.load %arg7[%c2, %c0_39, %c0_40] : memref<10x18x3xbf16, #tpu.memory_space<vmem>>, vector<8x18x3xbf16>
    %38 = vector.extract_strided_slice %37 {offsets = [0, 0, 0], sizes = [8, 16, 3], strides = [1, 1, 1]} : vector<8x18x3xbf16> to vector<8x16x3xbf16>
    %39 = vector.shape_cast %38 : vector<8x16x3xbf16> to vector<128x3xbf16>
    %c0_41 = arith.constant 0 : index
    %c0_42 = arith.constant 0 : index
    %40 = vector.load %arg8[%c0_41, %c0_42] : memref<128x9xbf16, #tpu.memory_space<vmem>>, vector<128x3xbf16>
    tpu.vector_store %arg8[%c0_41, %c0_42], %39 {strides = array<i32>} : memref<128x9xbf16, #tpu.memory_space<vmem>>, vector<128x3xbf16>,
    %41 = vector.extract_strided_slice %37 {offsets = [0, 1, 0], sizes = [8, 16, 3], strides = [1, 1, 1]} : vector<8x18x3xbf16> to vector<8x16x3xbf16>
    %42 = vector.shape_cast %41 : vector<8x16x3xbf16> to vector<128x3xbf16>
    %c0_43 = arith.constant 0 : index
    %c3_44 = arith.constant 3 : index
    %43 = vector.load %arg8[%c0_43, %c3_44] : memref<128x9xbf16, #tpu.memory_space<vmem>>, vector<128x3xbf16>
    tpu.vector_store %arg8[%c0_43, %c3_44], %42 {strides = array<i32>} : memref<128x9xbf16, #tpu.memory_space<vmem>>, vector<128x3xbf16>,
    %44 = vector.extract_strided_slice %37 {offsets = [0, 2, 0], sizes = [8, 16, 3], strides = [1, 1, 1]} : vector<8x18x3xbf16> to vector<8x16x3xbf16>
    %45 = vector.shape_cast %44 : vector<8x16x3xbf16> to vector<128x3xbf16>
    %c0_45 = arith.constant 0 : index
    %c6_46 = arith.constant 6 : index
    %46 = vector.load %arg8[%c0_45, %c6_46] : memref<128x9xbf16, #tpu.memory_space<vmem>>, vector<128x3xbf16>
    tpu.vector_store %arg8[%c0_45, %c6_46], %45 {strides = array<i32>} : memref<128x9xbf16, #tpu.memory_space<vmem>>, vector<128x3xbf16>,
    %c0_47 = arith.constant 0 : index
    %c0_48 = arith.constant 0 : index
    %47 = vector.load %arg8[%c0_47, %c0_48] : memref<128x9xbf16, #tpu.memory_space<vmem>>, vector<128x9xbf16>
    %c2_49 = arith.constant 2 : index
    %c0_50 = arith.constant 0 : index
    %c0_51 = arith.constant 0 : index
    %48 = vector.load %arg4[%c2_49, %c0_50, %c0_51] : memref<3x9x8xbf16, #tpu.memory_space<vmem>>, vector<1x9x8xbf16>
    %49 = vector.shape_cast %48 : vector<1x9x8xbf16> to vector<9x8xbf16>
    %cst_52 = arith.constant dense<0.000000e+00> : vector<128x8xf32>
    %50 = tpu.matmul %47, %49, %cst_52 {dimension_numbers = #tpu.dot_dimension_numbers<[1], [0], [0], [1], [0, 0, 1, 1], [], []>} : vector<128x9xbf16>, vector<9x8xbf16>, vector<128x8xf32> -> vector<128x8xf32>
    %51 = arith.addf %36, %50 : vector<128x8xf32>
    %c0_53 = arith.constant 0 : index
    %c0_54 = arith.constant 0 : index
    %52 = vector.load %arg5[%c0_53, %c0_54] : memref<1x8xf32, #tpu.memory_space<vmem>>, vector<1x8xf32>
    %53 = vector.broadcast %52 : vector<1x8xf32> to vector<128x8xf32>
    %54 = arith.addf %51, %53 : vector<128x8xf32>
    %cst_55 = arith.constant 0.000000e+00 : f32
    %55 = vector.broadcast %cst_55 : f32 to vector<128x8xf32>
    %56 = arith.maximumf %54, %55 : vector<128x8xf32>
    %57 = vector.shape_cast %56 : vector<128x8xf32> to vector<4x2x16x8xf32>
    %58 = vector.extract_strided_slice %57 {offsets = [0, 0, 0, 0], sizes = [4, 1, 16, 8], strides = [1, 1, 1, 1]} : vector<4x2x16x8xf32> to vector<4x1x16x8xf32>
    %59 = vector.shape_cast %58 : vector<4x1x16x8xf32> to vector<4x16x8xf32>
    %60 = vector.extract_strided_slice %57 {offsets = [0, 1, 0, 0], sizes = [4, 1, 16, 8], strides = [1, 1, 1, 1]} : vector<4x2x16x8xf32> to vector<4x1x16x8xf32>
    %61 = vector.shape_cast %60 : vector<4x1x16x8xf32> to vector<4x16x8xf32>
    %62 = arith.maximumf %59, %61 : vector<4x16x8xf32>
    %63 = vector.shape_cast %62 : vector<4x16x8xf32> to vector<1x4x16x8xf32>
    %64 = arith.truncf %63 : vector<1x4x16x8xf32> to vector<1x4x16x8xbf16>
    %c0_56 = arith.constant 0 : index
    %c0_57 = arith.constant 0 : index
    %c0_58 = arith.constant 0 : index
    %c0_59 = arith.constant 0 : index
    %65 = vector.load %arg6[%c0_56, %c0_57, %c0_58, %c0_59] : memref<1x4x16x8xbf16, #tpu.memory_space<vmem>>, vector<1x4x16x8xbf16>
    tpu.vector_store %arg6[%c0_56, %c0_57, %c0_58, %c0_59], %64 {strides = array<i32>} : memref<1x4x16x8xbf16, #tpu.memory_space<vmem>>, vector<1x4x16x8xbf16>,
    return
  }
  func.func @transform_0(%arg0: i32, %arg1: i32) -> (i32, i32, i32, i32) {
    %c0_i32 = arith.constant 0 : i32
    %c0_i32_0 = arith.constant 0 : i32
    %c0_i32_1 = arith.constant 0 : i32
    return %arg0, %arg1, %c0_i32, %c0_i32_0 : i32, i32, i32, i32
  }
  func.func @transform_1(%arg0: i32, %arg1: i32) -> (i32, i32, i32, i32) {
    %c1_i32 = arith.constant 1 : i32
    %0 = arith.addi %arg1, %c1_i32 : i32
    %c4_i32 = arith.constant 4 : i32
    %1 = arith.muli %0, %c4_i32 : i32
    %c0_i32 = arith.constant 0 : i32
    %c0_i32_0 = arith.constant 0 : i32
    %c0_i32_1 = arith.constant 0 : i32
    return %arg0, %1, %c0_i32, %c0_i32_0 : i32, i32, i32, i32
  }
  func.func @transform_2(%arg0: i32, %arg1: i32) -> (i32, i32, i32) {
    %c0_i32 = arith.constant 0 : i32
    %c0_i32_0 = arith.constant 0 : i32
    %c0_i32_1 = arith.constant 0 : i32
    %c0_i32_2 = arith.constant 0 : i32
    return %c0_i32, %c0_i32_0, %c0_i32_1 : i32, i32, i32
  }
  func.func @transform_3(%arg0: i32, %arg1: i32) -> (i32, i32) {
    %c0_i32 = arith.constant 0 : i32
    %c0_i32_0 = arith.constant 0 : i32
    %c0_i32_1 = arith.constant 0 : i32
    return %c0_i32, %c0_i32_0 : i32, i32
  }
  func.func @transform_4(%arg0: i32, %arg1: i32) -> (i32, i32, i32, i32) {
    %c0_i32 = arith.constant 0 : i32
    %c0_i32_0 = arith.constant 0 : i32
    %c0_i32_1 = arith.constant 0 : i32
    return %arg0, %arg1, %c0_i32, %c0_i32_0 : i32, i32, i32, i32
  }
}

module attributes {stable_mosaic.version = 11 : i64} {
  func.func @_conv3x3_relu_hpool_kernel(%arg0: i32, %arg1: i32, %arg2: memref<1x4x10x8xbf16, #tpu.memory_space<vmem>>, %arg3: memref<1x2x10x8xbf16, #tpu.memory_space<vmem>>, %arg4: memref<3x24x16xbf16, #tpu.memory_space<vmem>>, %arg5: memref<1x16xf32, #tpu.memory_space<vmem>>, %arg6: memref<1x2x8x16xbf16, #tpu.memory_space<vmem>>, %arg7: memref<6x10x8xbf16, #tpu.memory_space<vmem>>, %arg8: memref<32x24xbf16, #tpu.memory_space<vmem>>) attributes {dimension_semantics = [#tpu.dimension_semantics<parallel>, #tpu.dimension_semantics<parallel>], iteration_bounds = array<i64: 2, 2>, scalar_prefetch = 0 : i64, scratch_operands = 2 : i64, tpu.core_type = #tpu.core_type<tc>, window_params = [{transform_indices = @transform_0, window_bounds = array<i64: 1, 4, 10, 8>}, {transform_indices = @transform_1, window_bounds = array<i64: 1, 2, 10, 8>}, {pipeline_mode = #tpu.pipeline_mode<synchronous>, transform_indices = @transform_2, window_bounds = array<i64: 3, 24, 16>}, {pipeline_mode = #tpu.pipeline_mode<synchronous>, transform_indices = @transform_3, window_bounds = array<i64: 1, 16>}, {transform_indices = @transform_4, window_bounds = array<i64: 1, 2, 8, 16>}]} {
    %c0 = arith.constant 0 : index
    %c0_0 = arith.constant 0 : index
    %c0_1 = arith.constant 0 : index
    %c0_2 = arith.constant 0 : index
    %0 = vector.load %arg2[%c0, %c0_0, %c0_1, %c0_2] : memref<1x4x10x8xbf16, #tpu.memory_space<vmem>>, vector<1x4x10x8xbf16>
    %1 = vector.shape_cast %0 : vector<1x4x10x8xbf16> to vector<4x10x8xbf16>
    %c0_3 = arith.constant 0 : index
    %c0_4 = arith.constant 0 : index
    %c0_5 = arith.constant 0 : index
    %2 = vector.load %arg7[%c0_3, %c0_4, %c0_5] : memref<6x10x8xbf16, #tpu.memory_space<vmem>>, vector<4x10x8xbf16>
    tpu.vector_store %arg7[%c0_3, %c0_4, %c0_5], %1 {strides = array<i32>} : memref<6x10x8xbf16, #tpu.memory_space<vmem>>, vector<4x10x8xbf16>,
    %c0_6 = arith.constant 0 : index
    %c0_7 = arith.constant 0 : index
    %c0_8 = arith.constant 0 : index
    %c0_9 = arith.constant 0 : index
    %3 = vector.load %arg3[%c0_6, %c0_7, %c0_8, %c0_9] : memref<1x2x10x8xbf16, #tpu.memory_space<vmem>>, vector<1x2x10x8xbf16>
    %4 = vector.shape_cast %3 : vector<1x2x10x8xbf16> to vector<2x10x8xbf16>
    %c4 = arith.constant 4 : index
    %c0_10 = arith.constant 0 : index
    %c0_11 = arith.constant 0 : index
    %5 = vector.load %arg7[%c4, %c0_10, %c0_11] : memref<6x10x8xbf16, #tpu.memory_space<vmem>>, vector<2x10x8xbf16>
    tpu.vector_store %arg7[%c4, %c0_10, %c0_11], %4 {strides = array<i32>} : memref<6x10x8xbf16, #tpu.memory_space<vmem>>, vector<2x10x8xbf16>,
    %cst = arith.constant 0.000000e+00 : f32
    %6 = vector.broadcast %cst : f32 to vector<32x16xf32>
    %c0_12 = arith.constant 0 : index
    %c0_13 = arith.constant 0 : index
    %c0_14 = arith.constant 0 : index
    %7 = vector.load %arg7[%c0_12, %c0_13, %c0_14] : memref<6x10x8xbf16, #tpu.memory_space<vmem>>, vector<4x10x8xbf16>
    %8 = vector.extract_strided_slice %7 {offsets = [0, 0, 0], sizes = [4, 8, 8], strides = [1, 1, 1]} : vector<4x10x8xbf16> to vector<4x8x8xbf16>
    %9 = vector.shape_cast %8 : vector<4x8x8xbf16> to vector<32x8xbf16>
    %c0_15 = arith.constant 0 : index
    %c0_16 = arith.constant 0 : index
    %10 = vector.load %arg8[%c0_15, %c0_16] : memref<32x24xbf16, #tpu.memory_space<vmem>>, vector<32x8xbf16>
    tpu.vector_store %arg8[%c0_15, %c0_16], %9 {strides = array<i32>} : memref<32x24xbf16, #tpu.memory_space<vmem>>, vector<32x8xbf16>,
    %11 = vector.extract_strided_slice %7 {offsets = [0, 1, 0], sizes = [4, 8, 8], strides = [1, 1, 1]} : vector<4x10x8xbf16> to vector<4x8x8xbf16>
    %12 = vector.shape_cast %11 : vector<4x8x8xbf16> to vector<32x8xbf16>
    %c0_17 = arith.constant 0 : index
    %c8 = arith.constant 8 : index
    %13 = vector.load %arg8[%c0_17, %c8] : memref<32x24xbf16, #tpu.memory_space<vmem>>, vector<32x8xbf16>
    tpu.vector_store %arg8[%c0_17, %c8], %12 {strides = array<i32>} : memref<32x24xbf16, #tpu.memory_space<vmem>>, vector<32x8xbf16>,
    %14 = vector.extract_strided_slice %7 {offsets = [0, 2, 0], sizes = [4, 8, 8], strides = [1, 1, 1]} : vector<4x10x8xbf16> to vector<4x8x8xbf16>
    %15 = vector.shape_cast %14 : vector<4x8x8xbf16> to vector<32x8xbf16>
    %c0_18 = arith.constant 0 : index
    %c16 = arith.constant 16 : index
    %16 = vector.load %arg8[%c0_18, %c16] : memref<32x24xbf16, #tpu.memory_space<vmem>>, vector<32x8xbf16>
    tpu.vector_store %arg8[%c0_18, %c16], %15 {strides = array<i32>} : memref<32x24xbf16, #tpu.memory_space<vmem>>, vector<32x8xbf16>,
    %c0_19 = arith.constant 0 : index
    %c0_20 = arith.constant 0 : index
    %17 = vector.load %arg8[%c0_19, %c0_20] : memref<32x24xbf16, #tpu.memory_space<vmem>>, vector<32x24xbf16>
    %c0_21 = arith.constant 0 : index
    %c0_22 = arith.constant 0 : index
    %c0_23 = arith.constant 0 : index
    %18 = vector.load %arg4[%c0_21, %c0_22, %c0_23] : memref<3x24x16xbf16, #tpu.memory_space<vmem>>, vector<1x24x16xbf16>
    %19 = vector.shape_cast %18 : vector<1x24x16xbf16> to vector<24x16xbf16>
    %cst_24 = arith.constant dense<0.000000e+00> : vector<32x16xf32>
    %20 = tpu.matmul %17, %19, %cst_24 {dimension_numbers = #tpu.dot_dimension_numbers<[1], [0], [0], [1], [0, 0, 1, 1], [], []>} : vector<32x24xbf16>, vector<24x16xbf16>, vector<32x16xf32> -> vector<32x16xf32>
    %21 = arith.addf %6, %20 : vector<32x16xf32>
    %c1 = arith.constant 1 : index
    %c0_25 = arith.constant 0 : index
    %c0_26 = arith.constant 0 : index
    %22 = vector.load %arg7[%c1, %c0_25, %c0_26] : memref<6x10x8xbf16, #tpu.memory_space<vmem>>, vector<4x10x8xbf16>
    %23 = vector.extract_strided_slice %22 {offsets = [0, 0, 0], sizes = [4, 8, 8], strides = [1, 1, 1]} : vector<4x10x8xbf16> to vector<4x8x8xbf16>
    %24 = vector.shape_cast %23 : vector<4x8x8xbf16> to vector<32x8xbf16>
    %c0_27 = arith.constant 0 : index
    %c0_28 = arith.constant 0 : index
    %25 = vector.load %arg8[%c0_27, %c0_28] : memref<32x24xbf16, #tpu.memory_space<vmem>>, vector<32x8xbf16>
    tpu.vector_store %arg8[%c0_27, %c0_28], %24 {strides = array<i32>} : memref<32x24xbf16, #tpu.memory_space<vmem>>, vector<32x8xbf16>,
    %26 = vector.extract_strided_slice %22 {offsets = [0, 1, 0], sizes = [4, 8, 8], strides = [1, 1, 1]} : vector<4x10x8xbf16> to vector<4x8x8xbf16>
    %27 = vector.shape_cast %26 : vector<4x8x8xbf16> to vector<32x8xbf16>
    %c0_29 = arith.constant 0 : index
    %c8_30 = arith.constant 8 : index
    %28 = vector.load %arg8[%c0_29, %c8_30] : memref<32x24xbf16, #tpu.memory_space<vmem>>, vector<32x8xbf16>
    tpu.vector_store %arg8[%c0_29, %c8_30], %27 {strides = array<i32>} : memref<32x24xbf16, #tpu.memory_space<vmem>>, vector<32x8xbf16>,
    %29 = vector.extract_strided_slice %22 {offsets = [0, 2, 0], sizes = [4, 8, 8], strides = [1, 1, 1]} : vector<4x10x8xbf16> to vector<4x8x8xbf16>
    %30 = vector.shape_cast %29 : vector<4x8x8xbf16> to vector<32x8xbf16>
    %c0_31 = arith.constant 0 : index
    %c16_32 = arith.constant 16 : index
    %31 = vector.load %arg8[%c0_31, %c16_32] : memref<32x24xbf16, #tpu.memory_space<vmem>>, vector<32x8xbf16>
    tpu.vector_store %arg8[%c0_31, %c16_32], %30 {strides = array<i32>} : memref<32x24xbf16, #tpu.memory_space<vmem>>, vector<32x8xbf16>,
    %c0_33 = arith.constant 0 : index
    %c0_34 = arith.constant 0 : index
    %32 = vector.load %arg8[%c0_33, %c0_34] : memref<32x24xbf16, #tpu.memory_space<vmem>>, vector<32x24xbf16>
    %c1_35 = arith.constant 1 : index
    %c0_36 = arith.constant 0 : index
    %c0_37 = arith.constant 0 : index
    %33 = vector.load %arg4[%c1_35, %c0_36, %c0_37] : memref<3x24x16xbf16, #tpu.memory_space<vmem>>, vector<1x24x16xbf16>
    %34 = vector.shape_cast %33 : vector<1x24x16xbf16> to vector<24x16xbf16>
    %cst_38 = arith.constant dense<0.000000e+00> : vector<32x16xf32>
    %35 = tpu.matmul %32, %34, %cst_38 {dimension_numbers = #tpu.dot_dimension_numbers<[1], [0], [0], [1], [0, 0, 1, 1], [], []>} : vector<32x24xbf16>, vector<24x16xbf16>, vector<32x16xf32> -> vector<32x16xf32>
    %36 = arith.addf %21, %35 : vector<32x16xf32>
    %c2 = arith.constant 2 : index
    %c0_39 = arith.constant 0 : index
    %c0_40 = arith.constant 0 : index
    %37 = vector.load %arg7[%c2, %c0_39, %c0_40] : memref<6x10x8xbf16, #tpu.memory_space<vmem>>, vector<4x10x8xbf16>
    %38 = vector.extract_strided_slice %37 {offsets = [0, 0, 0], sizes = [4, 8, 8], strides = [1, 1, 1]} : vector<4x10x8xbf16> to vector<4x8x8xbf16>
    %39 = vector.shape_cast %38 : vector<4x8x8xbf16> to vector<32x8xbf16>
    %c0_41 = arith.constant 0 : index
    %c0_42 = arith.constant 0 : index
    %40 = vector.load %arg8[%c0_41, %c0_42] : memref<32x24xbf16, #tpu.memory_space<vmem>>, vector<32x8xbf16>
    tpu.vector_store %arg8[%c0_41, %c0_42], %39 {strides = array<i32>} : memref<32x24xbf16, #tpu.memory_space<vmem>>, vector<32x8xbf16>,
    %41 = vector.extract_strided_slice %37 {offsets = [0, 1, 0], sizes = [4, 8, 8], strides = [1, 1, 1]} : vector<4x10x8xbf16> to vector<4x8x8xbf16>
    %42 = vector.shape_cast %41 : vector<4x8x8xbf16> to vector<32x8xbf16>
    %c0_43 = arith.constant 0 : index
    %c8_44 = arith.constant 8 : index
    %43 = vector.load %arg8[%c0_43, %c8_44] : memref<32x24xbf16, #tpu.memory_space<vmem>>, vector<32x8xbf16>
    tpu.vector_store %arg8[%c0_43, %c8_44], %42 {strides = array<i32>} : memref<32x24xbf16, #tpu.memory_space<vmem>>, vector<32x8xbf16>,
    %44 = vector.extract_strided_slice %37 {offsets = [0, 2, 0], sizes = [4, 8, 8], strides = [1, 1, 1]} : vector<4x10x8xbf16> to vector<4x8x8xbf16>
    %45 = vector.shape_cast %44 : vector<4x8x8xbf16> to vector<32x8xbf16>
    %c0_45 = arith.constant 0 : index
    %c16_46 = arith.constant 16 : index
    %46 = vector.load %arg8[%c0_45, %c16_46] : memref<32x24xbf16, #tpu.memory_space<vmem>>, vector<32x8xbf16>
    tpu.vector_store %arg8[%c0_45, %c16_46], %45 {strides = array<i32>} : memref<32x24xbf16, #tpu.memory_space<vmem>>, vector<32x8xbf16>,
    %c0_47 = arith.constant 0 : index
    %c0_48 = arith.constant 0 : index
    %47 = vector.load %arg8[%c0_47, %c0_48] : memref<32x24xbf16, #tpu.memory_space<vmem>>, vector<32x24xbf16>
    %c2_49 = arith.constant 2 : index
    %c0_50 = arith.constant 0 : index
    %c0_51 = arith.constant 0 : index
    %48 = vector.load %arg4[%c2_49, %c0_50, %c0_51] : memref<3x24x16xbf16, #tpu.memory_space<vmem>>, vector<1x24x16xbf16>
    %49 = vector.shape_cast %48 : vector<1x24x16xbf16> to vector<24x16xbf16>
    %cst_52 = arith.constant dense<0.000000e+00> : vector<32x16xf32>
    %50 = tpu.matmul %47, %49, %cst_52 {dimension_numbers = #tpu.dot_dimension_numbers<[1], [0], [0], [1], [0, 0, 1, 1], [], []>} : vector<32x24xbf16>, vector<24x16xbf16>, vector<32x16xf32> -> vector<32x16xf32>
    %51 = arith.addf %36, %50 : vector<32x16xf32>
    %c0_53 = arith.constant 0 : index
    %c0_54 = arith.constant 0 : index
    %52 = vector.load %arg5[%c0_53, %c0_54] : memref<1x16xf32, #tpu.memory_space<vmem>>, vector<1x16xf32>
    %53 = vector.broadcast %52 : vector<1x16xf32> to vector<32x16xf32>
    %54 = arith.addf %51, %53 : vector<32x16xf32>
    %cst_55 = arith.constant 0.000000e+00 : f32
    %55 = vector.broadcast %cst_55 : f32 to vector<32x16xf32>
    %56 = arith.maximumf %54, %55 : vector<32x16xf32>
    %57 = vector.shape_cast %56 : vector<32x16xf32> to vector<2x2x8x16xf32>
    %58 = vector.extract_strided_slice %57 {offsets = [0, 0, 0, 0], sizes = [2, 1, 8, 16], strides = [1, 1, 1, 1]} : vector<2x2x8x16xf32> to vector<2x1x8x16xf32>
    %59 = vector.shape_cast %58 : vector<2x1x8x16xf32> to vector<2x8x16xf32>
    %60 = vector.extract_strided_slice %57 {offsets = [0, 1, 0, 0], sizes = [2, 1, 8, 16], strides = [1, 1, 1, 1]} : vector<2x2x8x16xf32> to vector<2x1x8x16xf32>
    %61 = vector.shape_cast %60 : vector<2x1x8x16xf32> to vector<2x8x16xf32>
    %62 = arith.maximumf %59, %61 : vector<2x8x16xf32>
    %63 = vector.shape_cast %62 : vector<2x8x16xf32> to vector<1x2x8x16xf32>
    %64 = arith.truncf %63 : vector<1x2x8x16xf32> to vector<1x2x8x16xbf16>
    %c0_56 = arith.constant 0 : index
    %c0_57 = arith.constant 0 : index
    %c0_58 = arith.constant 0 : index
    %c0_59 = arith.constant 0 : index
    %65 = vector.load %arg6[%c0_56, %c0_57, %c0_58, %c0_59] : memref<1x2x8x16xbf16, #tpu.memory_space<vmem>>, vector<1x2x8x16xbf16>
    tpu.vector_store %arg6[%c0_56, %c0_57, %c0_58, %c0_59], %64 {strides = array<i32>} : memref<1x2x8x16xbf16, #tpu.memory_space<vmem>>, vector<1x2x8x16xbf16>,
    return
  }
  func.func @transform_0(%arg0: i32, %arg1: i32) -> (i32, i32, i32, i32) {
    %c0_i32 = arith.constant 0 : i32
    %c0_i32_0 = arith.constant 0 : i32
    %c0_i32_1 = arith.constant 0 : i32
    return %arg0, %arg1, %c0_i32, %c0_i32_0 : i32, i32, i32, i32
  }
  func.func @transform_1(%arg0: i32, %arg1: i32) -> (i32, i32, i32, i32) {
    %c1_i32 = arith.constant 1 : i32
    %0 = arith.addi %arg1, %c1_i32 : i32
    %c2_i32 = arith.constant 2 : i32
    %1 = arith.muli %0, %c2_i32 : i32
    %c0_i32 = arith.constant 0 : i32
    %c0_i32_0 = arith.constant 0 : i32
    %c0_i32_1 = arith.constant 0 : i32
    return %arg0, %1, %c0_i32, %c0_i32_0 : i32, i32, i32, i32
  }
  func.func @transform_2(%arg0: i32, %arg1: i32) -> (i32, i32, i32) {
    %c0_i32 = arith.constant 0 : i32
    %c0_i32_0 = arith.constant 0 : i32
    %c0_i32_1 = arith.constant 0 : i32
    %c0_i32_2 = arith.constant 0 : i32
    return %c0_i32, %c0_i32_0, %c0_i32_1 : i32, i32, i32
  }
  func.func @transform_3(%arg0: i32, %arg1: i32) -> (i32, i32) {
    %c0_i32 = arith.constant 0 : i32
    %c0_i32_0 = arith.constant 0 : i32
    %c0_i32_1 = arith.constant 0 : i32
    return %c0_i32, %c0_i32_0 : i32, i32
  }
  func.func @transform_4(%arg0: i32, %arg1: i32) -> (i32, i32, i32, i32) {
    %c0_i32 = arith.constant 0 : i32
    %c0_i32_0 = arith.constant 0 : i32
    %c0_i32_1 = arith.constant 0 : i32
    return %arg0, %arg1, %c0_i32, %c0_i32_0 : i32, i32, i32, i32
  }
}

module attributes {stable_mosaic.version = 11 : i64} {
  func.func @_maxpool_w_kernel(%arg0: i32, %arg1: memref<4x4x32xbf16, #tpu.memory_space<vmem>>, %arg2: memref<4x4x16xbf16, #tpu.memory_space<vmem>>) attributes {dimension_semantics = [#tpu.dimension_semantics<parallel>], iteration_bounds = array<i64: 2>, scalar_prefetch = 0 : i64, scratch_operands = 0 : i64, tpu.core_type = #tpu.core_type<tc>, window_params = [{transform_indices = @transform_0, window_bounds = array<i64: 4, 4, 32>}, {transform_indices = @transform_1, window_bounds = array<i64: 4, 4, 16>}]} {
    %c0 = arith.constant 0 : index
    %c0_0 = arith.constant 0 : index
    %c0_1 = arith.constant 0 : index
    %0 = vector.load %arg1[%c0, %c0_0, %c0_1] : memref<4x4x32xbf16, #tpu.memory_space<vmem>>, vector<4x4x32xbf16>
    %1 = vector.extract_strided_slice %0 {offsets = [0, 0, 0], sizes = [4, 4, 16], strides = [1, 1, 1]} : vector<4x4x32xbf16> to vector<4x4x16xbf16>
    %2 = vector.extract_strided_slice %0 {offsets = [0, 0, 16], sizes = [4, 4, 16], strides = [1, 1, 1]} : vector<4x4x32xbf16> to vector<4x4x16xbf16>
    %3 = arith.maximumf %1, %2 : vector<4x4x16xbf16>
    %c0_2 = arith.constant 0 : index
    %c0_3 = arith.constant 0 : index
    %c0_4 = arith.constant 0 : index
    %4 = vector.load %arg2[%c0_2, %c0_3, %c0_4] : memref<4x4x16xbf16, #tpu.memory_space<vmem>>, vector<4x4x16xbf16>
    tpu.vector_store %arg2[%c0_2, %c0_3, %c0_4], %3 {strides = array<i32>} : memref<4x4x16xbf16, #tpu.memory_space<vmem>>, vector<4x4x16xbf16>,
    return
  }
  func.func @transform_0(%arg0: i32) -> (i32, i32, i32) {
    %c0_i32 = arith.constant 0 : i32
    %c0_i32_0 = arith.constant 0 : i32
    %c0_i32_1 = arith.constant 0 : i32
    return %arg0, %c0_i32, %c0_i32_0 : i32, i32, i32
  }
  func.func @transform_1(%arg0: i32) -> (i32, i32, i32) {
    %c0_i32 = arith.constant 0 : i32
    %c0_i32_0 = arith.constant 0 : i32
    %c0_i32_1 = arith.constant 0 : i32
    return %arg0, %c0_i32, %c0_i32_0 : i32, i32, i32
  }
}

module attributes {stable_mosaic.version = 11 : i64} {
  func.func @_matmul_bias_single_k_kernel(%arg0: i32, %arg1: i32, %arg2: memref<16x256xbf16, #tpu.memory_space<vmem>>, %arg3: memref<256x128xbf16, #tpu.memory_space<vmem>>, %arg4: memref<1x128xf32, #tpu.memory_space<vmem>>, %arg5: memref<16x128xbf16, #tpu.memory_space<vmem>>) attributes {dimension_semantics = [#tpu.dimension_semantics<parallel>, #tpu.dimension_semantics<parallel>], iteration_bounds = array<i64: 1, 1>, scalar_prefetch = 0 : i64, scratch_operands = 0 : i64, tpu.core_type = #tpu.core_type<tc>, window_params = [{transform_indices = @transform_0, window_bounds = array<i64: 16, 256>}, {transform_indices = @transform_1, window_bounds = array<i64: 256, 128>}, {transform_indices = @transform_2, window_bounds = array<i64: 1, 128>}, {transform_indices = @transform_3, window_bounds = array<i64: 16, 128>}]} {
    %c0 = arith.constant 0 : index
    %c0_0 = arith.constant 0 : index
    %0 = vector.load %arg2[%c0, %c0_0] : memref<16x256xbf16, #tpu.memory_space<vmem>>, vector<16x256xbf16>
    %c0_1 = arith.constant 0 : index
    %c0_2 = arith.constant 0 : index
    %1 = vector.load %arg3[%c0_1, %c0_2] : memref<256x128xbf16, #tpu.memory_space<vmem>>, vector<256x128xbf16>
    %cst = arith.constant dense<0.000000e+00> : vector<16x128xf32>
    %2 = tpu.matmul %0, %1, %cst {dimension_numbers = #tpu.dot_dimension_numbers<[1], [0], [0], [1], [0, 0, 1, 1], [], []>} : vector<16x256xbf16>, vector<256x128xbf16>, vector<16x128xf32> -> vector<16x128xf32>
    %c0_3 = arith.constant 0 : index
    %c0_4 = arith.constant 0 : index
    %3 = vector.load %arg4[%c0_3, %c0_4] : memref<1x128xf32, #tpu.memory_space<vmem>>, vector<1x128xf32>
    %4 = vector.broadcast %3 : vector<1x128xf32> to vector<16x128xf32>
    %5 = arith.addf %2, %4 : vector<16x128xf32>
    %cst_5 = arith.constant 0.000000e+00 : f32
    %6 = vector.broadcast %cst_5 : f32 to vector<16x128xf32>
    %7 = arith.maximumf %5, %6 : vector<16x128xf32>
    %8 = arith.truncf %7 : vector<16x128xf32> to vector<16x128xbf16>
    %c0_6 = arith.constant 0 : index
    %c0_7 = arith.constant 0 : index
    %9 = vector.load %arg5[%c0_6, %c0_7] : memref<16x128xbf16, #tpu.memory_space<vmem>>, vector<16x128xbf16>
    tpu.vector_store %arg5[%c0_6, %c0_7], %8 {strides = array<i32>} : memref<16x128xbf16, #tpu.memory_space<vmem>>, vector<16x128xbf16>,
    return
  }
  func.func @transform_0(%arg0: i32, %arg1: i32) -> (i32, i32) {
    %c0_i32 = arith.constant 0 : i32
    %c0_i32_0 = arith.constant 0 : i32
    return %arg0, %c0_i32 : i32, i32
  }
  func.func @transform_1(%arg0: i32, %arg1: i32) -> (i32, i32) {
    %c0_i32 = arith.constant 0 : i32
    %c0_i32_0 = arith.constant 0 : i32
    return %c0_i32, %arg1 : i32, i32
  }
  func.func @transform_2(%arg0: i32, %arg1: i32) -> (i32, i32) {
    %c0_i32 = arith.constant 0 : i32
    %c0_i32_0 = arith.constant 0 : i32
    return %c0_i32, %arg1 : i32, i32
  }
  func.func @transform_3(%arg0: i32, %arg1: i32) -> (i32, i32) {
    %c0_i32 = arith.constant 0 : i32
    return %arg0, %arg1 : i32, i32
  }
}

module attributes {stable_mosaic.version = 11 : i64} {
  func.func @_matmul_bias_single_k_kernel(%arg0: i32, %arg1: i32, %arg2: memref<16x128xbf16, #tpu.memory_space<vmem>>, %arg3: memref<128x128xbf16, #tpu.memory_space<vmem>>, %arg4: memref<1x128xf32, #tpu.memory_space<vmem>>, %arg5: memref<16x128xbf16, #tpu.memory_space<vmem>>) attributes {dimension_semantics = [#tpu.dimension_semantics<parallel>, #tpu.dimension_semantics<parallel>], iteration_bounds = array<i64: 1, 1>, scalar_prefetch = 0 : i64, scratch_operands = 0 : i64, tpu.core_type = #tpu.core_type<tc>, window_params = [{transform_indices = @transform_0, window_bounds = array<i64: 16, 128>}, {transform_indices = @transform_1, window_bounds = array<i64: 128, 128>}, {transform_indices = @transform_2, window_bounds = array<i64: 1, 128>}, {transform_indices = @transform_3, window_bounds = array<i64: 16, 128>}]} {
    %c0 = arith.constant 0 : index
    %c0_0 = arith.constant 0 : index
    %0 = vector.load %arg2[%c0, %c0_0] : memref<16x128xbf16, #tpu.memory_space<vmem>>, vector<16x128xbf16>
    %c0_1 = arith.constant 0 : index
    %c0_2 = arith.constant 0 : index
    %1 = vector.load %arg3[%c0_1, %c0_2] : memref<128x128xbf16, #tpu.memory_space<vmem>>, vector<128x128xbf16>
    %cst = arith.constant dense<0.000000e+00> : vector<16x128xf32>
    %2 = tpu.matmul %0, %1, %cst {dimension_numbers = #tpu.dot_dimension_numbers<[1], [0], [0], [1], [0, 0, 1, 1], [], []>} : vector<16x128xbf16>, vector<128x128xbf16>, vector<16x128xf32> -> vector<16x128xf32>
    %c0_3 = arith.constant 0 : index
    %c0_4 = arith.constant 0 : index
    %3 = vector.load %arg4[%c0_3, %c0_4] : memref<1x128xf32, #tpu.memory_space<vmem>>, vector<1x128xf32>
    %4 = vector.broadcast %3 : vector<1x128xf32> to vector<16x128xf32>
    %5 = arith.addf %2, %4 : vector<16x128xf32>
    %cst_5 = arith.constant 0.000000e+00 : f32
    %6 = vector.broadcast %cst_5 : f32 to vector<16x128xf32>
    %7 = arith.maximumf %5, %6 : vector<16x128xf32>
    %8 = arith.truncf %7 : vector<16x128xf32> to vector<16x128xbf16>
    %c0_6 = arith.constant 0 : index
    %c0_7 = arith.constant 0 : index
    %9 = vector.load %arg5[%c0_6, %c0_7] : memref<16x128xbf16, #tpu.memory_space<vmem>>, vector<16x128xbf16>
    tpu.vector_store %arg5[%c0_6, %c0_7], %8 {strides = array<i32>} : memref<16x128xbf16, #tpu.memory_space<vmem>>, vector<16x128xbf16>,
    return
  }
  func.func @transform_0(%arg0: i32, %arg1: i32) -> (i32, i32) {
    %c0_i32 = arith.constant 0 : i32
    %c0_i32_0 = arith.constant 0 : i32
    return %arg0, %c0_i32 : i32, i32
  }
  func.func @transform_1(%arg0: i32, %arg1: i32) -> (i32, i32) {
    %c0_i32 = arith.constant 0 : i32
    %c0_i32_0 = arith.constant 0 : i32
    return %c0_i32, %arg1 : i32, i32
  }
  func.func @transform_2(%arg0: i32, %arg1: i32) -> (i32, i32) {
    %c0_i32 = arith.constant 0 : i32
    %c0_i32_0 = arith.constant 0 : i32
    return %c0_i32, %arg1 : i32, i32
  }
  func.func @transform_3(%arg0: i32, %arg1: i32) -> (i32, i32) {
    %c0_i32 = arith.constant 0 : i32
    return %arg0, %arg1 : i32, i32
  }
}

module attributes {stable_mosaic.version = 11 : i64} {
  func.func @_matmul_bias_single_k_kernel(%arg0: i32, %arg1: i32, %arg2: memref<16x128xbf16, #tpu.memory_space<vmem>>, %arg3: memref<128x128xbf16, #tpu.memory_space<vmem>>, %arg4: memref<1x128xf32, #tpu.memory_space<vmem>>, %arg5: memref<16x128xf32, #tpu.memory_space<vmem>>) attributes {dimension_semantics = [#tpu.dimension_semantics<parallel>, #tpu.dimension_semantics<parallel>], iteration_bounds = array<i64: 1, 1>, scalar_prefetch = 0 : i64, scratch_operands = 0 : i64, tpu.core_type = #tpu.core_type<tc>, window_params = [{transform_indices = @transform_0, window_bounds = array<i64: 16, 128>}, {transform_indices = @transform_1, window_bounds = array<i64: 128, 128>}, {transform_indices = @transform_2, window_bounds = array<i64: 1, 128>}, {transform_indices = @transform_3, window_bounds = array<i64: 16, 128>}]} {
    %c0 = arith.constant 0 : index
    %c0_0 = arith.constant 0 : index
    %0 = vector.load %arg2[%c0, %c0_0] : memref<16x128xbf16, #tpu.memory_space<vmem>>, vector<16x128xbf16>
    %c0_1 = arith.constant 0 : index
    %c0_2 = arith.constant 0 : index
    %1 = vector.load %arg3[%c0_1, %c0_2] : memref<128x128xbf16, #tpu.memory_space<vmem>>, vector<128x128xbf16>
    %cst = arith.constant dense<0.000000e+00> : vector<16x128xf32>
    %2 = tpu.matmul %0, %1, %cst {dimension_numbers = #tpu.dot_dimension_numbers<[1], [0], [0], [1], [0, 0, 1, 1], [], []>} : vector<16x128xbf16>, vector<128x128xbf16>, vector<16x128xf32> -> vector<16x128xf32>
    %c0_3 = arith.constant 0 : index
    %c0_4 = arith.constant 0 : index
    %3 = vector.load %arg4[%c0_3, %c0_4] : memref<1x128xf32, #tpu.memory_space<vmem>>, vector<1x128xf32>
    %4 = vector.broadcast %3 : vector<1x128xf32> to vector<16x128xf32>
    %5 = arith.addf %2, %4 : vector<16x128xf32>
    %c0_5 = arith.constant 0 : index
    %c0_6 = arith.constant 0 : index
    %6 = vector.load %arg5[%c0_5, %c0_6] : memref<16x128xf32, #tpu.memory_space<vmem>>, vector<16x128xf32>
    tpu.vector_store %arg5[%c0_5, %c0_6], %5 {strides = array<i32>} : memref<16x128xf32, #tpu.memory_space<vmem>>, vector<16x128xf32>,
    return
  }
  func.func @transform_0(%arg0: i32, %arg1: i32) -> (i32, i32) {
    %c0_i32 = arith.constant 0 : i32
    %c0_i32_0 = arith.constant 0 : i32
    return %arg0, %c0_i32 : i32, i32
  }
  func.func @transform_1(%arg0: i32, %arg1: i32) -> (i32, i32) {
    %c0_i32 = arith.constant 0 : i32
    %c0_i32_0 = arith.constant 0 : i32
    return %c0_i32, %arg1 : i32, i32
  }
  func.func @transform_2(%arg0: i32, %arg1: i32) -> (i32, i32) {
    %c0_i32 = arith.constant 0 : i32
    %c0_i32_0 = arith.constant 0 : i32
    return %c0_i32, %arg1 : i32, i32
  }
  func.func @transform_3(%arg0: i32, %arg1: i32) -> (i32, i32) {
    %c0_i32 = arith.constant 0 : i32
    return %arg0, %arg1 : i32, i32
  }
}

</mosaic_0001>

<llo_original>
// kernel: vgg_forward.8
$region0: #{vgg_forward.8}
  #allocation0 [shape = 'u32[]', space=smem, size = 0x4, offset = 0x4, fixed_abs, tag = 'smem constant byte address 0x4 - core index']
  #allocation1 [shape = 'u32[144,128]{1,0:T(1,128)}', space=vmem, size = 0x12000, scoped, tag = 'internal scratch']
  %s0 = inlined_call_operand.vmem [shape: bf16[16,8,16], index: 0, kind: input, shape index: {}]
  %s1 = inlined_call_operand.vmem [shape: bf16[16,8,8], index: 1, kind: output, shape index: {}]
  %s2 = sld [smem:[#allocation0]]
  $region37: #{vgg_forward.8} parent=0
    _
  %s4 = ssub.s32 1, %s2
  %s5 = scalar_select 0, %s4, %s2
  loop: start=0, step=1, limit=4
  $region2: #{vgg_forward.8} parent=0 // loop_pre_header
    _
  $region3: #{vgg_forward.8} parent=0 // loop_header
    %s7 = sphi 0, %s11
    %p8 = scmp.ge.s32.totalorder %s7, 4
    %s17 = sphi 0, %s19
    %s20 = sphi 0, %s17
    %s21 = sphi 0, %s20
    %s37 = sphi 0, %s21
    %s43 = sphi 0, %s45
    %s46 = sphi 0, %s43
    %s47 = sphi 0, %s46
    %s63 = sphi 0, %s47
  $region4: #{vgg_forward.8} parent=0 // loop_header_branch
    %10 = sbr.rel (%p8) target = $region8
  $region5: #{vgg_forward.8} parent=0 // loop_body
    %s12 = ssub.s32 %s7, 1
    %s13 = ssub.s32 %s7, 2
    %s14 = sadd.s32 %s7, 1
    %s15 = ssub.s32 %s7, %s14
    %p16 = scmp.eq.s32.totalorder %s15, 0
    %s18 = sadd.s32 %s17, 1
    %s19 = scalar_select %p16, %s17, %s18
    %p22 = pneg %p16
    %p23 = scmp.eq.s32.totalorder %s7, 1
    %p24 = por %p22, %p23
    %p25 = scmp.ne.s32.totalorder %s17, %s20
    %p26 = scmp.eq.s32.totalorder %s7, 0
    %p27 = por %p25, %p26
    %p28 = scmp.ne.s32.totalorder %s17, %s20
    %p29 = scmp.eq.s32.totalorder %s12, 1
    %p30 = por %p28, %p29
    %p31 = scmp.ne.s32.totalorder %s20, %s21
    %p32 = scmp.eq.s32.totalorder %s12, 0
    %p33 = por %p31, %p32
    %p34 = scmp.ne.s32.totalorder %s20, %s21
    %p35 = scmp.eq.s32.totalorder %s13, 1
    %p36 = por %p34, %p35
    %p38 = scmp.ne.s32.totalorder %s21, %s37
    %p39 = scmp.eq.s32.totalorder %s13, 0
    %p40 = por %p38, %p39
    %s41 = ssub.s32 %s7, %s14
    %p42 = scmp.eq.s32.totalorder %s41, 0
    %s44 = sadd.s32 %s43, 1
    %s45 = scalar_select %p42, %s43, %s44
    %p48 = pneg %p42
    %p49 = scmp.eq.s32.totalorder %s7, 1
    %p50 = por %p48, %p49
    %p51 = scmp.ne.s32.totalorder %s43, %s46
    %p52 = scmp.eq.s32.totalorder %s7, 0
    %p53 = por %p51, %p52
    %p54 = scmp.ne.s32.totalorder %s43, %s46
    %p55 = scmp.eq.s32.totalorder %s12, 1
    %p56 = por %p54, %p55
    %p57 = scmp.ne.s32.totalorder %s46, %s47
    %p58 = scmp.eq.s32.totalorder %s12, 0
    %p59 = por %p57, %p58
    %p60 = scmp.ne.s32.totalorder %s46, %s47
    %p61 = scmp.eq.s32.totalorder %s13, 1
    %p62 = por %p60, %p61
    %p64 = scmp.ne.s32.totalorder %s47, %s63
    %p65 = scmp.eq.s32.totalorder %s13, 0
    %p66 = por %p64, %p65
    %p67 = scmp.le.s32.totalorder 1, %s7
    %p68 = scmp.lt.s32.totalorder %s7, 3
    %p69 = pnand %p67, %p68
    %p70 = pneg %p69
    // Predicated region
    $region9: #{vgg_forward.8} parent=5 // pred_check
      _
    $region10: #{vgg_forward.8} parent=5 // pred_check_branch
      %72 = sbr.rel (%p69) target = $region12
    $region11: #{vgg_forward.8} parent=5 // pred_region
      %s73 = ssub.s32 %s7, 1
    $region12: #{vgg_forward.8} parent=5 // pred_fallthru
      _
    %p74 = scmp.lt.s32.totalorder %s7, 2
    // Predicated region
    $region13: #{vgg_forward.8} parent=5 // pred_check
      %p75 = pneg %p74
    $region14: #{vgg_forward.8} parent=5 // pred_check_branch
      %77 = sbr.rel (%p75) target = $region16
    $region15: #{vgg_forward.8} parent=5 // pred_region
      // Predicated region
      $region17: #{vgg_forward.8} parent=15 // pred_check
        %p78 = pneg %p27
      $region18: #{vgg_forward.8} parent=15 // pred_check_branch
        %80 = sbr.rel (%p78) target = $region20
      $region19: #{vgg_forward.8} parent=15 // pred_region
        %s81 = smul.u32 8, %s7
        %p82 = scmp.lt.s32.totalorder %s81, 15
        %s83 = scalar_select %p82, %s81, 15
        %s84 = smul.addr %s83, 4
        %s85 = scalar_lea.vmem %s0, %s84
        %s86 = smul.u32 8, %s7
      $region20: #{vgg_forward.8} parent=15 // pred_fallthru
        _
    $region16: #{vgg_forward.8} parent=5 // pred_fallthru
      _
    %p87 = scmp.le.s32.totalorder 1, %s7
    %p88 = scmp.lt.s32.totalorder %s7, 3
    %p89 = pnand %p87, %p88
    %p90 = pneg %p89
    // Predicated region
    $region21: #{vgg_forward.8} parent=5 // pred_check
      _
    $region22: #{vgg_forward.8} parent=5 // pred_check_branch
      %92 = sbr.rel (%p89) target = $region24
    $region23: #{vgg_forward.8} parent=5 // pred_region
      %s93 = ssub.s32 %s7, 1
      %s94 = smul.u32 8, %s12
      %p95 = scmp.lt.s32.totalorder %s94, 15
      %s96 = scalar_select %p95, %s94, 15
      %s97 = smul.addr %s96, 4
      %s98 = scalar_lea.vmem %s0, %s97
      %p99 = pneg %p33
      %p100 = pneg %p30
      %p101 = pneg %p59
      %p102 = pneg %p56
      %s103 = smul.u32 8, %s12
      %p104 = scmp.lt.s32.totalorder %s103, 15
      %s105 = scalar_select %p104, %s103, 15
      %s106 = smul.addr %s105, 4
      %s107 = scalar_lea.vmem %s1, %s106
      %s108 = smul.u32 8, %s12
      %p109 = scmp.lt.s32.totalorder %s108, 15
      %s110 = scalar_select %p109, %s108, 15
      %s111 = smul.addr %s110, 4
      %s112 = scalar_lea.vmem %s0, %s111
      %s113 = smul.u32 8, %s12
      %s114 = smul.u32 8, %s12
      %p115 = scmp.lt.s32.totalorder %s114, 15
      %s116 = scalar_select %p115, %s114, 15
      %s117 = smul.addr %s116, 4
      %s118 = scalar_lea.vmem %s1, %s117
      %s119 = smul.u32 8, %s12
      %v120 = vld [vmem:[%s112] sm:$0xf]
      %v121 = vld [vmem:[%s112 + $0x4] sm:$0xf]
      %v122 = vld [vmem:[%s112 + $0x8] sm:$0xf]
      %v123 = vld [vmem:[%s112 + $0xc] sm:$0xf]
      %v124 = vld [vmem:[%s112 + $0x10] sm:$0xf]
      %v125 = vld [vmem:[%s112 + $0x14] sm:$0xf]
      %v126 = vld [vmem:[%s112 + $0x18] sm:$0xf]
      %v127 = vld [vmem:[%s112 + $0x1c] sm:$0xf]
      %136 = vrot.lane.b32.xlu0 %v120, 120
      %v137 = vpop.permute.xlu0 %136
      %138 = vrot.lane.b32.xlu0 %v121, 120
      %v139 = vpop.permute.xlu0 %138
      %140 = vrot.lane.b32.xlu0 %v122, 120
      %v141 = vpop.permute.xlu0 %140
      %142 = vrot.lane.b32.xlu0 %v123, 120
      %v143 = vpop.permute.xlu0 %142
      %144 = vrot.lane.b32.xlu0 %v124, 120
      %v145 = vpop.permute.xlu0 %144
      %146 = vrot.lane.b32.xlu0 %v125, 120
      %v147 = vpop.permute.xlu0 %146
      %148 = vrot.lane.b32.xlu0 %v126, 120
      %v149 = vpop.permute.xlu0 %148
      %150 = vrot.lane.b32.xlu0 %v127, 120
      %v151 = vpop.permute.xlu0 %150
      %v160 = vmax.bf16 %v120, %v137
      %v161 = vmax.bf16 %v121, %v139
      %v162 = vmax.bf16 %v122, %v141
      %v163 = vmax.bf16 %v123, %v143
      %v164 = vmax.bf16 %v124, %v145
      %v165 = vmax.bf16 %v125, %v147
      %v166 = vmax.bf16 %v126, %v149
      %v167 = vmax.bf16 %v127, %v151
      %vm168 = vcmask 60416
      %169 = vst.msk [vmem:[%s118] sm:$0xf] %vm168, %v160
      %170 = vst.msk [vmem:[%s118 + $0x4] sm:$0xf] %vm168, %v161
      %171 = vst.msk [vmem:[%s118 + $0x8] sm:$0xf] %vm168, %v162
      %172 = vst.msk [vmem:[%s118 + $0xc] sm:$0xf] %vm168, %v163
      %173 = vst.msk [vmem:[%s118 + $0x10] sm:$0xf] %vm168, %v164
      %174 = vst.msk [vmem:[%s118 + $0x14] sm:$0xf] %vm168, %v165
      %175 = vst.msk [vmem:[%s118 + $0x18] sm:$0xf] %vm168, %v166
      %176 = vst.msk [vmem:[%s118 + $0x1c] sm:$0xf] %vm168, %v167
      %s177 = smul.u32 8, %s12
      %p178 = scmp.lt.s32.totalorder %s177, 15
      %s179 = scalar_select %p178, %s177, 15
      %s180 = smul.addr %s179, 4
      %s181 = scalar_lea.vmem %s1, %s180
      // Predicated region
      $region25: #{vgg_forward.8} parent=23 // pred_check
        %p182 = pneg %p56
      $region26: #{vgg_forward.8} parent=23 // pred_check_branch
        %184 = sbr.rel (%p182) target = $region28
      $region27: #{vgg_forward.8} parent=23 // pred_region
        %s185 = smul.u32 8, %s12
      $region28: #{vgg_forward.8} parent=23 // pred_fallthru
        _
    $region24: #{vgg_forward.8} parent=5 // pred_fallthru
      _
    %p186 = scmp.le.s32.totalorder 2, %s7
    // Predicated region
    $region29: #{vgg_forward.8} parent=5 // pred_check
      %p187 = pneg %p186
    $region30: #{vgg_forward.8} parent=5 // pred_check_branch
      %189 = sbr.rel (%p187) target = $region32
    $region31: #{vgg_forward.8} parent=5 // pred_region
      %s190 = ssub.s32 %s7, 2
      // Predicated region
      $region33: #{vgg_forward.8} parent=31 // pred_check
        %p191 = pneg %p62
      $region34: #{vgg_forward.8} parent=31 // pred_check_branch
        %193 = sbr.rel (%p191) target = $region36
      $region35: #{vgg_forward.8} parent=31 // pred_region
        %s194 = smul.u32 8, %s13
        %p195 = scmp.lt.s32.totalorder %s194, 15
        %s196 = scalar_select %p195, %s194, 15
        %s197 = smul.addr %s196, 4
        %s198 = scalar_lea.vmem %s1, %s197
      $region36: #{vgg_forward.8} parent=31 // pred_fallthru
        _
    $region32: #{vgg_forward.8} parent=5 // pred_fallthru
      _
  $region6: #{vgg_forward.8} parent=0 // loop_footer
    %s11 = sadd.s32 1, %s7
  $region7: #{vgg_forward.8} parent=0 // loop_footer_branch
    %6 = sbr.rel target = $region3
  $region8: #{vgg_forward.8} parent=0 // loop_exit
    _

// kernel: vgg_forward.10
$region0: #{vgg_forward.10}
  #allocation0 [shape = 'u32[]', space=smem, size = 0x4, offset = 0x4, fixed_abs, tag = 'smem constant byte address 0x4 - core index']
  #allocation1 [shape = 'u32[144,128]{1,0:T(1,128)}', space=vmem, size = 0x12000, scoped, tag = 'internal scratch']
  %s0 = inlined_call_operand.vmem [shape: bf16[8,4,32], index: 0, kind: input, shape index: {}]
  %s1 = inlined_call_operand.vmem [shape: bf16[8,4,16], index: 1, kind: output, shape index: {}]
  %s2 = sld [smem:[#allocation0]]
  $region37: #{vgg_forward.10} parent=0
    _
  %s4 = ssub.s32 1, %s2
  %s5 = scalar_select 0, %s4, %s2
  loop: start=0, step=1, limit=4
  $region2: #{vgg_forward.10} parent=0 // loop_pre_header
    _
  $region3: #{vgg_forward.10} parent=0 // loop_header
    %s7 = sphi 0, %s11
    %p8 = scmp.ge.s32.totalorder %s7, 4
    %s17 = sphi 0, %s19
    %s20 = sphi 0, %s17
    %s21 = sphi 0, %s20
    %s37 = sphi 0, %s21
    %s43 = sphi 0, %s45
    %s46 = sphi 0, %s43
    %s47 = sphi 0, %s46
    %s63 = sphi 0, %s47
  $region4: #{vgg_forward.10} parent=0 // loop_header_branch
    %10 = sbr.rel (%p8) target = $region8
  $region5: #{vgg_forward.10} parent=0 // loop_body
    %s12 = ssub.s32 %s7, 1
    %s13 = ssub.s32 %s7, 2
    %s14 = sadd.s32 %s7, 1
    %s15 = ssub.s32 %s7, %s14
    %p16 = scmp.eq.s32.totalorder %s15, 0
    %s18 = sadd.s32 %s17, 1
    %s19 = scalar_select %p16, %s17, %s18
    %p22 = pneg %p16
    %p23 = scmp.eq.s32.totalorder %s7, 1
    %p24 = por %p22, %p23
    %p25 = scmp.ne.s32.totalorder %s17, %s20
    %p26 = scmp.eq.s32.totalorder %s7, 0
    %p27 = por %p25, %p26
    %p28 = scmp.ne.s32.totalorder %s17, %s20
    %p29 = scmp.eq.s32.totalorder %s12, 1
    %p30 = por %p28, %p29
    %p31 = scmp.ne.s32.totalorder %s20, %s21
    %p32 = scmp.eq.s32.totalorder %s12, 0
    %p33 = por %p31, %p32
    %p34 = scmp.ne.s32.totalorder %s20, %s21
    %p35 = scmp.eq.s32.totalorder %s13, 1
    %p36 = por %p34, %p35
    %p38 = scmp.ne.s32.totalorder %s21, %s37
    %p39 = scmp.eq.s32.totalorder %s13, 0
    %p40 = por %p38, %p39
    %s41 = ssub.s32 %s7, %s14
    %p42 = scmp.eq.s32.totalorder %s41, 0
    %s44 = sadd.s32 %s43, 1
    %s45 = scalar_select %p42, %s43, %s44
    %p48 = pneg %p42
    %p49 = scmp.eq.s32.totalorder %s7, 1
    %p50 = por %p48, %p49
    %p51 = scmp.ne.s32.totalorder %s43, %s46
    %p52 = scmp.eq.s32.totalorder %s7, 0
    %p53 = por %p51, %p52
    %p54 = scmp.ne.s32.totalorder %s43, %s46
    %p55 = scmp.eq.s32.totalorder %s12, 1
    %p56 = por %p54, %p55
    %p57 = scmp.ne.s32.totalorder %s46, %s47
    %p58 = scmp.eq.s32.totalorder %s12, 0
    %p59 = por %p57, %p58
    %p60 = scmp.ne.s32.totalorder %s46, %s47
    %p61 = scmp.eq.s32.totalorder %s13, 1
    %p62 = por %p60, %p61
    %p64 = scmp.ne.s32.totalorder %s47, %s63
    %p65 = scmp.eq.s32.totalorder %s13, 0
    %p66 = por %p64, %p65
    %p67 = scmp.le.s32.totalorder 1, %s7
    %p68 = scmp.lt.s32.totalorder %s7, 3
    %p69 = pnand %p67, %p68
    %p70 = pneg %p69
    // Predicated region
    $region9: #{vgg_forward.10} parent=5 // pred_check
      _
    $region10: #{vgg_forward.10} parent=5 // pred_check_branch
      %72 = sbr.rel (%p69) target = $region12
    $region11: #{vgg_forward.10} parent=5 // pred_region
      %s73 = ssub.s32 %s7, 1
    $region12: #{vgg_forward.10} parent=5 // pred_fallthru
      _
    %p74 = scmp.lt.s32.totalorder %s7, 2
    // Predicated region
    $region13: #{vgg_forward.10} parent=5 // pred_check
      %p75 = pneg %p74
    $region14: #{vgg_forward.10} parent=5 // pred_check_branch
      %77 = sbr.rel (%p75) target = $region16
    $region15: #{vgg_forward.10} parent=5 // pred_region
      // Predicated region
      $region17: #{vgg_forward.10} parent=15 // pred_check
        %p78 = pneg %p27
      $region18: #{vgg_forward.10} parent=15 // pred_check_branch
        %80 = sbr.rel (%p78) target = $region20
      $region19: #{vgg_forward.10} parent=15 // pred_region
        %s81 = smul.u32 4, %s7
        %p82 = scmp.lt.s32.totalorder %s81, 7
        %s83 = scalar_select %p82, %s81, 7
        %s84 = smul.addr %s83, 2
        %s85 = scalar_lea.vmem %s0, %s84
        %s86 = smul.u32 4, %s7
      $region20: #{vgg_forward.10} parent=15 // pred_fallthru
        _
    $region16: #{vgg_forward.10} parent=5 // pred_fallthru
      _
    %p87 = scmp.le.s32.totalorder 1, %s7
    %p88 = scmp.lt.s32.totalorder %s7, 3
    %p89 = pnand %p87, %p88
    %p90 = pneg %p89
    // Predicated region
    $region21: #{vgg_forward.10} parent=5 // pred_check
      _
    $region22: #{vgg_forward.10} parent=5 // pred_check_branch
      %92 = sbr.rel (%p89) target = $region24
    $region23: #{vgg_forward.10} parent=5 // pred_region
      %s93 = ssub.s32 %s7, 1
      %s94 = smul.u32 4, %s12
      %p95 = scmp.lt.s32.totalorder %s94, 7
      %s96 = scalar_select %p95, %s94, 7
      %s97 = smul.addr %s96, 2
      %s98 = scalar_lea.vmem %s0, %s97
      %p99 = pneg %p33
      %p100 = pneg %p30
      %p101 = pneg %p59
      %p102 = pneg %p56
      %s103 = smul.u32 4, %s12
      %p104 = scmp.lt.s32.totalorder %s103, 7
      %s105 = scalar_select %p104, %s103, 7
      %s106 = smul.addr %s105, 2
      %s107 = scalar_lea.vmem %s1, %s106
      %s108 = smul.u32 4, %s12
      %p109 = scmp.lt.s32.totalorder %s108, 7
      %s110 = scalar_select %p109, %s108, 7
      %s111 = smul.addr %s110, 2
      %s112 = scalar_lea.vmem %s0, %s111
      %s113 = smul.u32 4, %s12
      %s114 = smul.u32 4, %s12
      %p115 = scmp.lt.s32.totalorder %s114, 7
      %s116 = scalar_select %p115, %s114, 7
      %s117 = smul.addr %s116, 2
      %s118 = scalar_lea.vmem %s1, %s117
      %s119 = smul.u32 4, %s12
      %v120 = vld [vmem:[%s112] sm:$0x3]
      %v121 = vld [vmem:[%s112 + $0x2] sm:$0x3]
      %v122 = vld [vmem:[%s112 + $0x4] sm:$0x3]
      %v123 = vld [vmem:[%s112 + $0x6] sm:$0x3]
      %128 = vrot.lane.b32.xlu0 %v120, 112
      %v129 = vpop.permute.xlu0 %128
      %130 = vrot.lane.b32.xlu0 %v121, 112
      %v131 = vpop.permute.xlu0 %130
      %132 = vrot.lane.b32.xlu0 %v122, 112
      %v133 = vpop.permute.xlu0 %132
      %134 = vrot.lane.b32.xlu0 %v123, 112
      %v135 = vpop.permute.xlu0 %134
      %v140 = vmax.bf16 %v120, %v129
      %v141 = vmax.bf16 %v121, %v131
      %v142 = vmax.bf16 %v122, %v133
      %v143 = vmax.bf16 %v123, %v135
      %vm144 = vcmask 123904
      %145 = vst.msk [vmem:[%s118] sm:$0x3] %vm144, %v140
      %146 = vst.msk [vmem:[%s118 + $0x2] sm:$0x3] %vm144, %v141
      %147 = vst.msk [vmem:[%s118 + $0x4] sm:$0x3] %vm144, %v142
      %148 = vst.msk [vmem:[%s118 + $0x6] sm:$0x3] %vm144, %v143
      %s149 = smul.u32 4, %s12
      %p150 = scmp.lt.s32.totalorder %s149, 7
      %s151 = scalar_select %p150, %s149, 7
      %s152 = smul.addr %s151, 2
      %s153 = scalar_lea.vmem %s1, %s152
      // Predicated region
      $region25: #{vgg_forward.10} parent=23 // pred_check
        %p154 = pneg %p56
      $region26: #{vgg_forward.10} parent=23 // pred_check_branch
        %156 = sbr.rel (%p154) target = $region28
      $region27: #{vgg_forward.10} parent=23 // pred_region
        %s157 = smul.u32 4, %s12
      $region28: #{vgg_forward.10} parent=23 // pred_fallthru
        _
    $region24: #{vgg_forward.10} parent=5 // pred_fallthru
      _
    %p158 = scmp.le.s32.totalorder 2, %s7
    // Predicated region
    $region29: #{vgg_forward.10} parent=5 // pred_check
      %p159 = pneg %p158
    $region30: #{vgg_forward.10} parent=5 // pred_check_branch
      %161 = sbr.rel (%p159) target = $region32
    $region31: #{vgg_forward.10} parent=5 // pred_region
      %s162 = ssub.s32 %s7, 2
      // Predicated region
      $region33: #{vgg_forward.10} parent=31 // pred_check
        %p163 = pneg %p62
      $region34: #{vgg_forward.10} parent=31 // pred_check_branch
        %165 = sbr.rel (%p163) target = $region36
      $region35: #{vgg_forward.10} parent=31 // pred_region
        %s166 = smul.u32 4, %s13
        %p167 = scmp.lt.s32.totalorder %s166, 7
        %s168 = scalar_select %p167, %s166, 7
        %s169 = smul.addr %s168, 2
        %s170 = scalar_lea.vmem %s1, %s169
      $region36: #{vgg_forward.10} parent=31 // pred_fallthru
        _
    $region32: #{vgg_forward.10} parent=5 // pred_fallthru
      _
  $region6: #{vgg_forward.10} parent=0 // loop_footer
    %s11 = sadd.s32 1, %s7
  $region7: #{vgg_forward.10} parent=0 // loop_footer_branch
    %6 = sbr.rel target = $region3
  $region8: #{vgg_forward.10} parent=0 // loop_exit
    _

// kernel: vgg_forward.9
$region0: #{vgg_forward.9}
  #allocation0 [shape = 'u32[]', space=smem, size = 0x4, offset = 0x4, fixed_abs, tag = 'smem constant byte address 0x4 - core index']
  #allocation1 [shape = 'u32[144,128]{1,0:T(1,128)}', space=vmem, size = 0x12000, scoped, tag = 'internal scratch']
  #allocation2 [shape = 'bf16[6,10,8]{2,1,0:T(8,128)(2,1)}', space=vmem, size = 0x6000, scoped, tag = 'scratch operand']
  #allocation3 [shape = 'bf16[32,24]{1,0:T(8,128)(2,1)}', space=vmem, size = 0x2000, scoped, tag = 'scratch operand']
  %s0 = inlined_call_operand.vmem [shape: bf16[2,10,10,8], index: 0, kind: input, shape index: {}, may-alias: {0,1}]
  %s1 = inlined_call_operand.vmem [shape: bf16[2,10,10,8], index: 1, kind: input, shape index: {}, may-alias: {0,1}]
  %s2 = inlined_call_operand.vmem [shape: bf16[3,24,16], index: 2, kind: input, shape index: {}]
  %s3 = inlined_call_operand.vmem [shape: f32[1,16], index: 3, kind: input, shape index: {}]
  %s4 = inlined_call_operand.vmem [shape: bf16[2,4,8,16], index: 4, kind: output, shape index: {}]
  %s5 = sld [smem:[#allocation0]]
  $region49: #{vgg_forward.9} parent=0
    _
  %s7 = ssub.s32 1, %s5
  %s8 = scalar_select 0, %s7, %s5
  loop: start=0, step=1, limit=6
  $region2: #{vgg_forward.9} parent=0 // loop_pre_header
    _
  $region3: #{vgg_forward.9} parent=0 // loop_header
    %s10 = sphi 0, %s14
    %p11 = scmp.ge.s32.totalorder %s10, 6
    %s17 = sphi 0, %s29
    %s18 = sphi 0, %s25
    %s19 = sphi 0, %s17
    %s20 = sphi 0, %s18
    %s21 = sphi 0, %s19
    %s22 = sphi 0, %s20
    %s34 = sphi 0, %s36
    %s37 = sphi 0, %s34
    %s38 = sphi 0, %s37
    %s54 = sphi 0, %s38
    %s66 = sphi 0, %s68
    %s69 = sphi 0, %s66
    %s70 = sphi 0, %s69
    %s86 = sphi 0, %s70
    %s90 = sphi 0, %s90
    %s92 = sphi 0, %s90
    %s93 = sphi 0, %s92
    %s107 = sphi 0, %s93
    %s111 = sphi 0, %s111
    %s113 = sphi 0, %s111
    %s114 = sphi 0, %s113
    %s128 = sphi 0, %s114
    %s136 = sphi 0, %s138
    %s139 = sphi 0, %s136
    %s140 = sphi 0, %s139
    %s156 = sphi 0, %s140
  $region4: #{vgg_forward.9} parent=0 // loop_header_branch
    %13 = sbr.rel (%p11) target = $region8
  $region5: #{vgg_forward.9} parent=0 // loop_body
    %s15 = ssub.s32 %s10, 1
    %s16 = ssub.s32 %s10, 2
    %s23 = sadd.s32 1, %s18
    %p24 = scmp.ge.s32.totalorder %s23, 2
    %s25 = scalar_select %p24, 0, %s23
    %s26 = sadd.s32 1, %s17
    %s27 = scalar_select %p24, %s26, %s17
    %p28 = scmp.ge.s32.totalorder %s27, 2
    %s29 = scalar_select %p28, 0, %s27
    %s30 = ssub.s32 %s17, %s29
    %s31 = ssub.s32 %s18, %s25
    %s32 = sor.u32 %s30, %s31
    %p33 = scmp.eq.s32.totalorder %s32, 0
    %s35 = sadd.s32 %s34, 1
    %s36 = scalar_select %p33, %s34, %s35
    %p39 = pneg %p33
    %p40 = scmp.eq.s32.totalorder %s10, 3
    %p41 = por %p39, %p40
    %p42 = scmp.ne.s32.totalorder %s34, %s37
    %p43 = scmp.eq.s32.totalorder %s10, 0
    %p44 = por %p42, %p43
    %p45 = scmp.ne.s32.totalorder %s34, %s37
    %p46 = scmp.eq.s32.totalorder %s15, 3
    %p47 = por %p45, %p46
    %p48 = scmp.ne.s32.totalorder %s37, %s38
    %p49 = scmp.eq.s32.totalorder %s15, 0
    %p50 = por %p48, %p49
    %p51 = scmp.ne.s32.totalorder %s37, %s38
    %p52 = scmp.eq.s32.totalorder %s16, 3
    %p53 = por %p51, %p52
    %p55 = scmp.ne.s32.totalorder %s38, %s54
    %p56 = scmp.eq.s32.totalorder %s16, 0
    %p57 = por %p55, %p56
    %s58 = sadd.s32 %s18, 1
    %s59 = smul.u32 %s58, 2
    %s60 = sadd.s32 %s25, 1
    %s61 = smul.u32 %s60, 2
    %s62 = ssub.s32 %s17, %s29
    %s63 = ssub.s32 %s59, %s61
    %s64 = sor.u32 %s62, %s63
    %p65 = scmp.eq.s32.totalorder %s64, 0
    %s67 = sadd.s32 %s66, 1
    %s68 = scalar_select %p65, %s66, %s67
    %p71 = pneg %p65
    %p72 = scmp.eq.s32.totalorder %s10, 3
    %p73 = por %p71, %p72
    %p74 = scmp.ne.s32.totalorder %s66, %s69
    %p75 = scmp.eq.s32.totalorder %s10, 0
    %p76 = por %p74, %p75
    %p77 = scmp.ne.s32.totalorder %s66, %s69
    %p78 = scmp.eq.s32.totalorder %s15, 3
    %p79 = por %p77, %p78
    %p80 = scmp.ne.s32.totalorder %s69, %s70
    %p81 = scmp.eq.s32.totalorder %s15, 0
    %p82 = por %p80, %p81
    %p83 = scmp.ne.s32.totalorder %s69, %s70
    %p84 = scmp.eq.s32.totalorder %s16, 3
    %p85 = por %p83, %p84
    %p87 = scmp.ne.s32.totalorder %s70, %s86
    %p88 = scmp.eq.s32.totalorder %s16, 0
    %p89 = por %p87, %p88
    %s91 = sadd.s32 %s90, 1
    %p94 = scmp.eq.s32.totalorder %s10, 3
    %p95 = scmp.ne.s32.totalorder %s90, %s92
    %p96 = scmp.eq.s32.totalorder %s10, 0
    %p97 = por %p95, %p96
    %p98 = scmp.ne.s32.totalorder %s90, %s92
    %p99 = scmp.eq.s32.totalorder %s15, 3
    %p100 = por %p98, %p99
    %p101 = scmp.ne.s32.totalorder %s92, %s93
    %p102 = scmp.eq.s32.totalorder %s15, 0
    %p103 = por %p101, %p102
    %p104 = scmp.ne.s32.totalorder %s92, %s93
    %p105 = scmp.eq.s32.totalorder %s16, 3
    %p106 = por %p104, %p105
    %p108 = scmp.ne.s32.totalorder %s93, %s107
    %p109 = scmp.eq.s32.totalorder %s16, 0
    %p110 = por %p108, %p109
    %s112 = sadd.s32 %s111, 1
    %p115 = scmp.eq.s32.totalorder %s10, 3
    %p116 = scmp.ne.s32.totalorder %s111, %s113
    %p117 = scmp.eq.s32.totalorder %s10, 0
    %p118 = por %p116, %p117
    %p119 = scmp.ne.s32.totalorder %s111, %s113
    %p120 = scmp.eq.s32.totalorder %s15, 3
    %p121 = por %p119, %p120
    %p122 = scmp.ne.s32.totalorder %s113, %s114
    %p123 = scmp.eq.s32.totalorder %s15, 0
    %p124 = por %p122, %p123
    %p125 = scmp.ne.s32.totalorder %s113, %s114
    %p126 = scmp.eq.s32.totalorder %s16, 3
    %p127 = por %p125, %p126
    %p129 = scmp.ne.s32.totalorder %s114, %s128
    %p130 = scmp.eq.s32.totalorder %s16, 0
    %p131 = por %p129, %p130
    %s132 = ssub.s32 %s17, %s29
    %s133 = ssub.s32 %s18, %s25
    %s134 = sor.u32 %s132, %s133
    %p135 = scmp.eq.s32.totalorder %s134, 0
    %s137 = sadd.s32 %s136, 1
    %s138 = scalar_select %p135, %s136, %s137
    %p141 = pneg %p135
    %p142 = scmp.eq.s32.totalorder %s10, 3
    %p143 = por %p141, %p142
    %p144 = scmp.ne.s32.totalorder %s136, %s139
    %p145 = scmp.eq.s32.totalorder %s10, 0
    %p146 = por %p144, %p145
    %p147 = scmp.ne.s32.totalorder %s136, %s139
    %p148 = scmp.eq.s32.totalorder %s15, 3
    %p149 = por %p147, %p148
    %p150 = scmp.ne.s32.totalorder %s139, %s140
    %p151 = scmp.eq.s32.totalorder %s15, 0
    %p152 = por %p150, %p151
    %p153 = scmp.ne.s32.totalorder %s139, %s140
    %p154 = scmp.eq.s32.totalorder %s16, 3
    %p155 = por %p153, %p154
    %p157 = scmp.ne.s32.totalorder %s140, %s156
    %p158 = scmp.eq.s32.totalorder %s16, 0
    %p159 = por %p157, %p158
    %p160 = scmp.le.s32.totalorder 1, %s10
    %p161 = scmp.lt.s32.totalorder %s10, 5
    %p162 = pnand %p160, %p161
    %p163 = pneg %p162
    // Predicated region
    $region9: #{vgg_forward.9} parent=5 // pred_check
      _
    $region10: #{vgg_forward.9} parent=5 // pred_check_branch
      %165 = sbr.rel (%p162) target = $region12
    $region11: #{vgg_forward.9} parent=5 // pred_region
      %s166 = ssub.s32 %s10, 1
      // Predicated region
      $region13: #{vgg_forward.9} parent=11 // pred_check
        %p167 = pneg %p103
      $region14: #{vgg_forward.9} parent=11 // pred_check_branch
        %169 = sbr.rel (%p167) target = $region16
      $region15: #{vgg_forward.9} parent=11 // pred_region
        _
      $region16: #{vgg_forward.9} parent=11 // pred_fallthru
        _
      // Predicated region
      $region17: #{vgg_forward.9} parent=11 // pred_check
        %p170 = pneg %p124
      $region18: #{vgg_forward.9} parent=11 // pred_check_branch
        %172 = sbr.rel (%p170) target = $region20
      $region19: #{vgg_forward.9} parent=11 // pred_region
        _
      $region20: #{vgg_forward.9} parent=11 // pred_fallthru
        _
    $region12: #{vgg_forward.9} parent=5 // pred_fallthru
      _
    %p173 = scmp.lt.s32.totalorder %s10, 4
    // Predicated region
    $region21: #{vgg_forward.9} parent=5 // pred_check
      %p174 = pneg %p173
    $region22: #{vgg_forward.9} parent=5 // pred_check_branch
      %176 = sbr.rel (%p174) target = $region24
    $region23: #{vgg_forward.9} parent=5 // pred_region
      // Predicated region
      $region25: #{vgg_forward.9} parent=23 // pred_check
        %p177 = pneg %p44
      $region26: #{vgg_forward.9} parent=23 // pred_check_branch
        %179 = sbr.rel (%p177) target = $region28
      $region27: #{vgg_forward.9} parent=23 // pred_region
        %s180 = smul.u32 4, %s18
        %s181 = ssub.s32 10, %s180
        %p182 = scmp.lt.s32.totalorder %s181, 4
        %s183 = scalar_select %p182, %s181, 4
        %s184 = smul.u32 64, %s183
        %s185 = smul.u32 %s184, 2
        %p186 = scmp.lt.s32.totalorder %s17, 1
        %s187 = scalar_select %p186, %s17, 1
        %p188 = scmp.lt.s32.totalorder %s180, 9
        %s189 = scalar_select %p188, %s180, 9
        %s190 = smul.addr %s189, 2
        %s191 = smul.addr %s187, 20
        %s192 = sadd.s32 %s190, %s191
        %s193 = smul.addr %s192, 4
        %s194 = scalar_lea.vmem %s0, %s193
        %s195 = smul.u32 4, %s18
        %s196 = ssub.s32 10, %s195
        %p197 = scmp.lt.s32.totalorder %s196, 4
        %s198 = scalar_select %p197, %s196, 4
        %s199 = smul.u32 64, %s198
        %s200 = smul.u32 %s199, 2
      $region28: #{vgg_forward.9} parent=23 // pred_fallthru
        _
      // Predicated region
      $region29: #{vgg_forward.9} parent=23 // pred_check
        %p201 = pneg %p76
      $region30: #{vgg_forward.9} parent=23 // pred_check_branch
        %203 = sbr.rel (%p201) target = $region32
      $region31: #{vgg_forward.9} parent=23 // pred_region
        %s204 = sadd.s32 %s18, 1
        %s205 = smul.u32 %s204, 2
        %s206 = smul.u32 2, %s205
        %p207 = scmp.lt.s32.totalorder %s17, 1
        %s208 = scalar_select %p207, %s17, 1
        %p209 = scmp.lt.s32.totalorder %s206, 9
        %s210 = scalar_select %p209, %s206, 9
        %s211 = smul.addr %s210, 2
        %s212 = smul.addr %s208, 20
        %s213 = sadd.s32 %s211, %s212
        %s214 = smul.addr %s213, 4
        %s215 = scalar_lea.vmem %s1, %s214
        %s216 = sadd.s32 %s18, 1
        %s217 = smul.u32 %s216, 2
        %s218 = smul.u32 2, %s217
      $region32: #{vgg_forward.9} parent=23 // pred_fallthru
        _
    $region24: #{vgg_forward.9} parent=5 // pred_fallthru
      _
    %p219 = scmp.le.s32.totalorder 1, %s10
    %p220 = scmp.lt.s32.totalorder %s10, 5
    %p221 = pnand %p219, %p220
    %p222 = pneg %p221
    // Predicated region
    $region33: #{vgg_forward.9} parent=5 // pred_check
      _
    $region34: #{vgg_forward.9} parent=5 // pred_check_branch
      %224 = sbr.rel (%p221) target = $region36
    $region35: #{vgg_forward.9} parent=5 // pred_region
      %s225 = ssub.s32 %s10, 1
      %s226 = smul.u32 4, %s20
      %s227 = ssub.s32 10, %s226
      %p228 = scmp.lt.s32.totalorder %s227, 4
      %s229 = scalar_select %p228, %s227, 4
      %s230 = smul.u32 64, %s229
      %s231 = smul.u32 %s230, 2
      %p232 = scmp.lt.s32.totalorder %s19, 1
      %s233 = scalar_select %p232, %s19, 1
      %p234 = scmp.lt.s32.totalorder %s226, 9
      %s235 = scalar_select %p234, %s226, 9
      %s236 = smul.addr %s235, 2
      %s237 = smul.addr %s233, 20
      %s238 = sadd.s32 %s236, %s237
      %s239 = smul.addr %s238, 4
      %s240 = scalar_lea.vmem %s0, %s239
      %p241 = pneg %p50
      %p242 = pneg %p47
      %s243 = sadd.s32 %s20, 1
      %s244 = smul.u32 %s243, 2
      %s245 = smul.u32 2, %s244
      %p246 = scmp.lt.s32.totalorder %s19, 1
      %s247 = scalar_select %p246, %s19, 1
      %p248 = scmp.lt.s32.totalorder %s245, 9
      %s249 = scalar_select %p248, %s245, 9
      %s250 = smul.addr %s249, 2
      %s251 = smul.addr %s247, 20
      %s252 = sadd.s32 %s250, %s251
      %s253 = smul.addr %s252, 4
      %s254 = scalar_lea.vmem %s1, %s253
      %p255 = pneg %p82
      %p256 = pneg %p79
      %p257 = pneg %p103
      %p258 = pneg %p100
      %p259 = pneg %p124
      %p260 = pneg %p121
      %p261 = pneg %p152
      %p262 = pneg %p149
      %s263 = smul.u32 2, %s20
      %p264 = scmp.lt.s32.totalorder %s19, 1
      %s265 = scalar_select %p264, %s19, 1
      %p266 = scmp.lt.s32.totalorder %s263, 3
      %s267 = scalar_select %p266, %s263, 3
      %s268 = smul.addr %s265, 4
      %s269 = sadd.s32 %s267, %s268
      %s270 = smul.addr %s269, 4
      %s271 = scalar_lea.vmem %s4, %s270
      %s272 = smul.u32 4, %s20
      %s273 = ssub.s32 10, %s272
      %p274 = scmp.lt.s32.totalorder %s273, 4
      %s275 = scalar_select %p274, %s273, 4
      %s276 = smul.u32 64, %s275
      %s277 = smul.u32 %s276, 2
      %p278 = scmp.lt.s32.totalorder %s19, 1
      %s279 = scalar_select %p278, %s19, 1
      %p280 = scmp.lt.s32.totalorder %s272, 9
      %s281 = scalar_select %p280, %s272, 9
      %s282 = smul.addr %s281, 2
      %s283 = smul.addr %s279, 20
      %s284 = sadd.s32 %s282, %s283
      %s285 = smul.addr %s284, 4
      %s286 = scalar_lea.vmem %s0, %s285
      %s287 = smul.u32 4, %s20
      %s288 = ssub.s32 10, %s287
      %p289 = scmp.lt.s32.totalorder %s288, 4
      %s290 = scalar_select %p289, %s288, 4
      %s291 = smul.u32 64, %s290
      %s292 = smul.u32 %s291, 2
      %s293 = sadd.s32 %s20, 1
      %s294 = smul.u32 %s293, 2
      %s295 = smul.u32 2, %s294
      %p296 = scmp.lt.s32.totalorder %s19, 1
      %s297 = scalar_select %p296, %s19, 1
      %p298 = scmp.lt.s32.totalorder %s295, 9
      %s299 = scalar_select %p298, %s295, 9
      %s300 = smul.addr %s299, 2
      %s301 = smul.addr %s297, 20
      %s302 = sadd.s32 %s300, %s301
      %s303 = smul.addr %s302, 4
      %s304 = scalar_lea.vmem %s1, %s303
      %s305 = sadd.s32 %s20, 1
      %s306 = smul.u32 %s305, 2
      %s307 = smul.u32 2, %s306
      %s308 = smul.u32 2, %s20
      %p309 = scmp.lt.s32.totalorder %s19, 1
      %s310 = scalar_select %p309, %s19, 1
      %p311 = scmp.lt.s32.totalorder %s308, 3
      %s312 = scalar_select %p311, %s308, 3
      %s313 = smul.addr %s310, 4
      %s314 = sadd.s32 %s312, %s313
      %s315 = smul.addr %s314, 4
      %s316 = scalar_lea.vmem %s4, %s315
      %s317 = smul.u32 2, %s20
      %v319 = vld [vmem:[%s286] sm:$0xf]
      %v320 = vld [vmem:[%s286 + $0x4] sm:$0x1]
      %v321 = vld [vmem:[%s286 + $0x8] sm:$0xf]
      %v322 = vld [vmem:[%s286 + $0xc] sm:$0x1]
      %v323 = vld [vmem:[%s286 + $0x10] sm:$0xf]
      %v324 = vld [vmem:[%s286 + $0x14] sm:$0x1]
      %v325 = vld [vmem:[%s286 + $0x18] sm:$0xf]
      %v326 = vld [vmem:[%s286 + $0x1c] sm:$0x1]
      %vm327 = vcmask 60416
      %328 = vst.msk [vmem:[#allocation2] sm:$0xf] %vm327, %v319
      %vm329 = vcmask 57344
      %330 = vst.msk [vmem:[#allocation2 + $0x4] sm:$0x1] %vm329, %v320
      %331 = vst.msk [vmem:[#allocation2 + $0x8] sm:$0xf] %vm327, %v321
      %332 = vst.msk [vmem:[#allocation2 + $0xc] sm:$0x1] %vm329, %v322
      %333 = vst.msk [vmem:[#allocation2 + $0x10] sm:$0xf] %vm327, %v323
      %334 = vst.msk [vmem:[#allocation2 + $0x14] sm:$0x1] %vm329, %v324
      %335 = vst.msk [vmem:[#allocation2 + $0x18] sm:$0xf] %vm327, %v325
      %336 = vst.msk [vmem:[#allocation2 + $0x1c] sm:$0x1] %vm329, %v326
      %v337 = vld [vmem:[%s304] sm:$0xf]
      %v338 = vld [vmem:[%s304 + $0x4] sm:$0x1]
      %v339 = vld [vmem:[%s304 + $0x8] sm:$0xf]
      %v340 = vld [vmem:[%s304 + $0xc] sm:$0x1]
      %s341 = scalar_lea.vmem [#allocation2], 32
      %342 = vst.msk [vmem:[%s341] sm:$0xf] %vm327, %v337
      %343 = vst.msk [vmem:[%s341 + $0x4] sm:$0x1] %vm329, %v338
      %344 = vst.msk [vmem:[%s341 + $0x8] sm:$0xf] %vm327, %v339
      %345 = vst.msk [vmem:[%s341 + $0xc] sm:$0x1] %vm329, %v340
      %v346 = vld [vmem:[#allocation2] sm:$0xf]
      %v347 = vld [vmem:[#allocation2 + $0x4] sm:$0x1]
      %v348 = vld [vmem:[#allocation2 + $0x8] sm:$0xf]
      %v349 = vld [vmem:[#allocation2 + $0xc] sm:$0x1]
      %v350 = vld [vmem:[#allocation2 + $0x10] sm:$0xf]
      %v351 = vld [vmem:[#allocation2 + $0x14] sm:$0x1]
      %v352 = vld [vmem:[#allocation2 + $0x18] sm:$0xf]
      %v353 = vld [vmem:[#allocation2 + $0x1c] sm:$0x1]
      %354 = vst.msk [vmem:[#allocation3] sm:$0xf] %vm327, %v346
      %355 = vst.msk [vmem:[#allocation3 + $0x4] sm:$0xf] %vm327, %v348
      %356 = vst.msk [vmem:[#allocation3 + $0x8] sm:$0xf] %vm327, %v350
      %357 = vst.msk [vmem:[#allocation3 + $0xc] sm:$0xf] %vm327, %v352
      %vm358 = vsmask.f32 3328
      %vm359 = vsmask.f32 7440
      %vm360 = vmor %vm358, %vm359
      %v362 = vshrl.u32 %v346, 16
      %v364 = vrot.slane %v362, 4
      %v365 = vshll.u32 %v346, 16
      %v367 = vrot.slane %v365, 5
      %v368 = vor.u32 %v364, %v367
      %v369 = vrot.slane %v368, 4
      %v371 = vshll.u32 %v347, 16
      %v373 = vrot.slane %v371, 5
      %v374 = vsel %vm360, %v369, %v373
      %v376 = vshrl.u32 %v348, 16
      %v378 = vrot.slane %v376, 4
      %v379 = vshll.u32 %v348, 16
      %v381 = vrot.slane %v379, 5
      %v382 = vor.u32 %v378, %v381
      %v383 = vrot.slane %v382, 4
      %v385 = vshll.u32 %v349, 16
      %v387 = vrot.slane %v385, 5
      %v388 = vsel %vm360, %v383, %v387
      %v390 = vshrl.u32 %v350, 16
      %v392 = vrot.slane %v390, 4
      %v393 = vshll.u32 %v350, 16
      %v395 = vrot.slane %v393, 5
      %v396 = vor.u32 %v392, %v395
      %v397 = vrot.slane %v396, 4
      %v399 = vshll.u32 %v351, 16
      %v401 = vrot.slane %v399, 5
      %v402 = vsel %vm360, %v397, %v401
      %v404 = vshrl.u32 %v352, 16
      %v406 = vrot.slane %v404, 4
      %v407 = vshll.u32 %v352, 16
      %v409 = vrot.slane %v407, 5
      %v410 = vor.u32 %v406, %v409
      %v411 = vrot.slane %v410, 4
      %v413 = vshll.u32 %v353, 16
      %v415 = vrot.slane %v413, 5
      %v416 = vsel %vm360, %v411, %v415
      %417 = vrot.lane.b32.xlu0 %v374, 8
      %v418 = vpop.permute.xlu0 %417
      %419 = vrot.lane.b32.xlu0 %v388, 8
      %v420 = vpop.permute.xlu0 %419
      %421 = vrot.lane.b32.xlu0 %v402, 8
      %v422 = vpop.permute.xlu0 %421
      %423 = vrot.lane.b32.xlu0 %v416, 8
      %v424 = vpop.permute.xlu0 %423
      %vm429 = vcmask 126016
      %430 = vst.msk [vmem:[#allocation3] sm:$0xf] %vm429, %v418
      %431 = vst.msk [vmem:[#allocation3 + $0x4] sm:$0xf] %vm429, %v420
      %432 = vst.msk [vmem:[#allocation3 + $0x8] sm:$0xf] %vm429, %v422
      %433 = vst.msk [vmem:[#allocation3 + $0xc] sm:$0xf] %vm429, %v424
      %vm442 = vcmask 1042432
      %vm443 = vcmask 1046532
      %vm444 = vmor %vm442, %vm443
      %v445 = vrot.slane %v346, 5
      %v446 = vrot.slane %v445, 4
      %v447 = vrot.slane %v347, 5
      %v448 = vsel %vm444, %v446, %v447
      %v449 = vrot.slane %v348, 5
      %v450 = vrot.slane %v449, 4
      %v451 = vrot.slane %v349, 5
      %v452 = vsel %vm444, %v450, %v451
      %v453 = vrot.slane %v350, 5
      %v454 = vrot.slane %v453, 4
      %v455 = vrot.slane %v351, 5
      %v456 = vsel %vm444, %v454, %v455
      %v457 = vrot.slane %v352, 5
      %v458 = vrot.slane %v457, 4
      %v459 = vrot.slane %v353, 5
      %v460 = vsel %vm444, %v458, %v459
      %461 = vrot.lane.b32.xlu0 %v448, 16
      %v462 = vpop.permute.xlu0 %461
      %463 = vrot.lane.b32.xlu0 %v452, 16
      %v464 = vpop.permute.xlu0 %463
      %465 = vrot.lane.b32.xlu0 %v456, 16
      %v466 = vpop.permute.xlu0 %465
      %467 = vrot.lane.b32.xlu0 %v460, 16
      %v468 = vpop.permute.xlu0 %467
      %vm473 = vcmask 191616
      %474 = vst.msk [vmem:[#allocation3] sm:$0xf] %vm473, %v462
      %475 = vst.msk [vmem:[#allocation3 + $0x4] sm:$0xf] %vm473, %v464
      %476 = vst.msk [vmem:[#allocation3 + $0x8] sm:$0xf] %vm473, %v466
      %477 = vst.msk [vmem:[#allocation3 + $0xc] sm:$0xf] %vm473, %v468
      %v478 = vld [vmem:[#allocation3] sm:$0xf]
      %v479 = vld [vmem:[#allocation3 + $0x4] sm:$0xf]
      %v480 = vld [vmem:[#allocation3 + $0x8] sm:$0xf]
      %v481 = vld [vmem:[#allocation3 + $0xc] sm:$0xf]
      %v482 = vld [vmem:[%s2] sm:$0xf]
      %v483 = vld [vmem:[%s2 + $0x4] sm:$0xf]
      %v484 = vld [vmem:[%s2 + $0x8] sm:$0xf]
      %s485 = scalar_lea.vmem [#allocation2], 8
      %v486 = vld [vmem:[%s485] sm:$0xf]
      %v487 = vld [vmem:[%s485 + $0x4] sm:$0x1]
      %v488 = vld [vmem:[%s485 + $0x8] sm:$0xf]
      %v489 = vld [vmem:[%s485 + $0xc] sm:$0x1]
      %v490 = vld [vmem:[%s485 + $0x10] sm:$0xf]
      %v491 = vld [vmem:[%s485 + $0x14] sm:$0x1]
      %v492 = vld [vmem:[%s485 + $0x18] sm:$0xf]
      %v493 = vld [vmem:[%s485 + $0x1c] sm:$0x1]
      %494 = vst.msk [vmem:[#allocation3] sm:$0xf] %vm327, %v486
      %495 = vst.msk [vmem:[#allocation3 + $0x4] sm:$0xf] %vm327, %v488
      %496 = vst.msk [vmem:[#allocation3 + $0x8] sm:$0xf] %vm327, %v490
      %497 = vst.msk [vmem:[#allocation3 + $0xc] sm:$0xf] %vm327, %v492
      %v499 = vshrl.u32 %v486, 16
      %v501 = vrot.slane %v499, 4
      %v502 = vshll.u32 %v486, 16
      %v504 = vrot.slane %v502, 5
      %v505 = vor.u32 %v501, %v504
      %v506 = vrot.slane %v505, 4
      %v508 = vshll.u32 %v487, 16
      %v510 = vrot.slane %v508, 5
      %v511 = vsel %vm360, %v506, %v510
      %v513 = vshrl.u32 %v488, 16
      %v515 = vrot.slane %v513, 4
      %v516 = vshll.u32 %v488, 16
      %v518 = vrot.slane %v516, 5
      %v519 = vor.u32 %v515, %v518
      %v520 = vrot.slane %v519, 4
      %v522 = vshll.u32 %v489, 16
      %v524 = vrot.slane %v522, 5
      %v525 = vsel %vm360, %v520, %v524
      %v527 = vshrl.u32 %v490, 16
      %v529 = vrot.slane %v527, 4
      %v530 = vshll.u32 %v490, 16
      %v532 = vrot.slane %v530, 5
      %v533 = vor.u32 %v529, %v532
      %v534 = vrot.slane %v533, 4
      %v536 = vshll.u32 %v491, 16
      %v538 = vrot.slane %v536, 5
      %v539 = vsel %vm360, %v534, %v538
      %v541 = vshrl.u32 %v492, 16
      %v543 = vrot.slane %v541, 4
      %v544 = vshll.u32 %v492, 16
      %v546 = vrot.slane %v544, 5
      %v547 = vor.u32 %v543, %v546
      %v548 = vrot.slane %v547, 4
      %v550 = vshll.u32 %v493, 16
      %v552 = vrot.slane %v550, 5
      %v553 = vsel %vm360, %v548, %v552
      %554 = vrot.lane.b32.xlu0 %v511, 8
      %v555 = vpop.permute.xlu0 %554
      %556 = vrot.lane.b32.xlu0 %v525, 8
      %v557 = vpop.permute.xlu0 %556
      %558 = vrot.lane.b32.xlu0 %v539, 8
      %v559 = vpop.permute.xlu0 %558
      %560 = vrot.lane.b32.xlu0 %v553, 8
      %v561 = vpop.permute.xlu0 %560
      %566 = vst.msk [vmem:[#allocation3] sm:$0xf] %vm429, %v555
      %567 = vst.msk [vmem:[#allocation3 + $0x4] sm:$0xf] %vm429, %v557
      %568 = vst.msk [vmem:[#allocation3 + $0x8] sm:$0xf] %vm429, %v559
      %569 = vst.msk [vmem:[#allocation3 + $0xc] sm:$0xf] %vm429, %v561
      %v578 = vrot.slane %v486, 5
      %v579 = vrot.slane %v578, 4
      %v580 = vrot.slane %v487, 5
      %v581 = vsel %vm444, %v579, %v580
      %v582 = vrot.slane %v488, 5
      %v583 = vrot.slane %v582, 4
      %v584 = vrot.slane %v489, 5
      %v585 = vsel %vm444, %v583, %v584
      %v586 = vrot.slane %v490, 5
      %v587 = vrot.slane %v586, 4
      %v588 = vrot.slane %v491, 5
      %v589 = vsel %vm444, %v587, %v588
      %v590 = vrot.slane %v492, 5
      %v591 = vrot.slane %v590, 4
      %v592 = vrot.slane %v493, 5
      %v593 = vsel %vm444, %v591, %v592
      %594 = vrot.lane.b32.xlu0 %v581, 16
      %v595 = vpop.permute.xlu0 %594
      %596 = vrot.lane.b32.xlu0 %v585, 16
      %v597 = vpop.permute.xlu0 %596
      %598 = vrot.lane.b32.xlu0 %v589, 16
      %v599 = vpop.permute.xlu0 %598
      %600 = vrot.lane.b32.xlu0 %v593, 16
      %v601 = vpop.permute.xlu0 %600
      %606 = vst.msk [vmem:[#allocation3] sm:$0xf] %vm473, %v595
      %607 = vst.msk [vmem:[#allocation3 + $0x4] sm:$0xf] %vm473, %v597
      %608 = vst.msk [vmem:[#allocation3 + $0x8] sm:$0xf] %vm473, %v599
      %609 = vst.msk [vmem:[#allocation3 + $0xc] sm:$0xf] %vm473, %v601
      %v610 = vld [vmem:[#allocation3] sm:$0xf]
      %v611 = vld [vmem:[#allocation3 + $0x4] sm:$0xf]
      %v612 = vld [vmem:[#allocation3 + $0x8] sm:$0xf]
      %v613 = vld [vmem:[#allocation3 + $0xc] sm:$0xf]
      %s614 = scalar_lea.vmem %s2, 12
      %v615 = vld [vmem:[%s614] sm:$0xf]
      %v616 = vld [vmem:[%s614 + $0x4] sm:$0xf]
      %v617 = vld [vmem:[%s614 + $0x8] sm:$0xf]
      %v622 = vunpack.c.l.b16 %v610
      %v623 = vunpack.c.l.b16 %v611
      %v624 = vunpack.c.l.b16 %v612
      %v625 = vunpack.c.l.b16 %v613
      %v626 = vpack.c.b16 %v623, %v622
      %v627 = vpack.c.b16 %v625, %v624
      %v631 = vunpack.c.l.b16 %v615
      %v632 = vunpack.c.l.b16 %v616
      %v633 = vunpack.c.l.b16 %v617
      %v634 = vpack.c.b16 %v632, %v631
      %v635 = vpack.c.b16 %v633, %v633
      %vm637 = vcmask 195584
      %v639 = vsel %vm637, %v626, 0
      %v642 = vsel %vm637, %v627, 0
      %vm644 = vcmask 1043456
      %v646 = vsel %vm644, %v635, 0
      %648 = vmatprep.subr.bf16.mxu0 0
      %649 = vmatpush1.bf16.msra.mxu0 0
      %650 = vmatprep.subr.bf16.mxu0 0
      %651 = vmatpush1.bf16.msra.mxu0 0
      %652 = vmatprep.subr.bf16.mxu0 0
      %653 = vmatpush1.bf16.msra.mxu0 0
      %654 = vmatprep.subr.bf16.mxu0 0
      %655 = vmatpush1.bf16.msra.mxu0 0
      %656 = vmatprep.subr.bf16.mxu0 0
      %657 = vmatpush1.bf16.msra.mxu0 0
      %658 = vmatprep.subr.bf16.mxu0 0
      %659 = vmatpush1.bf16.msra.mxu0 0
      %660 = vmatprep.subr.bf16.mxu0 0
      %661 = vmatpush1.bf16.msra.mxu0 %v646
      %662 = vmatprep.subr.bf16.mxu0 0
      %663 = vmatpush1.bf16.msra.mxu0 %v634
      %664 = vmatprep.subr.bf16.mxu0 0
      %665 = vmatpush2.bf16.msra.mxu0 0
      %666 = vmatprep.subr.bf16.mxu0 0
      %667 = vmatpush2.bf16.msra.mxu0 0
      %668 = vmatprep.subr.bf16.mxu0 0
      %669 = vmatpush2.bf16.msra.mxu0 0
      %670 = vmatprep.subr.bf16.mxu0 0
      %671 = vmatpush2.bf16.msra.mxu0 0
      %672 = vmatprep.subr.bf16.mxu0 0
      %673 = vmatpush2.bf16.msra.mxu0 0
      %674 = vmatprep.subr.bf16.mxu0 0
      %675 = vmatpush2.bf16.msra.mxu0 0
      %676 = vmatprep.subr.bf16.mxu0 0
      %677 = vmatpush2.bf16.msra.mxu0 0
      %678 = vmatprep.subr.bf16.mxu0 0
      %679 = vmatpush2.bf16.msra.mxu0 0
      %680 = vmatprep.mubr.bf16.mxu0 0
      %681 = vmatmul.mubr.bf16.gmra.mxu0 %v639
      %v682 = vpop.f32.mrf.mxu0
      %v683 = vadd.f32 0.0, %v682
      %v684 = vpop.f32.mrf.mxu0
      %v685 = vpop.f32.mrf.mxu0
      %v686 = vadd.f32 0.0, %v685
      %v687 = vpop.f32.mrf.mxu0
      %688 = vmatprep.mubr.bf16.mxu0 0
      %689 = vmatmul.mubr.bf16.gmra.mxu0 %v642
      %v690 = vpop.f32.mrf.mxu0
      %v691 = vadd.f32 0.0, %v690
      %v692 = vpop.f32.mrf.mxu0
      %v693 = vpop.f32.mrf.mxu0
      %v694 = vadd.f32 0.0, %v693
      %v695 = vpop.f32.mrf.mxu0
      %696 = vdwg.mxu0
      %v701 = vunpack.c.l.b16 %v478
      %v702 = vunpack.c.l.b16 %v479
      %v703 = vunpack.c.l.b16 %v480
      %v704 = vunpack.c.l.b16 %v481
      %v705 = vpack.c.b16 %v702, %v701
      %v706 = vpack.c.b16 %v704, %v703
      %v710 = vunpack.c.l.b16 %v482
      %v711 = vunpack.c.l.b16 %v483
      %v712 = vunpack.c.l.b16 %v484
      %v713 = vpack.c.b16 %v711, %v710
      %v714 = vpack.c.b16 %v712, %v712
      %v717 = vsel %vm637, %v705, 0
      %v720 = vsel %vm637, %v706, 0
      %v723 = vsel %vm644, %v714, 0
      %725 = vmatprep.subr.bf16.mxu0 0
      %726 = vmatpush1.bf16.msra.mxu0 0
      %727 = vmatprep.subr.bf16.mxu0 0
      %728 = vmatpush1.bf16.msra.mxu0 0
      %729 = vmatprep.subr.bf16.mxu0 0
      %730 = vmatpush1.bf16.msra.mxu0 0
      %731 = vmatprep.subr.bf16.mxu0 0
      %732 = vmatpush1.bf16.msra.mxu0 0
      %733 = vmatprep.subr.bf16.mxu0 0
      %734 = vmatpush1.bf16.msra.mxu0 0
      %735 = vmatprep.subr.bf16.mxu0 0
      %736 = vmatpush1.bf16.msra.mxu0 0
      %737 = vmatprep.subr.bf16.mxu0 0
      %738 = vmatpush1.bf16.msra.mxu0 %v723
      %739 = vmatprep.subr.bf16.mxu0 0
      %740 = vmatpush1.bf16.msra.mxu0 %v713
      %741 = vmatprep.subr.bf16.mxu0 0
      %742 = vmatpush2.bf16.msra.mxu0 0
      %743 = vmatprep.subr.bf16.mxu0 0
      %744 = vmatpush2.bf16.msra.mxu0 0
      %745 = vmatprep.subr.bf16.mxu0 0
      %746 = vmatpush2.bf16.msra.mxu0 0
      %747 = vmatprep.subr.bf16.mxu0 0
      %748 = vmatpush2.bf16.msra.mxu0 0
      %749 = vmatprep.subr.bf16.mxu0 0
      %750 = vmatpush2.bf16.msra.mxu0 0
      %751 = vmatprep.subr.bf16.mxu0 0
      %752 = vmatpush2.bf16.msra.mxu0 0
      %753 = vmatprep.subr.bf16.mxu0 0
      %754 = vmatpush2.bf16.msra.mxu0 0
      %755 = vmatprep.subr.bf16.mxu0 0
      %756 = vmatpush2.bf16.msra.mxu0 0
      %757 = vmatprep.mubr.bf16.mxu0 0
      %758 = vmatmul.mubr.bf16.gmra.mxu0 %v717
      %v759 = vpop.f32.mrf.mxu0
      %v760 = vadd.f32 %v683, %v759
      %v761 = vpop.f32.mrf.mxu0
      %v762 = vpop.f32.mrf.mxu0
      %v763 = vadd.f32 %v686, %v762
      %v764 = vpop.f32.mrf.mxu0
      %765 = vmatprep.mubr.bf16.mxu0 0
      %766 = vmatmul.mubr.bf16.gmra.mxu0 %v720
      %v767 = vpop.f32.mrf.mxu0
      %v768 = vadd.f32 %v691, %v767
      %v769 = vpop.f32.mrf.mxu0
      %v770 = vpop.f32.mrf.mxu0
      %v771 = vadd.f32 %v694, %v770
      %v772 = vpop.f32.mrf.mxu0
      %773 = vdwg.mxu0
      %s774 = scalar_lea.vmem [#allocation2], 16
      %v775 = vld [vmem:[%s774] sm:$0xf]
      %v776 = vld [vmem:[%s774 + $0x4] sm:$0x1]
      %v777 = vld [vmem:[%s774 + $0x8] sm:$0xf]
      %v778 = vld [vmem:[%s774 + $0xc] sm:$0x1]
      %v779 = vld [vmem:[%s774 + $0x10] sm:$0xf]
      %v780 = vld [vmem:[%s774 + $0x14] sm:$0x1]
      %v781 = vld [vmem:[%s774 + $0x18] sm:$0xf]
      %v782 = vld [vmem:[%s774 + $0x1c] sm:$0x1]
      %783 = vst.msk [vmem:[#allocation3] sm:$0xf] %vm327, %v775
      %784 = vst.msk [vmem:[#allocation3 + $0x4] sm:$0xf] %vm327, %v777
      %785 = vst.msk [vmem:[#allocation3 + $0x8] sm:$0xf] %vm327, %v779
      %786 = vst.msk [vmem:[#allocation3 + $0xc] sm:$0xf] %vm327, %v781
      %v788 = vshrl.u32 %v775, 16
      %v790 = vrot.slane %v788, 4
      %v791 = vshll.u32 %v775, 16
      %v793 = vrot.slane %v791, 5
      %v794 = vor.u32 %v790, %v793
      %v795 = vrot.slane %v794, 4
      %v797 = vshll.u32 %v776, 16
      %v799 = vrot.slane %v797, 5
      %v800 = vsel %vm360, %v795, %v799
      %v802 = vshrl.u32 %v777, 16
      %v804 = vrot.slane %v802, 4
      %v805 = vshll.u32 %v777, 16
      %v807 = vrot.slane %v805, 5
      %v808 = vor.u32 %v804, %v807
      %v809 = vrot.slane %v808, 4
      %v811 = vshll.u32 %v778, 16
      %v813 = vrot.slane %v811, 5
      %v814 = vsel %vm360, %v809, %v813
      %v816 = vshrl.u32 %v779, 16
      %v818 = vrot.slane %v816, 4
      %v819 = vshll.u32 %v779, 16
      %v821 = vrot.slane %v819, 5
      %v822 = vor.u32 %v818, %v821
      %v823 = vrot.slane %v822, 4
      %v825 = vshll.u32 %v780, 16
      %v827 = vrot.slane %v825, 5
      %v828 = vsel %vm360, %v823, %v827
      %v830 = vshrl.u32 %v781, 16
      %v832 = vrot.slane %v830, 4
      %v833 = vshll.u32 %v781, 16
      %v835 = vrot.slane %v833, 5
      %v836 = vor.u32 %v832, %v835
      %v837 = vrot.slane %v836, 4
      %v839 = vshll.u32 %v782, 16
      %v841 = vrot.slane %v839, 5
      %v842 = vsel %vm360, %v837, %v841
      %843 = vrot.lane.b32.xlu0 %v800, 8
      %v844 = vpop.permute.xlu0 %843
      %845 = vrot.lane.b32.xlu0 %v814, 8
      %v846 = vpop.permute.xlu0 %845
      %847 = vrot.lane.b32.xlu0 %v828, 8
      %v848 = vpop.permute.xlu0 %847
      %849 = vrot.lane.b32.xlu0 %v842, 8
      %v850 = vpop.permute.xlu0 %849
      %855 = vst.msk [vmem:[#allocation3] sm:$0xf] %vm429, %v844
      %856 = vst.msk [vmem:[#allocation3 + $0x4] sm:$0xf] %vm429, %v846
      %857 = vst.msk [vmem:[#allocation3 + $0x8] sm:$0xf] %vm429, %v848
      %858 = vst.msk [vmem:[#allocation3 + $0xc] sm:$0xf] %vm429, %v850
      %v867 = vrot.slane %v775, 5
      %v868 = vrot.slane %v867, 4
      %v869 = vrot.slane %v776, 5
      %v870 = vsel %vm444, %v868, %v869
      %v871 = vrot.slane %v777, 5
      %v872 = vrot.slane %v871, 4
      %v873 = vrot.slane %v778, 5
      %v874 = vsel %vm444, %v872, %v873
      %v875 = vrot.slane %v779, 5
      %v876 = vrot.slane %v875, 4
      %v877 = vrot.slane %v780, 5
      %v878 = vsel %vm444, %v876, %v877
      %v879 = vrot.slane %v781, 5
      %v880 = vrot.slane %v879, 4
      %v881 = vrot.slane %v782, 5
      %v882 = vsel %vm444, %v880, %v881
      %883 = vrot.lane.b32.xlu0 %v870, 16
      %v884 = vpop.permute.xlu0 %883
      %885 = vrot.lane.b32.xlu0 %v874, 16
      %v886 = vpop.permute.xlu0 %885
      %887 = vrot.lane.b32.xlu0 %v878, 16
      %v888 = vpop.permute.xlu0 %887
      %889 = vrot.lane.b32.xlu0 %v882, 16
      %v890 = vpop.permute.xlu0 %889
      %895 = vst.msk [vmem:[#allocation3] sm:$0xf] %vm473, %v884
      %896 = vst.msk [vmem:[#allocation3 + $0x4] sm:$0xf] %vm473, %v886
      %897 = vst.msk [vmem:[#allocation3 + $0x8] sm:$0xf] %vm473, %v888
      %898 = vst.msk [vmem:[#allocation3 + $0xc] sm:$0xf] %vm473, %v890
      %v899 = vld [vmem:[#allocation3] sm:$0xf]
      %v900 = vld [vmem:[#allocation3 + $0x4] sm:$0xf]
      %v901 = vld [vmem:[#allocation3 + $0x8] sm:$0xf]
      %v902 = vld [vmem:[#allocation3 + $0xc] sm:$0xf]
      %s903 = scalar_lea.vmem %s2, 24
      %v904 = vld [vmem:[%s903] sm:$0xf]
      %v905 = vld [vmem:[%s903 + $0x4] sm:$0xf]
      %v906 = vld [vmem:[%s903 + $0x8] sm:$0xf]
      %v911 = vunpack.c.l.b16 %v899
      %v912 = vunpack.c.l.b16 %v900
      %v913 = vunpack.c.l.b16 %v901
      %v914 = vunpack.c.l.b16 %v902
      %v915 = vpack.c.b16 %v912, %v911
      %v916 = vpack.c.b16 %v914, %v913
      %v920 = vunpack.c.l.b16 %v904
      %v921 = vunpack.c.l.b16 %v905
      %v922 = vunpack.c.l.b16 %v906
      %v923 = vpack.c.b16 %v921, %v920
      %v924 = vpack.c.b16 %v922, %v922
      %v927 = vsel %vm637, %v915, 0
      %v930 = vsel %vm637, %v916, 0
      %v933 = vsel %vm644, %v924, 0
      %935 = vmatprep.subr.bf16.mxu0 0
      %936 = vmatpush1.bf16.msra.mxu0 0
      %937 = vmatprep.subr.bf16.mxu0 0
      %938 = vmatpush1.bf16.msra.mxu0 0
      %939 = vmatprep.subr.bf16.mxu0 0
      %940 = vmatpush1.bf16.msra.mxu0 0
      %941 = vmatprep.subr.bf16.mxu0 0
      %942 = vmatpush1.bf16.msra.mxu0 0
      %943 = vmatprep.subr.bf16.mxu0 0
      %944 = vmatpush1.bf16.msra.mxu0 0
      %945 = vmatprep.subr.bf16.mxu0 0
      %946 = vmatpush1.bf16.msra.mxu0 0
      %947 = vmatprep.subr.bf16.mxu0 0
      %948 = vmatpush1.bf16.msra.mxu0 %v933
      %949 = vmatprep.subr.bf16.mxu0 0
      %950 = vmatpush1.bf16.msra.mxu0 %v923
      %951 = vmatprep.subr.bf16.mxu0 0
      %952 = vmatpush2.bf16.msra.mxu0 0
      %953 = vmatprep.subr.bf16.mxu0 0
      %954 = vmatpush2.bf16.msra.mxu0 0
      %955 = vmatprep.subr.bf16.mxu0 0
      %956 = vmatpush2.bf16.msra.mxu0 0
      %957 = vmatprep.subr.bf16.mxu0 0
      %958 = vmatpush2.bf16.msra.mxu0 0
      %959 = vmatprep.subr.bf16.mxu0 0
      %960 = vmatpush2.bf16.msra.mxu0 0
      %961 = vmatprep.subr.bf16.mxu0 0
      %962 = vmatpush2.bf16.msra.mxu0 0
      %963 = vmatprep.subr.bf16.mxu0 0
      %964 = vmatpush2.bf16.msra.mxu0 0
      %965 = vmatprep.subr.bf16.mxu0 0
      %966 = vmatpush2.bf16.msra.mxu0 0
      %967 = vmatprep.mubr.bf16.mxu0 0
      %968 = vmatmul.mubr.bf16.gmra.mxu0 %v927
      %v969 = vpop.f32.mrf.mxu0
      %v970 = vadd.f32 0.0, %v969
      %v971 = vpop.f32.mrf.mxu0
      %v972 = vpop.f32.mrf.mxu0
      %v973 = vadd.f32 0.0, %v972
      %v974 = vpop.f32.mrf.mxu0
      %975 = vmatprep.mubr.bf16.mxu0 0
      %976 = vmatmul.mubr.bf16.gmra.mxu0 %v930
      %v977 = vpop.f32.mrf.mxu0
      %v978 = vadd.f32 0.0, %v977
      %v979 = vpop.f32.mrf.mxu0
      %v980 = vpop.f32.mrf.mxu0
      %v981 = vadd.f32 0.0, %v980
      %v982 = vpop.f32.mrf.mxu0
      %983 = vdwg.mxu0
      %v984 = vadd.f32 %v760, %v970
      %v985 = vadd.f32 %v763, %v973
      %v986 = vadd.f32 %v768, %v978
      %v987 = vadd.f32 %v771, %v981
      %v988 = vld [vmem:[%s3] sm:$0x1]
      %v990 = vlaneseq
      %v991 = vshrl.u32 %v990, 7
      %v992 = vsub.s32 0, %v991
      %v993 = vrot.slane %v988, %v992
      %v995 = vadd.f32 %v984, %v993
      %v996 = vadd.f32 %v985, %v993
      %v997 = vadd.f32 %v986, %v993
      %v998 = vadd.f32 %v987, %v993
      %v999 = vmax.f32 %v995, 0.0
      %v1000 = vmax.f32 %v996, 0.0
      %v1001 = vmax.f32 %v997, 0.0
      %v1002 = vmax.f32 %v998, 0.0
      %v1003 = vmax.f32 %v999, %v1000
      %v1004 = vmax.f32 %v1001, %v1002
      %v1005 = vpack.c.bf16 %v1003, %v1003
      %v1006 = vpack.c.bf16 %v1004, %v1004
      %vm1007 = vcmask 125952
      %1008 = vst.msk [vmem:[%s316] sm:$0xf] %vm1007, %v1005
      %1009 = vst.msk [vmem:[%s316 + $0x4] sm:$0xf] %vm1007, %v1006
      %s1010 = smul.u32 2, %s20
      %p1011 = scmp.lt.s32.totalorder %s19, 1
      %s1012 = scalar_select %p1011, %s19, 1
      %p1013 = scmp.lt.s32.totalorder %s1010, 3
      %s1014 = scalar_select %p1013, %s1010, 3
      %s1015 = smul.addr %s1012, 4
      %s1016 = sadd.s32 %s1014, %s1015
      %s1017 = smul.addr %s1016, 4
      %s1018 = scalar_lea.vmem %s4, %s1017
      // Predicated region
      $region37: #{vgg_forward.9} parent=35 // pred_check
        %p1019 = pneg %p149
      $region38: #{vgg_forward.9} parent=35 // pred_check_branch
        %1021 = sbr.rel (%p1019) target = $region40
      $region39: #{vgg_forward.9} parent=35 // pred_region
        %s1022 = smul.u32 2, %s20
      $region40: #{vgg_forward.9} parent=35 // pred_fallthru
        _
    $region36: #{vgg_forward.9} parent=5 // pred_fallthru
      _
    %p1023 = scmp.le.s32.totalorder 2, %s10
    // Predicated region
    $region41: #{vgg_forward.9} parent=5 // pred_check
      %p1024 = pneg %p1023
    $region42: #{vgg_forward.9} parent=5 // pred_check_branch
      %1026 = sbr.rel (%p1024) target = $region44
    $region43: #{vgg_forward.9} parent=5 // pred_region
      %s1027 = ssub.s32 %s10, 2
      // Predicated region
      $region45: #{vgg_forward.9} parent=43 // pred_check
        %p1028 = pneg %p155
      $region46: #{vgg_forward.9} parent=43 // pred_check_branch
        %1030 = sbr.rel (%p1028) target = $region48
      $region47: #{vgg_forward.9} parent=43 // pred_region
        %s1031 = smul.u32 2, %s22
        %p1032 = scmp.lt.s32.totalorder %s21, 1
        %s1033 = scalar_select %p1032, %s21, 1
        %p1034 = scmp.lt.s32.totalorder %s1031, 3
        %s1035 = scalar_select %p1034, %s1031, 3
        %s1036 = smul.addr %s1033, 4
        %s1037 = sadd.s32 %s1035, %s1036
        %s1038 = smul.addr %s1037, 4
        %s1039 = scalar_lea.vmem %s4, %s1038
      $region48: #{vgg_forward.9} parent=43 // pred_fallthru
        _
    $region44: #{vgg_forward.9} parent=5 // pred_fallthru
      _
  $region6: #{vgg_forward.9} parent=0 // loop_footer
    %s14 = sadd.s32 1, %s10
  $region7: #{vgg_forward.9} parent=0 // loop_footer_branch
    %9 = sbr.rel target = $region3
  $region8: #{vgg_forward.9} parent=0 // loop_exit
    _

// kernel: vgg_forward.11
$region0: #{vgg_forward.11}
  #allocation0 [shape = 'u32[]', space=smem, size = 0x4, offset = 0x4, fixed_abs, tag = 'smem constant byte address 0x4 - core index']
  #allocation1 [shape = 'u32[144,128]{1,0:T(1,128)}', space=vmem, size = 0x12000, scoped, tag = 'internal scratch']
  %s0 = inlined_call_operand.vmem [shape: bf16[16,256], index: 0, kind: input, shape index: {}]
  %s1 = inlined_call_operand.vmem [shape: bf16[256,128], index: 1, kind: input, shape index: {}]
  %s2 = inlined_call_operand.vmem [shape: f32[1,128], index: 2, kind: input, shape index: {}]
  %s3 = inlined_call_operand.vmem [shape: bf16[16,128], index: 3, kind: output, shape index: {}]
  %s4 = sld [smem:[#allocation0]]
  $region22: #{vgg_forward.11} parent=0
    _
  %s6 = ssub.s32 1, %s4
  %s7 = scalar_select 0, %s6, %s4
  // Predicated region
  $region2: #{vgg_forward.11} parent=0 // pred_check
    _
  $region3: #{vgg_forward.11} parent=0 // pred_check_branch
    %9 = sbr.rel (0) target = $region5
  $region4: #{vgg_forward.11} parent=0 // pred_region
    _
  $region5: #{vgg_forward.11} parent=0 // pred_fallthru
    _
  // Predicated region
  $region6: #{vgg_forward.11} parent=0 // pred_check
    _
  $region7: #{vgg_forward.11} parent=0 // pred_check_branch
    %11 = sbr.rel (0) target = $region9
  $region8: #{vgg_forward.11} parent=0 // pred_region
    _
  $region9: #{vgg_forward.11} parent=0 // pred_fallthru
    _
  // Predicated region
  $region10: #{vgg_forward.11} parent=0 // pred_check
    _
  $region11: #{vgg_forward.11} parent=0 // pred_check_branch
    %13 = sbr.rel (0) target = $region13
  $region12: #{vgg_forward.11} parent=0 // pred_region
    _
  $region13: #{vgg_forward.11} parent=0 // pred_fallthru
    _
  %v15 = vld [vmem:[%s0] sm:$0xff]
  %v16 = vld [vmem:[%s0 + $0x8] sm:$0xff]
  %v17 = vld [vmem:[%s1] sm:$0xf]
  %v18 = vld [vmem:[%s1 + $0x4] sm:$0xf]
  %v19 = vld [vmem:[%s1 + $0x8] sm:$0xf]
  %v20 = vld [vmem:[%s1 + $0xc] sm:$0xf]
  %v21 = vld [vmem:[%s1 + $0x10] sm:$0xf]
  %v22 = vld [vmem:[%s1 + $0x14] sm:$0xf]
  %v23 = vld [vmem:[%s1 + $0x18] sm:$0xf]
  %v24 = vld [vmem:[%s1 + $0x1c] sm:$0xf]
  %v25 = vld [vmem:[%s1 + $0x20] sm:$0xf]
  %v26 = vld [vmem:[%s1 + $0x24] sm:$0xf]
  %v27 = vld [vmem:[%s1 + $0x28] sm:$0xf]
  %v28 = vld [vmem:[%s1 + $0x2c] sm:$0xf]
  %v29 = vld [vmem:[%s1 + $0x30] sm:$0xf]
  %v30 = vld [vmem:[%s1 + $0x34] sm:$0xf]
  %v31 = vld [vmem:[%s1 + $0x38] sm:$0xf]
  %v32 = vld [vmem:[%s1 + $0x3c] sm:$0xf]
  %v33 = vld [vmem:[%s1 + $0x40] sm:$0xf]
  %v34 = vld [vmem:[%s1 + $0x44] sm:$0xf]
  %v35 = vld [vmem:[%s1 + $0x48] sm:$0xf]
  %v36 = vld [vmem:[%s1 + $0x4c] sm:$0xf]
  %v37 = vld [vmem:[%s1 + $0x50] sm:$0xf]
  %v38 = vld [vmem:[%s1 + $0x54] sm:$0xf]
  %v39 = vld [vmem:[%s1 + $0x58] sm:$0xf]
  %v40 = vld [vmem:[%s1 + $0x5c] sm:$0xf]
  %v41 = vld [vmem:[%s1 + $0x60] sm:$0xf]
  %v42 = vld [vmem:[%s1 + $0x64] sm:$0xf]
  %v43 = vld [vmem:[%s1 + $0x68] sm:$0xf]
  %v44 = vld [vmem:[%s1 + $0x6c] sm:$0xf]
  %v45 = vld [vmem:[%s1 + $0x70] sm:$0xf]
  %v46 = vld [vmem:[%s1 + $0x74] sm:$0xf]
  %v47 = vld [vmem:[%s1 + $0x78] sm:$0xf]
  %v48 = vld [vmem:[%s1 + $0x7c] sm:$0xf]
  %v49 = vld [vmem:[%s2] sm:$0x1]
  %v51 = vlaneseq
  %v52 = vshrl.u32 %v51, 7
  %v53 = vsub.s32 0, %v52
  %v54 = vrot.slane %v49, %v53
  %v58 = vunpack.c.l.b16 %v15
  %v59 = vunpack.c.h.b16 %v15
  %v60 = vunpack.c.l.b16 %v16
  %v61 = vunpack.c.h.b16 %v16
  %v62 = vpack.c.b16 %v60, %v58
  %v63 = vpack.c.b16 %v61, %v59
  %v98 = vunpack.c.l.b16 %v17
  %v99 = vunpack.c.l.b16 %v18
  %v100 = vunpack.c.l.b16 %v19
  %v101 = vunpack.c.l.b16 %v20
  %v102 = vunpack.c.l.b16 %v21
  %v103 = vunpack.c.l.b16 %v22
  %v104 = vunpack.c.l.b16 %v23
  %v105 = vunpack.c.l.b16 %v24
  %v106 = vunpack.c.l.b16 %v25
  %v107 = vunpack.c.l.b16 %v26
  %v108 = vunpack.c.l.b16 %v27
  %v109 = vunpack.c.l.b16 %v28
  %v110 = vunpack.c.l.b16 %v29
  %v111 = vunpack.c.l.b16 %v30
  %v112 = vunpack.c.l.b16 %v31
  %v113 = vunpack.c.l.b16 %v32
  %v114 = vunpack.c.l.b16 %v33
  %v115 = vunpack.c.l.b16 %v34
  %v116 = vunpack.c.l.b16 %v35
  %v117 = vunpack.c.l.b16 %v36
  %v118 = vunpack.c.l.b16 %v37
  %v119 = vunpack.c.l.b16 %v38
  %v120 = vunpack.c.l.b16 %v39
  %v121 = vunpack.c.l.b16 %v40
  %v122 = vunpack.c.l.b16 %v41
  %v123 = vunpack.c.l.b16 %v42
  %v124 = vunpack.c.l.b16 %v43
  %v125 = vunpack.c.l.b16 %v44
  %v126 = vunpack.c.l.b16 %v45
  %v127 = vunpack.c.l.b16 %v46
  %v128 = vunpack.c.l.b16 %v47
  %v129 = vunpack.c.l.b16 %v48
  %v130 = vpack.c.b16 %v99, %v98
  %v131 = vpack.c.b16 %v101, %v100
  %v132 = vpack.c.b16 %v103, %v102
  %v133 = vpack.c.b16 %v105, %v104
  %v134 = vpack.c.b16 %v107, %v106
  %v135 = vpack.c.b16 %v109, %v108
  %v136 = vpack.c.b16 %v111, %v110
  %v137 = vpack.c.b16 %v113, %v112
  %v138 = vpack.c.b16 %v115, %v114
  %v139 = vpack.c.b16 %v117, %v116
  %v140 = vpack.c.b16 %v119, %v118
  %v141 = vpack.c.b16 %v121, %v120
  %v142 = vpack.c.b16 %v123, %v122
  %v143 = vpack.c.b16 %v125, %v124
  %v144 = vpack.c.b16 %v127, %v126
  %v145 = vpack.c.b16 %v129, %v128
  %162 = vmatprep.subr.bf16.mxu0 0
  %163 = vmatpush1.bf16.msra.mxu0 %v137
  %164 = vmatprep.subr.bf16.mxu0 0
  %165 = vmatpush1.bf16.msra.mxu0 %v136
  %166 = vmatprep.subr.bf16.mxu0 0
  %167 = vmatpush1.bf16.msra.mxu0 %v135
  %168 = vmatprep.subr.bf16.mxu0 0
  %169 = vmatpush1.bf16.msra.mxu0 %v134
  %170 = vmatprep.subr.bf16.mxu0 0
  %171 = vmatpush1.bf16.msra.mxu0 %v133
  %172 = vmatprep.subr.bf16.mxu0 0
  %173 = vmatpush1.bf16.msra.mxu0 %v132
  %174 = vmatprep.subr.bf16.mxu0 0
  %175 = vmatpush1.bf16.msra.mxu0 %v131
  %176 = vmatprep.subr.bf16.mxu0 0
  %177 = vmatpush1.bf16.msra.mxu0 %v130
  %178 = vmatprep.subr.bf16.mxu0 0
  %179 = vmatpush2.bf16.msra.mxu0 %v145
  %180 = vmatprep.subr.bf16.mxu0 0
  %181 = vmatpush2.bf16.msra.mxu0 %v144
  %182 = vmatprep.subr.bf16.mxu0 0
  %183 = vmatpush2.bf16.msra.mxu0 %v143
  %184 = vmatprep.subr.bf16.mxu0 0
  %185 = vmatpush2.bf16.msra.mxu0 %v142
  %186 = vmatprep.subr.bf16.mxu0 0
  %187 = vmatpush2.bf16.msra.mxu0 %v141
  %188 = vmatprep.subr.bf16.mxu0 0
  %189 = vmatpush2.bf16.msra.mxu0 %v140
  %190 = vmatprep.subr.bf16.mxu0 0
  %191 = vmatpush2.bf16.msra.mxu0 %v139
  %192 = vmatprep.subr.bf16.mxu0 0
  %193 = vmatpush2.bf16.msra.mxu0 %v138
  %194 = vmatprep.mubr.bf16.mxu0 %v63
  %195 = vmatmul.mubr.bf16.gmra.mxu0 %v62
  %v196 = vpop.f32.mrf.mxu0
  %v197 = vadd.f32 %v54, %v196
  %v198 = vpop.f32.mrf.mxu0
  %v199 = vpop.f32.mrf.mxu0
  %v200 = vadd.f32 %v54, %v199
  %v201 = vpop.f32.mrf.mxu0
  %202 = vdwg.mxu0
  %v203 = vmax.f32 %v197, 0.0
  %v204 = vmax.f32 %v200, 0.0
  %v205 = vpack.c.bf16 %v204, %v203
  %v207 = vunpack.c.l.b16 %v205
  %v208 = vunpack.c.h.b16 %v205
  %v209 = vpack.c.b16 %v207, %v207
  %v210 = vpack.c.b16 %v208, %v208
  %213 = vst [vmem:[%s3] sm:$0xf] %v209
  %214 = vst [vmem:[%s3 + $0x4] sm:$0xf] %v210
  // Predicated region
  $region14: #{vgg_forward.11} parent=0 // pred_check
    _
  $region15: #{vgg_forward.11} parent=0 // pred_check_branch
    %216 = sbr.rel (0) target = $region17
  $region16: #{vgg_forward.11} parent=0 // pred_region
    _
  $region17: #{vgg_forward.11} parent=0 // pred_fallthru
    _
  // Predicated region
  $region18: #{vgg_forward.11} parent=0 // pred_check
    _
  $region19: #{vgg_forward.11} parent=0 // pred_check_branch
    %218 = sbr.rel (0) target = $region21
  $region20: #{vgg_forward.11} parent=0 // pred_region
    _
  $region21: #{vgg_forward.11} parent=0 // pred_fallthru
    _

// kernel: vgg_forward.7
$region0: #{vgg_forward.7}
  #allocation0 [shape = 'u32[]', space=smem, size = 0x4, offset = 0x4, fixed_abs, tag = 'smem constant byte address 0x4 - core index']
  #allocation1 [shape = 'u32[144,128]{1,0:T(1,128)}', space=vmem, size = 0x12000, scoped, tag = 'internal scratch']
  #allocation2 [shape = 'bf16[10,18,3]{2,1,0:T(8,128)(2,1)}', space=vmem, size = 0xf000, scoped, tag = 'scratch operand']
  #allocation3 [shape = 'bf16[128,9]{1,0:T(8,128)(2,1)}', space=vmem, size = 0x8000, scoped, tag = 'scratch operand']
  %s0 = inlined_call_operand.vmem [shape: bf16[2,18,18,3], index: 0, kind: input, shape index: {}, may-alias: {0,1}]
  %s1 = inlined_call_operand.vmem [shape: bf16[2,18,18,3], index: 1, kind: input, shape index: {}, may-alias: {0,1}]
  %s2 = inlined_call_operand.vmem [shape: bf16[3,9,8], index: 2, kind: input, shape index: {}]
  %s3 = inlined_call_operand.vmem [shape: f32[1,8], index: 3, kind: input, shape index: {}]
  %s4 = inlined_call_operand.vmem [shape: bf16[2,8,16,8], index: 4, kind: output, shape index: {}]
  %s5 = sld [smem:[#allocation0]]
  $region49: #{vgg_forward.7} parent=0
    _
  %s7 = ssub.s32 1, %s5
  %s8 = scalar_select 0, %s7, %s5
  loop: start=0, step=1, limit=6
  $region2: #{vgg_forward.7} parent=0 // loop_pre_header
    _
  $region3: #{vgg_forward.7} parent=0 // loop_header
    %s10 = sphi 0, %s14
    %p11 = scmp.ge.s32.totalorder %s10, 6
    %s17 = sphi 0, %s29
    %s18 = sphi 0, %s25
    %s19 = sphi 0, %s17
    %s20 = sphi 0, %s18
    %s21 = sphi 0, %s19
    %s22 = sphi 0, %s20
    %s34 = sphi 0, %s36
    %s37 = sphi 0, %s34
    %s38 = sphi 0, %s37
    %s54 = sphi 0, %s38
    %s66 = sphi 0, %s68
    %s69 = sphi 0, %s66
    %s70 = sphi 0, %s69
    %s86 = sphi 0, %s70
    %s90 = sphi 0, %s90
    %s92 = sphi 0, %s90
    %s93 = sphi 0, %s92
    %s107 = sphi 0, %s93
    %s111 = sphi 0, %s111
    %s113 = sphi 0, %s111
    %s114 = sphi 0, %s113
    %s128 = sphi 0, %s114
    %s136 = sphi 0, %s138
    %s139 = sphi 0, %s136
    %s140 = sphi 0, %s139
    %s156 = sphi 0, %s140
  $region4: #{vgg_forward.7} parent=0 // loop_header_branch
    %13 = sbr.rel (%p11) target = $region8
  $region5: #{vgg_forward.7} parent=0 // loop_body
    %s15 = ssub.s32 %s10, 1
    %s16 = ssub.s32 %s10, 2
    %s23 = sadd.s32 1, %s18
    %p24 = scmp.ge.s32.totalorder %s23, 2
    %s25 = scalar_select %p24, 0, %s23
    %s26 = sadd.s32 1, %s17
    %s27 = scalar_select %p24, %s26, %s17
    %p28 = scmp.ge.s32.totalorder %s27, 2
    %s29 = scalar_select %p28, 0, %s27
    %s30 = ssub.s32 %s17, %s29
    %s31 = ssub.s32 %s18, %s25
    %s32 = sor.u32 %s30, %s31
    %p33 = scmp.eq.s32.totalorder %s32, 0
    %s35 = sadd.s32 %s34, 1
    %s36 = scalar_select %p33, %s34, %s35
    %p39 = pneg %p33
    %p40 = scmp.eq.s32.totalorder %s10, 3
    %p41 = por %p39, %p40
    %p42 = scmp.ne.s32.totalorder %s34, %s37
    %p43 = scmp.eq.s32.totalorder %s10, 0
    %p44 = por %p42, %p43
    %p45 = scmp.ne.s32.totalorder %s34, %s37
    %p46 = scmp.eq.s32.totalorder %s15, 3
    %p47 = por %p45, %p46
    %p48 = scmp.ne.s32.totalorder %s37, %s38
    %p49 = scmp.eq.s32.totalorder %s15, 0
    %p50 = por %p48, %p49
    %p51 = scmp.ne.s32.totalorder %s37, %s38
    %p52 = scmp.eq.s32.totalorder %s16, 3
    %p53 = por %p51, %p52
    %p55 = scmp.ne.s32.totalorder %s38, %s54
    %p56 = scmp.eq.s32.totalorder %s16, 0
    %p57 = por %p55, %p56
    %s58 = sadd.s32 %s18, 1
    %s59 = smul.u32 %s58, 4
    %s60 = sadd.s32 %s25, 1
    %s61 = smul.u32 %s60, 4
    %s62 = ssub.s32 %s17, %s29
    %s63 = ssub.s32 %s59, %s61
    %s64 = sor.u32 %s62, %s63
    %p65 = scmp.eq.s32.totalorder %s64, 0
    %s67 = sadd.s32 %s66, 1
    %s68 = scalar_select %p65, %s66, %s67
    %p71 = pneg %p65
    %p72 = scmp.eq.s32.totalorder %s10, 3
    %p73 = por %p71, %p72
    %p74 = scmp.ne.s32.totalorder %s66, %s69
    %p75 = scmp.eq.s32.totalorder %s10, 0
    %p76 = por %p74, %p75
    %p77 = scmp.ne.s32.totalorder %s66, %s69
    %p78 = scmp.eq.s32.totalorder %s15, 3
    %p79 = por %p77, %p78
    %p80 = scmp.ne.s32.totalorder %s69, %s70
    %p81 = scmp.eq.s32.totalorder %s15, 0
    %p82 = por %p80, %p81
    %p83 = scmp.ne.s32.totalorder %s69, %s70
    %p84 = scmp.eq.s32.totalorder %s16, 3
    %p85 = por %p83, %p84
    %p87 = scmp.ne.s32.totalorder %s70, %s86
    %p88 = scmp.eq.s32.totalorder %s16, 0
    %p89 = por %p87, %p88
    %s91 = sadd.s32 %s90, 1
    %p94 = scmp.eq.s32.totalorder %s10, 3
    %p95 = scmp.ne.s32.totalorder %s90, %s92
    %p96 = scmp.eq.s32.totalorder %s10, 0
    %p97 = por %p95, %p96
    %p98 = scmp.ne.s32.totalorder %s90, %s92
    %p99 = scmp.eq.s32.totalorder %s15, 3
    %p100 = por %p98, %p99
    %p101 = scmp.ne.s32.totalorder %s92, %s93
    %p102 = scmp.eq.s32.totalorder %s15, 0
    %p103 = por %p101, %p102
    %p104 = scmp.ne.s32.totalorder %s92, %s93
    %p105 = scmp.eq.s32.totalorder %s16, 3
    %p106 = por %p104, %p105
    %p108 = scmp.ne.s32.totalorder %s93, %s107
    %p109 = scmp.eq.s32.totalorder %s16, 0
    %p110 = por %p108, %p109
    %s112 = sadd.s32 %s111, 1
    %p115 = scmp.eq.s32.totalorder %s10, 3
    %p116 = scmp.ne.s32.totalorder %s111, %s113
    %p117 = scmp.eq.s32.totalorder %s10, 0
    %p118 = por %p116, %p117
    %p119 = scmp.ne.s32.totalorder %s111, %s113
    %p120 = scmp.eq.s32.totalorder %s15, 3
    %p121 = por %p119, %p120
    %p122 = scmp.ne.s32.totalorder %s113, %s114
    %p123 = scmp.eq.s32.totalorder %s15, 0
    %p124 = por %p122, %p123
    %p125 = scmp.ne.s32.totalorder %s113, %s114
    %p126 = scmp.eq.s32.totalorder %s16, 3
    %p127 = por %p125, %p126
    %p129 = scmp.ne.s32.totalorder %s114, %s128
    %p130 = scmp.eq.s32.totalorder %s16, 0
    %p131 = por %p129, %p130
    %s132 = ssub.s32 %s17, %s29
    %s133 = ssub.s32 %s18, %s25
    %s134 = sor.u32 %s132, %s133
    %p135 = scmp.eq.s32.totalorder %s134, 0
    %s137 = sadd.s32 %s136, 1
    %s138 = scalar_select %p135, %s136, %s137
    %p141 = pneg %p135
    %p142 = scmp.eq.s32.totalorder %s10, 3
    %p143 = por %p141, %p142
    %p144 = scmp.ne.s32.totalorder %s136, %s139
    %p145 = scmp.eq.s32.totalorder %s10, 0
    %p146 = por %p144, %p145
    %p147 = scmp.ne.s32.totalorder %s136, %s139
    %p148 = scmp.eq.s32.totalorder %s15, 3
    %p149 = por %p147, %p148
    %p150 = scmp.ne.s32.totalorder %s139, %s140
    %p151 = scmp.eq.s32.totalorder %s15, 0
    %p152 = por %p150, %p151
    %p153 = scmp.ne.s32.totalorder %s139, %s140
    %p154 = scmp.eq.s32.totalorder %s16, 3
    %p155 = por %p153, %p154
    %p157 = scmp.ne.s32.totalorder %s140, %s156
    %p158 = scmp.eq.s32.totalorder %s16, 0
    %p159 = por %p157, %p158
    %p160 = scmp.le.s32.totalorder 1, %s10
    %p161 = scmp.lt.s32.totalorder %s10, 5
    %p162 = pnand %p160, %p161
    %p163 = pneg %p162
    // Predicated region
    $region9: #{vgg_forward.7} parent=5 // pred_check
      _
    $region10: #{vgg_forward.7} parent=5 // pred_check_branch
      %165 = sbr.rel (%p162) target = $region12
    $region11: #{vgg_forward.7} parent=5 // pred_region
      %s166 = ssub.s32 %s10, 1
      // Predicated region
      $region13: #{vgg_forward.7} parent=11 // pred_check
        %p167 = pneg %p103
      $region14: #{vgg_forward.7} parent=11 // pred_check_branch
        %169 = sbr.rel (%p167) target = $region16
      $region15: #{vgg_forward.7} parent=11 // pred_region
        _
      $region16: #{vgg_forward.7} parent=11 // pred_fallthru
        _
      // Predicated region
      $region17: #{vgg_forward.7} parent=11 // pred_check
        %p170 = pneg %p124
      $region18: #{vgg_forward.7} parent=11 // pred_check_branch
        %172 = sbr.rel (%p170) target = $region20
      $region19: #{vgg_forward.7} parent=11 // pred_region
        _
      $region20: #{vgg_forward.7} parent=11 // pred_fallthru
        _
    $region12: #{vgg_forward.7} parent=5 // pred_fallthru
      _
    %p173 = scmp.lt.s32.totalorder %s10, 4
    // Predicated region
    $region21: #{vgg_forward.7} parent=5 // pred_check
      %p174 = pneg %p173
    $region22: #{vgg_forward.7} parent=5 // pred_check_branch
      %176 = sbr.rel (%p174) target = $region24
    $region23: #{vgg_forward.7} parent=5 // pred_region
      // Predicated region
      $region25: #{vgg_forward.7} parent=23 // pred_check
        %p177 = pneg %p44
      $region26: #{vgg_forward.7} parent=23 // pred_check_branch
        %179 = sbr.rel (%p177) target = $region28
      $region27: #{vgg_forward.7} parent=23 // pred_region
        %s180 = smul.u32 8, %s18
        %s181 = ssub.s32 18, %s180
        %p182 = scmp.lt.s32.totalorder %s181, 8
        %s183 = scalar_select %p182, %s181, 8
        %s184 = smul.u32 64, %s183
        %s185 = smul.u32 %s184, 3
        %p186 = scmp.lt.s32.totalorder %s17, 1
        %s187 = scalar_select %p186, %s17, 1
        %p188 = scmp.lt.s32.totalorder %s180, 17
        %s189 = scalar_select %p188, %s180, 17
        %s190 = smul.addr %s189, 3
        %s191 = smul.addr %s187, 54
        %s192 = sadd.s32 %s190, %s191
        %s193 = smul.addr %s192, 4
        %s194 = scalar_lea.vmem %s0, %s193
        %s195 = smul.u32 8, %s18
        %s196 = ssub.s32 18, %s195
        %p197 = scmp.lt.s32.totalorder %s196, 8
        %s198 = scalar_select %p197, %s196, 8
        %s199 = smul.u32 64, %s198
        %s200 = smul.u32 %s199, 3
      $region28: #{vgg_forward.7} parent=23 // pred_fallthru
        _
      // Predicated region
      $region29: #{vgg_forward.7} parent=23 // pred_check
        %p201 = pneg %p76
      $region30: #{vgg_forward.7} parent=23 // pred_check_branch
        %203 = sbr.rel (%p201) target = $region32
      $region31: #{vgg_forward.7} parent=23 // pred_region
        %s204 = sadd.s32 %s18, 1
        %s205 = smul.u32 %s204, 4
        %s206 = smul.u32 2, %s205
        %p207 = scmp.lt.s32.totalorder %s17, 1
        %s208 = scalar_select %p207, %s17, 1
        %p209 = scmp.lt.s32.totalorder %s206, 17
        %s210 = scalar_select %p209, %s206, 17
        %s211 = smul.addr %s210, 3
        %s212 = smul.addr %s208, 54
        %s213 = sadd.s32 %s211, %s212
        %s214 = smul.addr %s213, 4
        %s215 = scalar_lea.vmem %s1, %s214
        %s216 = sadd.s32 %s18, 1
        %s217 = smul.u32 %s216, 4
        %s218 = smul.u32 2, %s217
      $region32: #{vgg_forward.7} parent=23 // pred_fallthru
        _
    $region24: #{vgg_forward.7} parent=5 // pred_fallthru
      _
    %p219 = scmp.le.s32.totalorder 1, %s10
    %p220 = scmp.lt.s32.totalorder %s10, 5
    %p221 = pnand %p219, %p220
    %p222 = pneg %p221
    // Predicated region
    $region33: #{vgg_forward.7} parent=5 // pred_check
      _
    $region34: #{vgg_forward.7} parent=5 // pred_check_branch
      %224 = sbr.rel (%p221) target = $region36
    $region35: #{vgg_forward.7} parent=5 // pred_region
      %s225 = ssub.s32 %s10, 1
      %s226 = smul.u32 8, %s20
      %s227 = ssub.s32 18, %s226
      %p228 = scmp.lt.s32.totalorder %s227, 8
      %s229 = scalar_select %p228, %s227, 8
      %s230 = smul.u32 64, %s229
      %s231 = smul.u32 %s230, 3
      %p232 = scmp.lt.s32.totalorder %s19, 1
      %s233 = scalar_select %p232, %s19, 1
      %p234 = scmp.lt.s32.totalorder %s226, 17
      %s235 = scalar_select %p234, %s226, 17
      %s236 = smul.addr %s235, 3
      %s237 = smul.addr %s233, 54
      %s238 = sadd.s32 %s236, %s237
      %s239 = smul.addr %s238, 4
      %s240 = scalar_lea.vmem %s0, %s239
      %p241 = pneg %p50
      %p242 = pneg %p47
      %s243 = sadd.s32 %s20, 1
      %s244 = smul.u32 %s243, 4
      %s245 = smul.u32 2, %s244
      %p246 = scmp.lt.s32.totalorder %s19, 1
      %s247 = scalar_select %p246, %s19, 1
      %p248 = scmp.lt.s32.totalorder %s245, 17
      %s249 = scalar_select %p248, %s245, 17
      %s250 = smul.addr %s249, 3
      %s251 = smul.addr %s247, 54
      %s252 = sadd.s32 %s250, %s251
      %s253 = smul.addr %s252, 4
      %s254 = scalar_lea.vmem %s1, %s253
      %p255 = pneg %p82
      %p256 = pneg %p79
      %p257 = pneg %p103
      %p258 = pneg %p100
      %p259 = pneg %p124
      %p260 = pneg %p121
      %p261 = pneg %p152
      %p262 = pneg %p149
      %s263 = smul.u32 4, %s20
      %p264 = scmp.lt.s32.totalorder %s19, 1
      %s265 = scalar_select %p264, %s19, 1
      %p266 = scmp.lt.s32.totalorder %s263, 7
      %s267 = scalar_select %p266, %s263, 7
      %s268 = smul.addr %s267, 2
      %s269 = smul.addr %s265, 16
      %s270 = sadd.s32 %s268, %s269
      %s271 = smul.addr %s270, 4
      %s272 = scalar_lea.vmem %s4, %s271
      %s273 = smul.u32 8, %s20
      %s274 = ssub.s32 18, %s273
      %p275 = scmp.lt.s32.totalorder %s274, 8
      %s276 = scalar_select %p275, %s274, 8
      %s277 = smul.u32 64, %s276
      %s278 = smul.u32 %s277, 3
      %p279 = scmp.lt.s32.totalorder %s19, 1
      %s280 = scalar_select %p279, %s19, 1
      %p281 = scmp.lt.s32.totalorder %s273, 17
      %s282 = scalar_select %p281, %s273, 17
      %s283 = smul.addr %s282, 3
      %s284 = smul.addr %s280, 54
      %s285 = sadd.s32 %s283, %s284
      %s286 = smul.addr %s285, 4
      %s287 = scalar_lea.vmem %s0, %s286
      %s288 = smul.u32 8, %s20
      %s289 = ssub.s32 18, %s288
      %p290 = scmp.lt.s32.totalorder %s289, 8
      %s291 = scalar_select %p290, %s289, 8
      %s292 = smul.u32 64, %s291
      %s293 = smul.u32 %s292, 3
      %s294 = sadd.s32 %s20, 1
      %s295 = smul.u32 %s294, 4
      %s296 = smul.u32 2, %s295
      %p297 = scmp.lt.s32.totalorder %s19, 1
      %s298 = scalar_select %p297, %s19, 1
      %p299 = scmp.lt.s32.totalorder %s296, 17
      %s300 = scalar_select %p299, %s296, 17
      %s301 = smul.addr %s300, 3
      %s302 = smul.addr %s298, 54
      %s303 = sadd.s32 %s301, %s302
      %s304 = smul.addr %s303, 4
      %s305 = scalar_lea.vmem %s1, %s304
      %s306 = sadd.s32 %s20, 1
      %s307 = smul.u32 %s306, 4
      %s308 = smul.u32 2, %s307
      %s309 = smul.u32 4, %s20
      %p310 = scmp.lt.s32.totalorder %s19, 1
      %s311 = scalar_select %p310, %s19, 1
      %p312 = scmp.lt.s32.totalorder %s309, 7
      %s313 = scalar_select %p312, %s309, 7
      %s314 = smul.addr %s313, 2
      %s315 = smul.addr %s311, 16
      %s316 = sadd.s32 %s314, %s315
      %s317 = smul.addr %s316, 4
      %s318 = scalar_lea.vmem %s4, %s317
      %s319 = smul.u32 4, %s20
      %v321 = vld [vmem:[%s287] sm:$0xf]
      %v322 = vld [vmem:[%s287 + $0x4] sm:$0xf]
      %v323 = vld [vmem:[%s287 + $0x8] sm:$0x1]
      %v324 = vld [vmem:[%s287 + $0xc] sm:$0xf]
      %v325 = vld [vmem:[%s287 + $0x10] sm:$0xf]
      %v326 = vld [vmem:[%s287 + $0x14] sm:$0x1]
      %v327 = vld [vmem:[%s287 + $0x18] sm:$0xf]
      %v328 = vld [vmem:[%s287 + $0x1c] sm:$0xf]
      %v329 = vld [vmem:[%s287 + $0x20] sm:$0x1]
      %v330 = vld [vmem:[%s287 + $0x24] sm:$0xf]
      %v331 = vld [vmem:[%s287 + $0x28] sm:$0xf]
      %v332 = vld [vmem:[%s287 + $0x2c] sm:$0x1]
      %v333 = vld [vmem:[%s287 + $0x30] sm:$0xf]
      %v334 = vld [vmem:[%s287 + $0x34] sm:$0xf]
      %v335 = vld [vmem:[%s287 + $0x38] sm:$0x1]
      %v336 = vld [vmem:[%s287 + $0x3c] sm:$0xf]
      %v337 = vld [vmem:[%s287 + $0x40] sm:$0xf]
      %v338 = vld [vmem:[%s287 + $0x44] sm:$0x1]
      %v339 = vld [vmem:[%s287 + $0x48] sm:$0xf]
      %v340 = vld [vmem:[%s287 + $0x4c] sm:$0xf]
      %v341 = vld [vmem:[%s287 + $0x50] sm:$0x1]
      %v342 = vld [vmem:[%s287 + $0x54] sm:$0xf]
      %v343 = vld [vmem:[%s287 + $0x58] sm:$0xf]
      %v344 = vld [vmem:[%s287 + $0x5c] sm:$0x1]
      %vm345 = vcmask 19456
      %346 = vst.msk [vmem:[#allocation2] sm:$0xf] %vm345, %v321
      %347 = vst.msk [vmem:[#allocation2 + $0x4] sm:$0xf] %vm345, %v322
      %vm348 = vcmask 16384
      %349 = vst.msk [vmem:[#allocation2 + $0x8] sm:$0x1] %vm348, %v323
      %350 = vst.msk [vmem:[#allocation2 + $0xc] sm:$0xf] %vm345, %v324
      %351 = vst.msk [vmem:[#allocation2 + $0x10] sm:$0xf] %vm345, %v325
      %352 = vst.msk [vmem:[#allocation2 + $0x14] sm:$0x1] %vm348, %v326
      %353 = vst.msk [vmem:[#allocation2 + $0x18] sm:$0xf] %vm345, %v327
      %354 = vst.msk [vmem:[#allocation2 + $0x1c] sm:$0xf] %vm345, %v328
      %355 = vst.msk [vmem:[#allocation2 + $0x20] sm:$0x1] %vm348, %v329
      %356 = vst.msk [vmem:[#allocation2 + $0x24] sm:$0xf] %vm345, %v330
      %357 = vst.msk [vmem:[#allocation2 + $0x28] sm:$0xf] %vm345, %v331
      %358 = vst.msk [vmem:[#allocation2 + $0x2c] sm:$0x1] %vm348, %v332
      %359 = vst.msk [vmem:[#allocation2 + $0x30] sm:$0xf] %vm345, %v333
      %360 = vst.msk [vmem:[#allocation2 + $0x34] sm:$0xf] %vm345, %v334
      %361 = vst.msk [vmem:[#allocation2 + $0x38] sm:$0x1] %vm348, %v335
      %362 = vst.msk [vmem:[#allocation2 + $0x3c] sm:$0xf] %vm345, %v336
      %363 = vst.msk [vmem:[#allocation2 + $0x40] sm:$0xf] %vm345, %v337
      %364 = vst.msk [vmem:[#allocation2 + $0x44] sm:$0x1] %vm348, %v338
      %365 = vst.msk [vmem:[#allocation2 + $0x48] sm:$0xf] %vm345, %v339
      %366 = vst.msk [vmem:[#allocation2 + $0x4c] sm:$0xf] %vm345, %v340
      %367 = vst.msk [vmem:[#allocation2 + $0x50] sm:$0x1] %vm348, %v341
      %368 = vst.msk [vmem:[#allocation2 + $0x54] sm:$0xf] %vm345, %v342
      %369 = vst.msk [vmem:[#allocation2 + $0x58] sm:$0xf] %vm345, %v343
      %370 = vst.msk [vmem:[#allocation2 + $0x5c] sm:$0x1] %vm348, %v344
      %v371 = vld [vmem:[%s305] sm:$0xf]
      %v372 = vld [vmem:[%s305 + $0x4] sm:$0xf]
      %v373 = vld [vmem:[%s305 + $0x8] sm:$0x1]
      %v374 = vld [vmem:[%s305 + $0xc] sm:$0xf]
      %v375 = vld [vmem:[%s305 + $0x10] sm:$0xf]
      %v376 = vld [vmem:[%s305 + $0x14] sm:$0x1]
      %s377 = scalar_lea.vmem [#allocation2], 96
      %378 = vst.msk [vmem:[%s377] sm:$0xf] %vm345, %v371
      %379 = vst.msk [vmem:[%s377 + $0x4] sm:$0xf] %vm345, %v372
      %380 = vst.msk [vmem:[%s377 + $0x8] sm:$0x1] %vm348, %v373
      %381 = vst.msk [vmem:[%s377 + $0xc] sm:$0xf] %vm345, %v374
      %382 = vst.msk [vmem:[%s377 + $0x10] sm:$0xf] %vm345, %v375
      %383 = vst.msk [vmem:[%s377 + $0x14] sm:$0x1] %vm348, %v376
      %v384 = vld [vmem:[#allocation2] sm:$0xf]
      %v385 = vld [vmem:[#allocation2 + $0x4] sm:$0xf]
      %v386 = vld [vmem:[#allocation2 + $0x8] sm:$0x1]
      %v387 = vld [vmem:[#allocation2 + $0xc] sm:$0xf]
      %v388 = vld [vmem:[#allocation2 + $0x10] sm:$0xf]
      %v389 = vld [vmem:[#allocation2 + $0x14] sm:$0x1]
      %v390 = vld [vmem:[#allocation2 + $0x18] sm:$0xf]
      %v391 = vld [vmem:[#allocation2 + $0x1c] sm:$0xf]
      %v392 = vld [vmem:[#allocation2 + $0x20] sm:$0x1]
      %v393 = vld [vmem:[#allocation2 + $0x24] sm:$0xf]
      %v394 = vld [vmem:[#allocation2 + $0x28] sm:$0xf]
      %v395 = vld [vmem:[#allocation2 + $0x2c] sm:$0x1]
      %v396 = vld [vmem:[#allocation2 + $0x30] sm:$0xf]
      %v397 = vld [vmem:[#allocation2 + $0x34] sm:$0xf]
      %v398 = vld [vmem:[#allocation2 + $0x38] sm:$0x1]
      %v399 = vld [vmem:[#allocation2 + $0x3c] sm:$0xf]
      %v400 = vld [vmem:[#allocation2 + $0x40] sm:$0xf]
      %v401 = vld [vmem:[#allocation2 + $0x44] sm:$0x1]
      %v402 = vld [vmem:[#allocation2 + $0x48] sm:$0xf]
      %v403 = vld [vmem:[#allocation2 + $0x4c] sm:$0xf]
      %v404 = vld [vmem:[#allocation2 + $0x50] sm:$0x1]
      %v405 = vld [vmem:[#allocation2 + $0x54] sm:$0xf]
      %v406 = vld [vmem:[#allocation2 + $0x58] sm:$0xf]
      %v407 = vld [vmem:[#allocation2 + $0x5c] sm:$0x1]
      %408 = vst.msk [vmem:[#allocation3] sm:$0xf] %vm345, %v384
      %409 = vst.msk [vmem:[#allocation3 + $0x4] sm:$0xf] %vm345, %v385
      %410 = vst.msk [vmem:[#allocation3 + $0x8] sm:$0xf] %vm345, %v387
      %411 = vst.msk [vmem:[#allocation3 + $0xc] sm:$0xf] %vm345, %v388
      %412 = vst.msk [vmem:[#allocation3 + $0x10] sm:$0xf] %vm345, %v390
      %413 = vst.msk [vmem:[#allocation3 + $0x14] sm:$0xf] %vm345, %v391
      %414 = vst.msk [vmem:[#allocation3 + $0x18] sm:$0xf] %vm345, %v393
      %415 = vst.msk [vmem:[#allocation3 + $0x1c] sm:$0xf] %vm345, %v394
      %416 = vst.msk [vmem:[#allocation3 + $0x20] sm:$0xf] %vm345, %v396
      %417 = vst.msk [vmem:[#allocation3 + $0x24] sm:$0xf] %vm345, %v397
      %418 = vst.msk [vmem:[#allocation3 + $0x28] sm:$0xf] %vm345, %v399
      %419 = vst.msk [vmem:[#allocation3 + $0x2c] sm:$0xf] %vm345, %v400
      %420 = vst.msk [vmem:[#allocation3 + $0x30] sm:$0xf] %vm345, %v402
      %421 = vst.msk [vmem:[#allocation3 + $0x34] sm:$0xf] %vm345, %v403
      %422 = vst.msk [vmem:[#allocation3 + $0x38] sm:$0xf] %vm345, %v405
      %423 = vst.msk [vmem:[#allocation3 + $0x3c] sm:$0xf] %vm345, %v406
      %vm424 = vsmask.f32 3328
      %vm425 = vsmask.f32 7440
      %vm426 = vmor %vm424, %vm425
      %v428 = vshrl.u32 %v384, 16
      %v430 = vrot.slane %v428, 4
      %v431 = vshll.u32 %v384, 16
      %v433 = vrot.slane %v431, 5
      %v434 = vor.u32 %v430, %v433
      %v435 = vrot.slane %v434, 4
      %v437 = vshll.u32 %v385, 16
      %v439 = vrot.slane %v437, 5
      %v440 = vsel %vm426, %v435, %v439
      %v441 = vshrl.u32 %v385, 16
      %v443 = vrot.slane %v441, 4
      %v444 = vor.u32 %v443, %v439
      %v445 = vrot.slane %v444, 4
      %v447 = vshll.u32 %v386, 16
      %v449 = vrot.slane %v447, 5
      %v450 = vsel %vm426, %v445, %v449
      %v452 = vshrl.u32 %v387, 16
      %v454 = vrot.slane %v452, 4
      %v455 = vshll.u32 %v387, 16
      %v457 = vrot.slane %v455, 5
      %v458 = vor.u32 %v454, %v457
      %v459 = vrot.slane %v458, 4
      %v461 = vshll.u32 %v388, 16
      %v463 = vrot.slane %v461, 5
      %v464 = vsel %vm426, %v459, %v463
      %v465 = vshrl.u32 %v388, 16
      %v467 = vrot.slane %v465, 4
      %v468 = vor.u32 %v467, %v463
      %v469 = vrot.slane %v468, 4
      %v471 = vshll.u32 %v389, 16
      %v473 = vrot.slane %v471, 5
      %v474 = vsel %vm426, %v469, %v473
      %v476 = vshrl.u32 %v390, 16
      %v478 = vrot.slane %v476, 4
      %v479 = vshll.u32 %v390, 16
      %v481 = vrot.slane %v479, 5
      %v482 = vor.u32 %v478, %v481
      %v483 = vrot.slane %v482, 4
      %v485 = vshll.u32 %v391, 16
      %v487 = vrot.slane %v485, 5
      %v488 = vsel %vm426, %v483, %v487
      %v489 = vshrl.u32 %v391, 16
      %v491 = vrot.slane %v489, 4
      %v492 = vor.u32 %v491, %v487
      %v493 = vrot.slane %v492, 4
      %v495 = vshll.u32 %v392, 16
      %v497 = vrot.slane %v495, 5
      %v498 = vsel %vm426, %v493, %v497
      %v500 = vshrl.u32 %v393, 16
      %v502 = vrot.slane %v500, 4
      %v503 = vshll.u32 %v393, 16
      %v505 = vrot.slane %v503, 5
      %v506 = vor.u32 %v502, %v505
      %v507 = vrot.slane %v506, 4
      %v509 = vshll.u32 %v394, 16
      %v511 = vrot.slane %v509, 5
      %v512 = vsel %vm426, %v507, %v511
      %v513 = vshrl.u32 %v394, 16
      %v515 = vrot.slane %v513, 4
      %v516 = vor.u32 %v515, %v511
      %v517 = vrot.slane %v516, 4
      %v519 = vshll.u32 %v395, 16
      %v521 = vrot.slane %v519, 5
      %v522 = vsel %vm426, %v517, %v521
      %v524 = vshrl.u32 %v396, 16
      %v526 = vrot.slane %v524, 4
      %v527 = vshll.u32 %v396, 16
      %v529 = vrot.slane %v527, 5
      %v530 = vor.u32 %v526, %v529
      %v531 = vrot.slane %v530, 4
      %v533 = vshll.u32 %v397, 16
      %v535 = vrot.slane %v533, 5
      %v536 = vsel %vm426, %v531, %v535
      %v537 = vshrl.u32 %v397, 16
      %v539 = vrot.slane %v537, 4
      %v540 = vor.u32 %v539, %v535
      %v541 = vrot.slane %v540, 4
      %v543 = vshll.u32 %v398, 16
      %v545 = vrot.slane %v543, 5
      %v546 = vsel %vm426, %v541, %v545
      %v548 = vshrl.u32 %v399, 16
      %v550 = vrot.slane %v548, 4
      %v551 = vshll.u32 %v399, 16
      %v553 = vrot.slane %v551, 5
      %v554 = vor.u32 %v550, %v553
      %v555 = vrot.slane %v554, 4
      %v557 = vshll.u32 %v400, 16
      %v559 = vrot.slane %v557, 5
      %v560 = vsel %vm426, %v555, %v559
      %v561 = vshrl.u32 %v400, 16
      %v563 = vrot.slane %v561, 4
      %v564 = vor.u32 %v563, %v559
      %v565 = vrot.slane %v564, 4
      %v567 = vshll.u32 %v401, 16
      %v569 = vrot.slane %v567, 5
      %v570 = vsel %vm426, %v565, %v569
      %v572 = vshrl.u32 %v402, 16
      %v574 = vrot.slane %v572, 4
      %v575 = vshll.u32 %v402, 16
      %v577 = vrot.slane %v575, 5
      %v578 = vor.u32 %v574, %v577
      %v579 = vrot.slane %v578, 4
      %v581 = vshll.u32 %v403, 16
      %v583 = vrot.slane %v581, 5
      %v584 = vsel %vm426, %v579, %v583
      %v585 = vshrl.u32 %v403, 16
      %v587 = vrot.slane %v585, 4
      %v588 = vor.u32 %v587, %v583
      %v589 = vrot.slane %v588, 4
      %v591 = vshll.u32 %v404, 16
      %v593 = vrot.slane %v591, 5
      %v594 = vsel %vm426, %v589, %v593
      %v596 = vshrl.u32 %v405, 16
      %v598 = vrot.slane %v596, 4
      %v599 = vshll.u32 %v405, 16
      %v601 = vrot.slane %v599, 5
      %v602 = vor.u32 %v598, %v601
      %v603 = vrot.slane %v602, 4
      %v605 = vshll.u32 %v406, 16
      %v607 = vrot.slane %v605, 5
      %v608 = vsel %vm426, %v603, %v607
      %v609 = vshrl.u32 %v406, 16
      %v611 = vrot.slane %v609, 4
      %v612 = vor.u32 %v611, %v607
      %v613 = vrot.slane %v612, 4
      %v615 = vshll.u32 %v407, 16
      %v617 = vrot.slane %v615, 5
      %v618 = vsel %vm426, %v613, %v617
      %619 = vrot.lane.b32.xlu0 %v440, 3
      %v620 = vpop.permute.xlu0 %619
      %621 = vrot.lane.b32.xlu0 %v450, 3
      %v622 = vpop.permute.xlu0 %621
      %623 = vrot.lane.b32.xlu0 %v464, 3
      %v624 = vpop.permute.xlu0 %623
      %625 = vrot.lane.b32.xlu0 %v474, 3
      %v626 = vpop.permute.xlu0 %625
      %627 = vrot.lane.b32.xlu0 %v488, 3
      %v628 = vpop.permute.xlu0 %627
      %629 = vrot.lane.b32.xlu0 %v498, 3
      %v630 = vpop.permute.xlu0 %629
      %631 = vrot.lane.b32.xlu0 %v512, 3
      %v632 = vpop.permute.xlu0 %631
      %633 = vrot.lane.b32.xlu0 %v522, 3
      %v634 = vpop.permute.xlu0 %633
      %635 = vrot.lane.b32.xlu0 %v536, 3
      %v636 = vpop.permute.xlu0 %635
      %637 = vrot.lane.b32.xlu0 %v546, 3
      %v638 = vpop.permute.xlu0 %637
      %639 = vrot.lane.b32.xlu0 %v560, 3
      %v640 = vpop.permute.xlu0 %639
      %641 = vrot.lane.b32.xlu0 %v570, 3
      %v642 = vpop.permute.xlu0 %641
      %643 = vrot.lane.b32.xlu0 %v584, 3
      %v644 = vpop.permute.xlu0 %643
      %645 = vrot.lane.b32.xlu0 %v594, 3
      %v646 = vpop.permute.xlu0 %645
      %647 = vrot.lane.b32.xlu0 %v608, 3
      %v648 = vpop.permute.xlu0 %647
      %649 = vrot.lane.b32.xlu0 %v618, 3
      %v650 = vpop.permute.xlu0 %649
      %vm667 = vcmask 44056
      %668 = vst.msk [vmem:[#allocation3] sm:$0xf] %vm667, %v620
      %669 = vst.msk [vmem:[#allocation3 + $0x4] sm:$0xf] %vm667, %v622
      %670 = vst.msk [vmem:[#allocation3 + $0x8] sm:$0xf] %vm667, %v624
      %671 = vst.msk [vmem:[#allocation3 + $0xc] sm:$0xf] %vm667, %v626
      %672 = vst.msk [vmem:[#allocation3 + $0x10] sm:$0xf] %vm667, %v628
      %673 = vst.msk [vmem:[#allocation3 + $0x14] sm:$0xf] %vm667, %v630
      %674 = vst.msk [vmem:[#allocation3 + $0x18] sm:$0xf] %vm667, %v632
      %675 = vst.msk [vmem:[#allocation3 + $0x1c] sm:$0xf] %vm667, %v634
      %676 = vst.msk [vmem:[#allocation3 + $0x20] sm:$0xf] %vm667, %v636
      %677 = vst.msk [vmem:[#allocation3 + $0x24] sm:$0xf] %vm667, %v638
      %678 = vst.msk [vmem:[#allocation3 + $0x28] sm:$0xf] %vm667, %v640
      %679 = vst.msk [vmem:[#allocation3 + $0x2c] sm:$0xf] %vm667, %v642
      %680 = vst.msk [vmem:[#allocation3 + $0x30] sm:$0xf] %vm667, %v644
      %681 = vst.msk [vmem:[#allocation3 + $0x34] sm:$0xf] %vm667, %v646
      %682 = vst.msk [vmem:[#allocation3 + $0x38] sm:$0xf] %vm667, %v648
      %683 = vst.msk [vmem:[#allocation3 + $0x3c] sm:$0xf] %vm667, %v650
      %vm708 = vcmask 1042432
      %vm709 = vcmask 1046532
      %vm710 = vmor %vm708, %vm709
      %v711 = vrot.slane %v384, 5
      %v712 = vrot.slane %v711, 4
      %v713 = vrot.slane %v385, 5
      %v714 = vsel %vm710, %v712, %v713
      %v715 = vrot.slane %v713, 4
      %v716 = vrot.slane %v386, 5
      %v717 = vsel %vm710, %v715, %v716
      %v718 = vrot.slane %v387, 5
      %v719 = vrot.slane %v718, 4
      %v720 = vrot.slane %v388, 5
      %v721 = vsel %vm710, %v719, %v720
      %v722 = vrot.slane %v720, 4
      %v723 = vrot.slane %v389, 5
      %v724 = vsel %vm710, %v722, %v723
      %v725 = vrot.slane %v390, 5
      %v726 = vrot.slane %v725, 4
      %v727 = vrot.slane %v391, 5
      %v728 = vsel %vm710, %v726, %v727
      %v729 = vrot.slane %v727, 4
      %v730 = vrot.slane %v392, 5
      %v731 = vsel %vm710, %v729, %v730
      %v732 = vrot.slane %v393, 5
      %v733 = vrot.slane %v732, 4
      %v734 = vrot.slane %v394, 5
      %v735 = vsel %vm710, %v733, %v734
      %v736 = vrot.slane %v734, 4
      %v737 = vrot.slane %v395, 5
      %v738 = vsel %vm710, %v736, %v737
      %v739 = vrot.slane %v396, 5
      %v740 = vrot.slane %v739, 4
      %v741 = vrot.slane %v397, 5
      %v742 = vsel %vm710, %v740, %v741
      %v743 = vrot.slane %v741, 4
      %v744 = vrot.slane %v398, 5
      %v745 = vsel %vm710, %v743, %v744
      %v746 = vrot.slane %v399, 5
      %v747 = vrot.slane %v746, 4
      %v748 = vrot.slane %v400, 5
      %v749 = vsel %vm710, %v747, %v748
      %v750 = vrot.slane %v748, 4
      %v751 = vrot.slane %v401, 5
      %v752 = vsel %vm710, %v750, %v751
      %v753 = vrot.slane %v402, 5
      %v754 = vrot.slane %v753, 4
      %v755 = vrot.slane %v403, 5
      %v756 = vsel %vm710, %v754, %v755
      %v757 = vrot.slane %v755, 4
      %v758 = vrot.slane %v404, 5
      %v759 = vsel %vm710, %v757, %v758
      %v760 = vrot.slane %v405, 5
      %v761 = vrot.slane %v760, 4
      %v762 = vrot.slane %v406, 5
      %v763 = vsel %vm710, %v761, %v762
      %v764 = vrot.slane %v762, 4
      %v765 = vrot.slane %v407, 5
      %v766 = vsel %vm710, %v764, %v765
      %767 = vrot.lane.b32.xlu0 %v714, 6
      %v768 = vpop.permute.xlu0 %767
      %769 = vrot.lane.b32.xlu0 %v717, 6
      %v770 = vpop.permute.xlu0 %769
      %771 = vrot.lane.b32.xlu0 %v721, 6
      %v772 = vpop.permute.xlu0 %771
      %773 = vrot.lane.b32.xlu0 %v724, 6
      %v774 = vpop.permute.xlu0 %773
      %775 = vrot.lane.b32.xlu0 %v728, 6
      %v776 = vpop.permute.xlu0 %775
      %777 = vrot.lane.b32.xlu0 %v731, 6
      %v778 = vpop.permute.xlu0 %777
      %779 = vrot.lane.b32.xlu0 %v735, 6
      %v780 = vpop.permute.xlu0 %779
      %781 = vrot.lane.b32.xlu0 %v738, 6
      %v782 = vpop.permute.xlu0 %781
      %783 = vrot.lane.b32.xlu0 %v742, 6
      %v784 = vpop.permute.xlu0 %783
      %785 = vrot.lane.b32.xlu0 %v745, 6
      %v786 = vpop.permute.xlu0 %785
      %787 = vrot.lane.b32.xlu0 %v749, 6
      %v788 = vpop.permute.xlu0 %787
      %789 = vrot.lane.b32.xlu0 %v752, 6
      %v790 = vpop.permute.xlu0 %789
      %791 = vrot.lane.b32.xlu0 %v756, 6
      %v792 = vpop.permute.xlu0 %791
      %793 = vrot.lane.b32.xlu0 %v759, 6
      %v794 = vpop.permute.xlu0 %793
      %795 = vrot.lane.b32.xlu0 %v763, 6
      %v796 = vpop.permute.xlu0 %795
      %797 = vrot.lane.b32.xlu0 %v766, 6
      %v798 = vpop.permute.xlu0 %797
      %vm815 = vcmask 68656
      %816 = vst.msk [vmem:[#allocation3] sm:$0xf] %vm815, %v768
      %817 = vst.msk [vmem:[#allocation3 + $0x4] sm:$0xf] %vm815, %v770
      %818 = vst.msk [vmem:[#allocation3 + $0x8] sm:$0xf] %vm815, %v772
      %819 = vst.msk [vmem:[#allocation3 + $0xc] sm:$0xf] %vm815, %v774
      %820 = vst.msk [vmem:[#allocation3 + $0x10] sm:$0xf] %vm815, %v776
      %821 = vst.msk [vmem:[#allocation3 + $0x14] sm:$0xf] %vm815, %v778
      %822 = vst.msk [vmem:[#allocation3 + $0x18] sm:$0xf] %vm815, %v780
      %823 = vst.msk [vmem:[#allocation3 + $0x1c] sm:$0xf] %vm815, %v782
      %824 = vst.msk [vmem:[#allocation3 + $0x20] sm:$0xf] %vm815, %v784
      %825 = vst.msk [vmem:[#allocation3 + $0x24] sm:$0xf] %vm815, %v786
      %826 = vst.msk [vmem:[#allocation3 + $0x28] sm:$0xf] %vm815, %v788
      %827 = vst.msk [vmem:[#allocation3 + $0x2c] sm:$0xf] %vm815, %v790
      %828 = vst.msk [vmem:[#allocation3 + $0x30] sm:$0xf] %vm815, %v792
      %829 = vst.msk [vmem:[#allocation3 + $0x34] sm:$0xf] %vm815, %v794
      %830 = vst.msk [vmem:[#allocation3 + $0x38] sm:$0xf] %vm815, %v796
      %831 = vst.msk [vmem:[#allocation3 + $0x3c] sm:$0xf] %vm815, %v798
      %v832 = vld [vmem:[#allocation3] sm:$0xf]
      %v833 = vld [vmem:[#allocation3 + $0x4] sm:$0xf]
      %v834 = vld [vmem:[#allocation3 + $0x8] sm:$0xf]
      %v835 = vld [vmem:[#allocation3 + $0xc] sm:$0xf]
      %v836 = vld [vmem:[#allocation3 + $0x10] sm:$0xf]
      %v837 = vld [vmem:[#allocation3 + $0x14] sm:$0xf]
      %v838 = vld [vmem:[#allocation3 + $0x18] sm:$0xf]
      %v839 = vld [vmem:[#allocation3 + $0x1c] sm:$0xf]
      %v840 = vld [vmem:[#allocation3 + $0x20] sm:$0xf]
      %v841 = vld [vmem:[#allocation3 + $0x24] sm:$0xf]
      %v842 = vld [vmem:[#allocation3 + $0x28] sm:$0xf]
      %v843 = vld [vmem:[#allocation3 + $0x2c] sm:$0xf]
      %v844 = vld [vmem:[#allocation3 + $0x30] sm:$0xf]
      %v845 = vld [vmem:[#allocation3 + $0x34] sm:$0xf]
      %v846 = vld [vmem:[#allocation3 + $0x38] sm:$0xf]
      %v847 = vld [vmem:[#allocation3 + $0x3c] sm:$0xf]
      %v848 = vld [vmem:[%s2] sm:$0xf]
      %v849 = vld [vmem:[%s2 + $0x4] sm:$0x1]
      %s850 = scalar_lea.vmem [#allocation2], 12
      %v851 = vld [vmem:[%s850] sm:$0xf]
      %v852 = vld [vmem:[%s850 + $0x4] sm:$0xf]
      %v853 = vld [vmem:[%s850 + $0x8] sm:$0x1]
      %v854 = vld [vmem:[%s850 + $0xc] sm:$0xf]
      %v855 = vld [vmem:[%s850 + $0x10] sm:$0xf]
      %v856 = vld [vmem:[%s850 + $0x14] sm:$0x1]
      %v857 = vld [vmem:[%s850 + $0x18] sm:$0xf]
      %v858 = vld [vmem:[%s850 + $0x1c] sm:$0xf]
      %v859 = vld [vmem:[%s850 + $0x20] sm:$0x1]
      %v860 = vld [vmem:[%s850 + $0x24] sm:$0xf]
      %v861 = vld [vmem:[%s850 + $0x28] sm:$0xf]
      %v862 = vld [vmem:[%s850 + $0x2c] sm:$0x1]
      %v863 = vld [vmem:[%s850 + $0x30] sm:$0xf]
      %v864 = vld [vmem:[%s850 + $0x34] sm:$0xf]
      %v865 = vld [vmem:[%s850 + $0x38] sm:$0x1]
      %v866 = vld [vmem:[%s850 + $0x3c] sm:$0xf]
      %v867 = vld [vmem:[%s850 + $0x40] sm:$0xf]
      %v868 = vld [vmem:[%s850 + $0x44] sm:$0x1]
      %v869 = vld [vmem:[%s850 + $0x48] sm:$0xf]
      %v870 = vld [vmem:[%s850 + $0x4c] sm:$0xf]
      %v871 = vld [vmem:[%s850 + $0x50] sm:$0x1]
      %v872 = vld [vmem:[%s850 + $0x54] sm:$0xf]
      %v873 = vld [vmem:[%s850 + $0x58] sm:$0xf]
      %v874 = vld [vmem:[%s850 + $0x5c] sm:$0x1]
      %875 = vst.msk [vmem:[#allocation3] sm:$0xf] %vm345, %v851
      %876 = vst.msk [vmem:[#allocation3 + $0x4] sm:$0xf] %vm345, %v852
      %877 = vst.msk [vmem:[#allocation3 + $0x8] sm:$0xf] %vm345, %v854
      %878 = vst.msk [vmem:[#allocation3 + $0xc] sm:$0xf] %vm345, %v855
      %879 = vst.msk [vmem:[#allocation3 + $0x10] sm:$0xf] %vm345, %v857
      %880 = vst.msk [vmem:[#allocation3 + $0x14] sm:$0xf] %vm345, %v858
      %881 = vst.msk [vmem:[#allocation3 + $0x18] sm:$0xf] %vm345, %v860
      %882 = vst.msk [vmem:[#allocation3 + $0x1c] sm:$0xf] %vm345, %v861
      %883 = vst.msk [vmem:[#allocation3 + $0x20] sm:$0xf] %vm345, %v863
      %884 = vst.msk [vmem:[#allocation3 + $0x24] sm:$0xf] %vm345, %v864
      %885 = vst.msk [vmem:[#allocation3 + $0x28] sm:$0xf] %vm345, %v866
      %886 = vst.msk [vmem:[#allocation3 + $0x2c] sm:$0xf] %vm345, %v867
      %887 = vst.msk [vmem:[#allocation3 + $0x30] sm:$0xf] %vm345, %v869
      %888 = vst.msk [vmem:[#allocation3 + $0x34] sm:$0xf] %vm345, %v870
      %889 = vst.msk [vmem:[#allocation3 + $0x38] sm:$0xf] %vm345, %v872
      %890 = vst.msk [vmem:[#allocation3 + $0x3c] sm:$0xf] %vm345, %v873
      %v892 = vshrl.u32 %v851, 16
      %v894 = vrot.slane %v892, 4
      %v895 = vshll.u32 %v851, 16
      %v897 = vrot.slane %v895, 5
      %v898 = vor.u32 %v894, %v897
      %v899 = vrot.slane %v898, 4
      %v901 = vshll.u32 %v852, 16
      %v903 = vrot.slane %v901, 5
      %v904 = vsel %vm426, %v899, %v903
      %v905 = vshrl.u32 %v852, 16
      %v907 = vrot.slane %v905, 4
      %v908 = vor.u32 %v907, %v903
      %v909 = vrot.slane %v908, 4
      %v911 = vshll.u32 %v853, 16
      %v913 = vrot.slane %v911, 5
      %v914 = vsel %vm426, %v909, %v913
      %v916 = vshrl.u32 %v854, 16
      %v918 = vrot.slane %v916, 4
      %v919 = vshll.u32 %v854, 16
      %v921 = vrot.slane %v919, 5
      %v922 = vor.u32 %v918, %v921
      %v923 = vrot.slane %v922, 4
      %v925 = vshll.u32 %v855, 16
      %v927 = vrot.slane %v925, 5
      %v928 = vsel %vm426, %v923, %v927
      %v929 = vshrl.u32 %v855, 16
      %v931 = vrot.slane %v929, 4
      %v932 = vor.u32 %v931, %v927
      %v933 = vrot.slane %v932, 4
      %v935 = vshll.u32 %v856, 16
      %v937 = vrot.slane %v935, 5
      %v938 = vsel %vm426, %v933, %v937
      %v940 = vshrl.u32 %v857, 16
      %v942 = vrot.slane %v940, 4
      %v943 = vshll.u32 %v857, 16
      %v945 = vrot.slane %v943, 5
      %v946 = vor.u32 %v942, %v945
      %v947 = vrot.slane %v946, 4
      %v949 = vshll.u32 %v858, 16
      %v951 = vrot.slane %v949, 5
      %v952 = vsel %vm426, %v947, %v951
      %v953 = vshrl.u32 %v858, 16
      %v955 = vrot.slane %v953, 4
      %v956 = vor.u32 %v955, %v951
      %v957 = vrot.slane %v956, 4
      %v959 = vshll.u32 %v859, 16
      %v961 = vrot.slane %v959, 5
      %v962 = vsel %vm426, %v957, %v961
      %v964 = vshrl.u32 %v860, 16
      %v966 = vrot.slane %v964, 4
      %v967 = vshll.u32 %v860, 16
      %v969 = vrot.slane %v967, 5
      %v970 = vor.u32 %v966, %v969
      %v971 = vrot.slane %v970, 4
      %v973 = vshll.u32 %v861, 16
      %v975 = vrot.slane %v973, 5
      %v976 = vsel %vm426, %v971, %v975
      %v977 = vshrl.u32 %v861, 16
      %v979 = vrot.slane %v977, 4
      %v980 = vor.u32 %v979, %v975
      %v981 = vrot.slane %v980, 4
      %v983 = vshll.u32 %v862, 16
      %v985 = vrot.slane %v983, 5
      %v986 = vsel %vm426, %v981, %v985
      %v988 = vshrl.u32 %v863, 16
      %v990 = vrot.slane %v988, 4
      %v991 = vshll.u32 %v863, 16
      %v993 = vrot.slane %v991, 5
      %v994 = vor.u32 %v990, %v993
      %v995 = vrot.slane %v994, 4
      %v997 = vshll.u32 %v864, 16
      %v999 = vrot.slane %v997, 5
      %v1000 = vsel %vm426, %v995, %v999
      %v1001 = vshrl.u32 %v864, 16
      %v1003 = vrot.slane %v1001, 4
      %v1004 = vor.u32 %v1003, %v999
      %v1005 = vrot.slane %v1004, 4
      %v1007 = vshll.u32 %v865, 16
      %v1009 = vrot.slane %v1007, 5
      %v1010 = vsel %vm426, %v1005, %v1009
      %v1012 = vshrl.u32 %v866, 16
      %v1014 = vrot.slane %v1012, 4
      %v1015 = vshll.u32 %v866, 16
      %v1017 = vrot.slane %v1015, 5
      %v1018 = vor.u32 %v1014, %v1017
      %v1019 = vrot.slane %v1018, 4
      %v1021 = vshll.u32 %v867, 16
      %v1023 = vrot.slane %v1021, 5
      %v1024 = vsel %vm426, %v1019, %v1023
      %v1025 = vshrl.u32 %v867, 16
      %v1027 = vrot.slane %v1025, 4
      %v1028 = vor.u32 %v1027, %v1023
      %v1029 = vrot.slane %v1028, 4
      %v1031 = vshll.u32 %v868, 16
      %v1033 = vrot.slane %v1031, 5
      %v1034 = vsel %vm426, %v1029, %v1033
      %v1036 = vshrl.u32 %v869, 16
      %v1038 = vrot.slane %v1036, 4
      %v1039 = vshll.u32 %v869, 16
      %v1041 = vrot.slane %v1039, 5
      %v1042 = vor.u32 %v1038, %v1041
      %v1043 = vrot.slane %v1042, 4
      %v1045 = vshll.u32 %v870, 16
      %v1047 = vrot.slane %v1045, 5
      %v1048 = vsel %vm426, %v1043, %v1047
      %v1049 = vshrl.u32 %v870, 16
      %v1051 = vrot.slane %v1049, 4
      %v1052 = vor.u32 %v1051, %v1047
      %v1053 = vrot.slane %v1052, 4
      %v1055 = vshll.u32 %v871, 16
      %v1057 = vrot.slane %v1055, 5
      %v1058 = vsel %vm426, %v1053, %v1057
      %v1060 = vshrl.u32 %v872, 16
      %v1062 = vrot.slane %v1060, 4
      %v1063 = vshll.u32 %v872, 16
      %v1065 = vrot.slane %v1063, 5
      %v1066 = vor.u32 %v1062, %v1065
      %v1067 = vrot.slane %v1066, 4
      %v1069 = vshll.u32 %v873, 16
      %v1071 = vrot.slane %v1069, 5
      %v1072 = vsel %vm426, %v1067, %v1071
      %v1073 = vshrl.u32 %v873, 16
      %v1075 = vrot.slane %v1073, 4
      %v1076 = vor.u32 %v1075, %v1071
      %v1077 = vrot.slane %v1076, 4
      %v1079 = vshll.u32 %v874, 16
      %v1081 = vrot.slane %v1079, 5
      %v1082 = vsel %vm426, %v1077, %v1081
      %1083 = vrot.lane.b32.xlu0 %v904, 3
      %v1084 = vpop.permute.xlu0 %1083
      %1085 = vrot.lane.b32.xlu0 %v914, 3
      %v1086 = vpop.permute.xlu0 %1085
      %1087 = vrot.lane.b32.xlu0 %v928, 3
      %v1088 = vpop.permute.xlu0 %1087
      %1089 = vrot.lane.b32.xlu0 %v938, 3
      %v1090 = vpop.permute.xlu0 %1089
      %1091 = vrot.lane.b32.xlu0 %v952, 3
      %v1092 = vpop.permute.xlu0 %1091
      %1093 = vrot.lane.b32.xlu0 %v962, 3
      %v1094 = vpop.permute.xlu0 %1093
      %1095 = vrot.lane.b32.xlu0 %v976, 3
      %v1096 = vpop.permute.xlu0 %1095
      %1097 = vrot.lane.b32.xlu0 %v986, 3
      %v1098 = vpop.permute.xlu0 %1097
      %1099 = vrot.lane.b32.xlu0 %v1000, 3
      %v1100 = vpop.permute.xlu0 %1099
      %1101 = vrot.lane.b32.xlu0 %v1010, 3
      %v1102 = vpop.permute.xlu0 %1101
      %1103 = vrot.lane.b32.xlu0 %v1024, 3
      %v1104 = vpop.permute.xlu0 %1103
      %1105 = vrot.lane.b32.xlu0 %v1034, 3
      %v1106 = vpop.permute.xlu0 %1105
      %1107 = vrot.lane.b32.xlu0 %v1048, 3
      %v1108 = vpop.permute.xlu0 %1107
      %1109 = vrot.lane.b32.xlu0 %v1058, 3
      %v1110 = vpop.permute.xlu0 %1109
      %1111 = vrot.lane.b32.xlu0 %v1072, 3
      %v1112 = vpop.permute.xlu0 %1111
      %1113 = vrot.lane.b32.xlu0 %v1082, 3
      %v1114 = vpop.permute.xlu0 %1113
      %1131 = vst.msk [vmem:[#allocation3] sm:$0xf] %vm667, %v1084
      %1132 = vst.msk [vmem:[#allocation3 + $0x4] sm:$0xf] %vm667, %v1086
      %1133 = vst.msk [vmem:[#allocation3 + $0x8] sm:$0xf] %vm667, %v1088
      %1134 = vst.msk [vmem:[#allocation3 + $0xc] sm:$0xf] %vm667, %v1090
      %1135 = vst.msk [vmem:[#allocation3 + $0x10] sm:$0xf] %vm667, %v1092
      %1136 = vst.msk [vmem:[#allocation3 + $0x14] sm:$0xf] %vm667, %v1094
      %1137 = vst.msk [vmem:[#allocation3 + $0x18] sm:$0xf] %vm667, %v1096
      %1138 = vst.msk [vmem:[#allocation3 + $0x1c] sm:$0xf] %vm667, %v1098
      %1139 = vst.msk [vmem:[#allocation3 + $0x20] sm:$0xf] %vm667, %v1100
      %1140 = vst.msk [vmem:[#allocation3 + $0x24] sm:$0xf] %vm667, %v1102
      %1141 = vst.msk [vmem:[#allocation3 + $0x28] sm:$0xf] %vm667, %v1104
      %1142 = vst.msk [vmem:[#allocation3 + $0x2c] sm:$0xf] %vm667, %v1106
      %1143 = vst.msk [vmem:[#allocation3 + $0x30] sm:$0xf] %vm667, %v1108
      %1144 = vst.msk [vmem:[#allocation3 + $0x34] sm:$0xf] %vm667, %v1110
      %1145 = vst.msk [vmem:[#allocation3 + $0x38] sm:$0xf] %vm667, %v1112
      %1146 = vst.msk [vmem:[#allocation3 + $0x3c] sm:$0xf] %vm667, %v1114
      %v1171 = vrot.slane %v851, 5
      %v1172 = vrot.slane %v1171, 4
      %v1173 = vrot.slane %v852, 5
      %v1174 = vsel %vm710, %v1172, %v1173
      %v1175 = vrot.slane %v1173, 4
      %v1176 = vrot.slane %v853, 5
      %v1177 = vsel %vm710, %v1175, %v1176
      %v1178 = vrot.slane %v854, 5
      %v1179 = vrot.slane %v1178, 4
      %v1180 = vrot.slane %v855, 5
      %v1181 = vsel %vm710, %v1179, %v1180
      %v1182 = vrot.slane %v1180, 4
      %v1183 = vrot.slane %v856, 5
      %v1184 = vsel %vm710, %v1182, %v1183
      %v1185 = vrot.slane %v857, 5
      %v1186 = vrot.slane %v1185, 4
      %v1187 = vrot.slane %v858, 5
      %v1188 = vsel %vm710, %v1186, %v1187
      %v1189 = vrot.slane %v1187, 4
      %v1190 = vrot.slane %v859, 5
      %v1191 = vsel %vm710, %v1189, %v1190
      %v1192 = vrot.slane %v860, 5
      %v1193 = vrot.slane %v1192, 4
      %v1194 = vrot.slane %v861, 5
      %v1195 = vsel %vm710, %v1193, %v1194
      %v1196 = vrot.slane %v1194, 4
      %v1197 = vrot.slane %v862, 5
      %v1198 = vsel %vm710, %v1196, %v1197
      %v1199 = vrot.slane %v863, 5
      %v1200 = vrot.slane %v1199, 4
      %v1201 = vrot.slane %v864, 5
      %v1202 = vsel %vm710, %v1200, %v1201
      %v1203 = vrot.slane %v1201, 4
      %v1204 = vrot.slane %v865, 5
      %v1205 = vsel %vm710, %v1203, %v1204
      %v1206 = vrot.slane %v866, 5
      %v1207 = vrot.slane %v1206, 4
      %v1208 = vrot.slane %v867, 5
      %v1209 = vsel %vm710, %v1207, %v1208
      %v1210 = vrot.slane %v1208, 4
      %v1211 = vrot.slane %v868, 5
      %v1212 = vsel %vm710, %v1210, %v1211
      %v1213 = vrot.slane %v869, 5
      %v1214 = vrot.slane %v1213, 4
      %v1215 = vrot.slane %v870, 5
      %v1216 = vsel %vm710, %v1214, %v1215
      %v1217 = vrot.slane %v1215, 4
      %v1218 = vrot.slane %v871, 5
      %v1219 = vsel %vm710, %v1217, %v1218
      %v1220 = vrot.slane %v872, 5
      %v1221 = vrot.slane %v1220, 4
      %v1222 = vrot.slane %v873, 5
      %v1223 = vsel %vm710, %v1221, %v1222
      %v1224 = vrot.slane %v1222, 4
      %v1225 = vrot.slane %v874, 5
      %v1226 = vsel %vm710, %v1224, %v1225
      %1227 = vrot.lane.b32.xlu0 %v1174, 6
      %v1228 = vpop.permute.xlu0 %1227
      %1229 = vrot.lane.b32.xlu0 %v1177, 6
      %v1230 = vpop.permute.xlu0 %1229
      %1231 = vrot.lane.b32.xlu0 %v1181, 6
      %v1232 = vpop.permute.xlu0 %1231
      %1233 = vrot.lane.b32.xlu0 %v1184, 6
      %v1234 = vpop.permute.xlu0 %1233
      %1235 = vrot.lane.b32.xlu0 %v1188, 6
      %v1236 = vpop.permute.xlu0 %1235
      %1237 = vrot.lane.b32.xlu0 %v1191, 6
      %v1238 = vpop.permute.xlu0 %1237
      %1239 = vrot.lane.b32.xlu0 %v1195, 6
      %v1240 = vpop.permute.xlu0 %1239
      %1241 = vrot.lane.b32.xlu0 %v1198, 6
      %v1242 = vpop.permute.xlu0 %1241
      %1243 = vrot.lane.b32.xlu0 %v1202, 6
      %v1244 = vpop.permute.xlu0 %1243
      %1245 = vrot.lane.b32.xlu0 %v1205, 6
      %v1246 = vpop.permute.xlu0 %1245
      %1247 = vrot.lane.b32.xlu0 %v1209, 6
      %v1248 = vpop.permute.xlu0 %1247
      %1249 = vrot.lane.b32.xlu0 %v1212, 6
      %v1250 = vpop.permute.xlu0 %1249
      %1251 = vrot.lane.b32.xlu0 %v1216, 6
      %v1252 = vpop.permute.xlu0 %1251
      %1253 = vrot.lane.b32.xlu0 %v1219, 6
      %v1254 = vpop.permute.xlu0 %1253
      %1255 = vrot.lane.b32.xlu0 %v1223, 6
      %v1256 = vpop.permute.xlu0 %1255
      %1257 = vrot.lane.b32.xlu0 %v1226, 6
      %v1258 = vpop.permute.xlu0 %1257
      %1275 = vst.msk [vmem:[#allocation3] sm:$0xf] %vm815, %v1228
      %1276 = vst.msk [vmem:[#allocation3 + $0x4] sm:$0xf] %vm815, %v1230
      %1277 = vst.msk [vmem:[#allocation3 + $0x8] sm:$0xf] %vm815, %v1232
      %1278 = vst.msk [vmem:[#allocation3 + $0xc] sm:$0xf] %vm815, %v1234
      %1279 = vst.msk [vmem:[#allocation3 + $0x10] sm:$0xf] %vm815, %v1236
      %1280 = vst.msk [vmem:[#allocation3 + $0x14] sm:$0xf] %vm815, %v1238
      %1281 = vst.msk [vmem:[#allocation3 + $0x18] sm:$0xf] %vm815, %v1240
      %1282 = vst.msk [vmem:[#allocation3 + $0x1c] sm:$0xf] %vm815, %v1242
      %1283 = vst.msk [vmem:[#allocation3 + $0x20] sm:$0xf] %vm815, %v1244
      %1284 = vst.msk [vmem:[#allocation3 + $0x24] sm:$0xf] %vm815, %v1246
      %1285 = vst.msk [vmem:[#allocation3 + $0x28] sm:$0xf] %vm815, %v1248
      %1286 = vst.msk [vmem:[#allocation3 + $0x2c] sm:$0xf] %vm815, %v1250
      %1287 = vst.msk [vmem:[#allocation3 + $0x30] sm:$0xf] %vm815, %v1252
      %1288 = vst.msk [vmem:[#allocation3 + $0x34] sm:$0xf] %vm815, %v1254
      %1289 = vst.msk [vmem:[#allocation3 + $0x38] sm:$0xf] %vm815, %v1256
      %1290 = vst.msk [vmem:[#allocation3 + $0x3c] sm:$0xf] %vm815, %v1258
      %v1291 = vld [vmem:[#allocation3] sm:$0xf]
      %v1292 = vld [vmem:[#allocation3 + $0x4] sm:$0xf]
      %v1293 = vld [vmem:[#allocation3 + $0x8] sm:$0xf]
      %v1294 = vld [vmem:[#allocation3 + $0xc] sm:$0xf]
      %v1295 = vld [vmem:[#allocation3 + $0x10] sm:$0xf]
      %v1296 = vld [vmem:[#allocation3 + $0x14] sm:$0xf]
      %v1297 = vld [vmem:[#allocation3 + $0x18] sm:$0xf]
      %v1298 = vld [vmem:[#allocation3 + $0x1c] sm:$0xf]
      %v1299 = vld [vmem:[#allocation3 + $0x20] sm:$0xf]
      %v1300 = vld [vmem:[#allocation3 + $0x24] sm:$0xf]
      %v1301 = vld [vmem:[#allocation3 + $0x28] sm:$0xf]
      %v1302 = vld [vmem:[#allocation3 + $0x2c] sm:$0xf]
      %v1303 = vld [vmem:[#allocation3 + $0x30] sm:$0xf]
      %v1304 = vld [vmem:[#allocation3 + $0x34] sm:$0xf]
      %v1305 = vld [vmem:[#allocation3 + $0x38] sm:$0xf]
      %v1306 = vld [vmem:[#allocation3 + $0x3c] sm:$0xf]
      %s1307 = scalar_lea.vmem %s2, 8
      %v1308 = vld [vmem:[%s1307] sm:$0xf]
      %v1309 = vld [vmem:[%s1307 + $0x4] sm:$0x1]
      %v1326 = vunpack.c.l.b16 %v1291
      %v1327 = vunpack.c.l.b16 %v1292
      %v1328 = vunpack.c.l.b16 %v1293
      %v1329 = vunpack.c.l.b16 %v1294
      %v1330 = vunpack.c.l.b16 %v1295
      %v1331 = vunpack.c.l.b16 %v1296
      %v1332 = vunpack.c.l.b16 %v1297
      %v1333 = vunpack.c.l.b16 %v1298
      %v1334 = vunpack.c.l.b16 %v1299
      %v1335 = vunpack.c.l.b16 %v1300
      %v1336 = vunpack.c.l.b16 %v1301
      %v1337 = vunpack.c.l.b16 %v1302
      %v1338 = vunpack.c.l.b16 %v1303
      %v1339 = vunpack.c.l.b16 %v1304
      %v1340 = vunpack.c.l.b16 %v1305
      %v1341 = vunpack.c.l.b16 %v1306
      %v1342 = vpack.c.b16 %v1327, %v1326
      %v1343 = vpack.c.b16 %v1329, %v1328
      %v1344 = vpack.c.b16 %v1331, %v1330
      %v1345 = vpack.c.b16 %v1333, %v1332
      %v1346 = vpack.c.b16 %v1335, %v1334
      %v1347 = vpack.c.b16 %v1337, %v1336
      %v1348 = vpack.c.b16 %v1339, %v1338
      %v1349 = vpack.c.b16 %v1341, %v1340
      %v1352 = vunpack.c.l.b16 %v1308
      %v1353 = vunpack.c.l.b16 %v1309
      %v1354 = vpack.c.b16 %v1353, %v1352
      %vm1355 = vcmask 72704
      %v1357 = vsel %vm1355, %v1342, 0
      %v1360 = vsel %vm1355, %v1343, 0
      %v1363 = vsel %vm1355, %v1344, 0
      %v1366 = vsel %vm1355, %v1345, 0
      %v1369 = vsel %vm1355, %v1346, 0
      %v1372 = vsel %vm1355, %v1347, 0
      %v1375 = vsel %vm1355, %v1348, 0
      %v1378 = vsel %vm1355, %v1349, 0
      %vm1380 = vcmask 1043456
      %vm1381 = vcmask 1044480
      %v1382 = vsel %vm1380, 4294967295, 65535
      %v1383 = vsel %vm1381, %v1382, 0
      %v1385 = vand.u32 %v1354, %v1383
      %1387 = vmatprep.subr.bf16.mxu0 0
      %1388 = vmatpush1.bf16.msra.mxu0 0
      %1389 = vmatprep.subr.bf16.mxu0 0
      %1390 = vmatpush1.bf16.msra.mxu0 0
      %1391 = vmatprep.subr.bf16.mxu0 0
      %1392 = vmatpush1.bf16.msra.mxu0 0
      %1393 = vmatprep.subr.bf16.mxu0 0
      %1394 = vmatpush1.bf16.msra.mxu0 0
      %1395 = vmatprep.subr.bf16.mxu0 0
      %1396 = vmatpush1.bf16.msra.mxu0 0
      %1397 = vmatprep.subr.bf16.mxu0 0
      %1398 = vmatpush1.bf16.msra.mxu0 0
      %1399 = vmatprep.subr.bf16.mxu0 0
      %1400 = vmatpush1.bf16.msra.mxu0 0
      %1401 = vmatprep.subr.bf16.mxu0 0
      %1402 = vmatpush1.bf16.msra.mxu0 %v1385
      %1403 = vmatprep.subr.bf16.mxu0 0
      %1404 = vmatpush2.bf16.msra.mxu0 0
      %1405 = vmatprep.subr.bf16.mxu0 0
      %1406 = vmatpush2.bf16.msra.mxu0 0
      %1407 = vmatprep.subr.bf16.mxu0 0
      %1408 = vmatpush2.bf16.msra.mxu0 0
      %1409 = vmatprep.subr.bf16.mxu0 0
      %1410 = vmatpush2.bf16.msra.mxu0 0
      %1411 = vmatprep.subr.bf16.mxu0 0
      %1412 = vmatpush2.bf16.msra.mxu0 0
      %1413 = vmatprep.subr.bf16.mxu0 0
      %1414 = vmatpush2.bf16.msra.mxu0 0
      %1415 = vmatprep.subr.bf16.mxu0 0
      %1416 = vmatpush2.bf16.msra.mxu0 0
      %1417 = vmatprep.subr.bf16.mxu0 0
      %1418 = vmatpush2.bf16.msra.mxu0 0
      %1419 = vmatprep.mubr.bf16.mxu0 0
      %1420 = vmatmul.mubr.bf16.gmra.mxu0 %v1357
      %v1421 = vpop.f32.mrf.mxu0
      %v1422 = vadd.f32 0.0, %v1421
      %v1423 = vpop.f32.mrf.mxu0
      %v1424 = vpop.f32.mrf.mxu0
      %v1425 = vadd.f32 0.0, %v1424
      %v1426 = vpop.f32.mrf.mxu0
      %1427 = vmatprep.mubr.bf16.mxu0 0
      %1428 = vmatmul.mubr.bf16.gmra.mxu0 %v1360
      %v1429 = vpop.f32.mrf.mxu0
      %v1430 = vadd.f32 0.0, %v1429
      %v1431 = vpop.f32.mrf.mxu0
      %v1432 = vpop.f32.mrf.mxu0
      %v1433 = vadd.f32 0.0, %v1432
      %v1434 = vpop.f32.mrf.mxu0
      %1435 = vmatprep.mubr.bf16.mxu0 0
      %1436 = vmatmul.mubr.bf16.gmra.mxu0 %v1363
      %v1437 = vpop.f32.mrf.mxu0
      %v1438 = vadd.f32 0.0, %v1437
      %v1439 = vpop.f32.mrf.mxu0
      %v1440 = vpop.f32.mrf.mxu0
      %v1441 = vadd.f32 0.0, %v1440
      %v1442 = vpop.f32.mrf.mxu0
      %1443 = vmatprep.mubr.bf16.mxu0 0
      %1444 = vmatmul.mubr.bf16.gmra.mxu0 %v1366
      %v1445 = vpop.f32.mrf.mxu0
      %v1446 = vadd.f32 0.0, %v1445
      %v1447 = vpop.f32.mrf.mxu0
      %v1448 = vpop.f32.mrf.mxu0
      %v1449 = vadd.f32 0.0, %v1448
      %v1450 = vpop.f32.mrf.mxu0
      %1451 = vmatprep.mubr.bf16.mxu0 0
      %1452 = vmatmul.mubr.bf16.gmra.mxu0 %v1369
      %v1453 = vpop.f32.mrf.mxu0
      %v1454 = vadd.f32 0.0, %v1453
      %v1455 = vpop.f32.mrf.mxu0
      %v1456 = vpop.f32.mrf.mxu0
      %v1457 = vadd.f32 0.0, %v1456
      %v1458 = vpop.f32.mrf.mxu0
      %1459 = vmatprep.mubr.bf16.mxu0 0
      %1460 = vmatmul.mubr.bf16.gmra.mxu0 %v1372
      %v1461 = vpop.f32.mrf.mxu0
      %v1462 = vadd.f32 0.0, %v1461
      %v1463 = vpop.f32.mrf.mxu0
      %v1464 = vpop.f32.mrf.mxu0
      %v1465 = vadd.f32 0.0, %v1464
      %v1466 = vpop.f32.mrf.mxu0
      %1467 = vmatprep.mubr.bf16.mxu0 0
      %1468 = vmatmul.mubr.bf16.gmra.mxu0 %v1375
      %v1469 = vpop.f32.mrf.mxu0
      %v1470 = vadd.f32 0.0, %v1469
      %v1471 = vpop.f32.mrf.mxu0
      %v1472 = vpop.f32.mrf.mxu0
      %v1473 = vadd.f32 0.0, %v1472
      %v1474 = vpop.f32.mrf.mxu0
      %1475 = vmatprep.mubr.bf16.mxu0 0
      %1476 = vmatmul.mubr.bf16.gmra.mxu0 %v1378
      %v1477 = vpop.f32.mrf.mxu0
      %v1478 = vadd.f32 0.0, %v1477
      %v1479 = vpop.f32.mrf.mxu0
      %v1480 = vpop.f32.mrf.mxu0
      %v1481 = vadd.f32 0.0, %v1480
      %v1482 = vpop.f32.mrf.mxu0
      %1483 = vdwg.mxu0
      %v1500 = vunpack.c.l.b16 %v832
      %v1501 = vunpack.c.l.b16 %v833
      %v1502 = vunpack.c.l.b16 %v834
      %v1503 = vunpack.c.l.b16 %v835
      %v1504 = vunpack.c.l.b16 %v836
      %v1505 = vunpack.c.l.b16 %v837
      %v1506 = vunpack.c.l.b16 %v838
      %v1507 = vunpack.c.l.b16 %v839
      %v1508 = vunpack.c.l.b16 %v840
      %v1509 = vunpack.c.l.b16 %v841
      %v1510 = vunpack.c.l.b16 %v842
      %v1511 = vunpack.c.l.b16 %v843
      %v1512 = vunpack.c.l.b16 %v844
      %v1513 = vunpack.c.l.b16 %v845
      %v1514 = vunpack.c.l.b16 %v846
      %v1515 = vunpack.c.l.b16 %v847
      %v1516 = vpack.c.b16 %v1501, %v1500
      %v1517 = vpack.c.b16 %v1503, %v1502
      %v1518 = vpack.c.b16 %v1505, %v1504
      %v1519 = vpack.c.b16 %v1507, %v1506
      %v1520 = vpack.c.b16 %v1509, %v1508
      %v1521 = vpack.c.b16 %v1511, %v1510
      %v1522 = vpack.c.b16 %v1513, %v1512
      %v1523 = vpack.c.b16 %v1515, %v1514
      %v1526 = vunpack.c.l.b16 %v848
      %v1527 = vunpack.c.l.b16 %v849
      %v1528 = vpack.c.b16 %v1527, %v1526
      %v1530 = vsel %vm1355, %v1516, 0
      %v1533 = vsel %vm1355, %v1517, 0
      %v1536 = vsel %vm1355, %v1518, 0
      %v1539 = vsel %vm1355, %v1519, 0
      %v1542 = vsel %vm1355, %v1520, 0
      %v1545 = vsel %vm1355, %v1521, 0
      %v1548 = vsel %vm1355, %v1522, 0
      %v1551 = vsel %vm1355, %v1523, 0
      %v1554 = vand.u32 %v1528, %v1383
      %1556 = vmatprep.subr.bf16.mxu0 0
      %1557 = vmatpush1.bf16.msra.mxu0 0
      %1558 = vmatprep.subr.bf16.mxu0 0
      %1559 = vmatpush1.bf16.msra.mxu0 0
      %1560 = vmatprep.subr.bf16.mxu0 0
      %1561 = vmatpush1.bf16.msra.mxu0 0
      %1562 = vmatprep.subr.bf16.mxu0 0
      %1563 = vmatpush1.bf16.msra.mxu0 0
      %1564 = vmatprep.subr.bf16.mxu0 0
      %1565 = vmatpush1.bf16.msra.mxu0 0
      %1566 = vmatprep.subr.bf16.mxu0 0
      %1567 = vmatpush1.bf16.msra.mxu0 0
      %1568 = vmatprep.subr.bf16.mxu0 0
      %1569 = vmatpush1.bf16.msra.mxu0 0
      %1570 = vmatprep.subr.bf16.mxu0 0
      %1571 = vmatpush1.bf16.msra.mxu0 %v1554
      %1572 = vmatprep.subr.bf16.mxu0 0
      %1573 = vmatpush2.bf16.msra.mxu0 0
      %1574 = vmatprep.subr.bf16.mxu0 0
      %1575 = vmatpush2.bf16.msra.mxu0 0
      %1576 = vmatprep.subr.bf16.mxu0 0
      %1577 = vmatpush2.bf16.msra.mxu0 0
      %1578 = vmatprep.subr.bf16.mxu0 0
      %1579 = vmatpush2.bf16.msra.mxu0 0
      %1580 = vmatprep.subr.bf16.mxu0 0
      %1581 = vmatpush2.bf16.msra.mxu0 0
      %1582 = vmatprep.subr.bf16.mxu0 0
      %1583 = vmatpush2.bf16.msra.mxu0 0
      %1584 = vmatprep.subr.bf16.mxu0 0
      %1585 = vmatpush2.bf16.msra.mxu0 0
      %1586 = vmatprep.subr.bf16.mxu0 0
      %1587 = vmatpush2.bf16.msra.mxu0 0
      %1588 = vmatprep.mubr.bf16.mxu0 0
      %1589 = vmatmul.mubr.bf16.gmra.mxu0 %v1530
      %v1590 = vpop.f32.mrf.mxu0
      %v1591 = vadd.f32 %v1422, %v1590
      %v1592 = vpop.f32.mrf.mxu0
      %v1593 = vpop.f32.mrf.mxu0
      %v1594 = vadd.f32 %v1425, %v1593
      %v1595 = vpop.f32.mrf.mxu0
      %1596 = vmatprep.mubr.bf16.mxu0 0
      %1597 = vmatmul.mubr.bf16.gmra.mxu0 %v1533
      %v1598 = vpop.f32.mrf.mxu0
      %v1599 = vadd.f32 %v1430, %v1598
      %v1600 = vpop.f32.mrf.mxu0
      %v1601 = vpop.f32.mrf.mxu0
      %v1602 = vadd.f32 %v1433, %v1601
      %v1603 = vpop.f32.mrf.mxu0
      %1604 = vmatprep.mubr.bf16.mxu0 0
      %1605 = vmatmul.mubr.bf16.gmra.mxu0 %v1536
      %v1606 = vpop.f32.mrf.mxu0
      %v1607 = vadd.f32 %v1438, %v1606
      %v1608 = vpop.f32.mrf.mxu0
      %v1609 = vpop.f32.mrf.mxu0
      %v1610 = vadd.f32 %v1441, %v1609
      %v1611 = vpop.f32.mrf.mxu0
      %1612 = vmatprep.mubr.bf16.mxu0 0
      %1613 = vmatmul.mubr.bf16.gmra.mxu0 %v1539
      %v1614 = vpop.f32.mrf.mxu0
      %v1615 = vadd.f32 %v1446, %v1614
      %v1616 = vpop.f32.mrf.mxu0
      %v1617 = vpop.f32.mrf.mxu0
      %v1618 = vadd.f32 %v1449, %v1617
      %v1619 = vpop.f32.mrf.mxu0
      %1620 = vmatprep.mubr.bf16.mxu0 0
      %1621 = vmatmul.mubr.bf16.gmra.mxu0 %v1542
      %v1622 = vpop.f32.mrf.mxu0
      %v1623 = vadd.f32 %v1454, %v1622
      %v1624 = vpop.f32.mrf.mxu0
      %v1625 = vpop.f32.mrf.mxu0
      %v1626 = vadd.f32 %v1457, %v1625
      %v1627 = vpop.f32.mrf.mxu0
      %1628 = vmatprep.mubr.bf16.mxu0 0
      %1629 = vmatmul.mubr.bf16.gmra.mxu0 %v1545
      %v1630 = vpop.f32.mrf.mxu0
      %v1631 = vadd.f32 %v1462, %v1630
      %v1632 = vpop.f32.mrf.mxu0
      %v1633 = vpop.f32.mrf.mxu0
      %v1634 = vadd.f32 %v1465, %v1633
      %v1635 = vpop.f32.mrf.mxu0
      %1636 = vmatprep.mubr.bf16.mxu0 0
      %1637 = vmatmul.mubr.bf16.gmra.mxu0 %v1548
      %v1638 = vpop.f32.mrf.mxu0
      %v1639 = vadd.f32 %v1470, %v1638
      %v1640 = vpop.f32.mrf.mxu0
      %v1641 = vpop.f32.mrf.mxu0
      %v1642 = vadd.f32 %v1473, %v1641
      %v1643 = vpop.f32.mrf.mxu0
      %1644 = vmatprep.mubr.bf16.mxu0 0
      %1645 = vmatmul.mubr.bf16.gmra.mxu0 %v1551
      %v1646 = vpop.f32.mrf.mxu0
      %v1647 = vadd.f32 %v1478, %v1646
      %v1648 = vpop.f32.mrf.mxu0
      %v1649 = vpop.f32.mrf.mxu0
      %v1650 = vadd.f32 %v1481, %v1649
      %v1651 = vpop.f32.mrf.mxu0
      %1652 = vdwg.mxu0
      %s1653 = scalar_lea.vmem [#allocation2], 24
      %v1654 = vld [vmem:[%s1653] sm:$0xf]
      %v1655 = vld [vmem:[%s1653 + $0x4] sm:$0xf]
      %v1656 = vld [vmem:[%s1653 + $0x8] sm:$0x1]
      %v1657 = vld [vmem:[%s1653 + $0xc] sm:$0xf]
      %v1658 = vld [vmem:[%s1653 + $0x10] sm:$0xf]
      %v1659 = vld [vmem:[%s1653 + $0x14] sm:$0x1]
      %v1660 = vld [vmem:[%s1653 + $0x18] sm:$0xf]
      %v1661 = vld [vmem:[%s1653 + $0x1c] sm:$0xf]
      %v1662 = vld [vmem:[%s1653 + $0x20] sm:$0x1]
      %v1663 = vld [vmem:[%s1653 + $0x24] sm:$0xf]
      %v1664 = vld [vmem:[%s1653 + $0x28] sm:$0xf]
      %v1665 = vld [vmem:[%s1653 + $0x2c] sm:$0x1]
      %v1666 = vld [vmem:[%s1653 + $0x30] sm:$0xf]
      %v1667 = vld [vmem:[%s1653 + $0x34] sm:$0xf]
      %v1668 = vld [vmem:[%s1653 + $0x38] sm:$0x1]
      %v1669 = vld [vmem:[%s1653 + $0x3c] sm:$0xf]
      %v1670 = vld [vmem:[%s1653 + $0x40] sm:$0xf]
      %v1671 = vld [vmem:[%s1653 + $0x44] sm:$0x1]
      %v1672 = vld [vmem:[%s1653 + $0x48] sm:$0xf]
      %v1673 = vld [vmem:[%s1653 + $0x4c] sm:$0xf]
      %v1674 = vld [vmem:[%s1653 + $0x50] sm:$0x1]
      %v1675 = vld [vmem:[%s1653 + $0x54] sm:$0xf]
      %v1676 = vld [vmem:[%s1653 + $0x58] sm:$0xf]
      %v1677 = vld [vmem:[%s1653 + $0x5c] sm:$0x1]
      %1678 = vst.msk [vmem:[#allocation3] sm:$0xf] %vm345, %v1654
      %1679 = vst.msk [vmem:[#allocation3 + $0x4] sm:$0xf] %vm345, %v1655
      %1680 = vst.msk [vmem:[#allocation3 + $0x8] sm:$0xf] %vm345, %v1657
      %1681 = vst.msk [vmem:[#allocation3 + $0xc] sm:$0xf] %vm345, %v1658
      %1682 = vst.msk [vmem:[#allocation3 + $0x10] sm:$0xf] %vm345, %v1660
      %1683 = vst.msk [vmem:[#allocation3 + $0x14] sm:$0xf] %vm345, %v1661
      %1684 = vst.msk [vmem:[#allocation3 + $0x18] sm:$0xf] %vm345, %v1663
      %1685 = vst.msk [vmem:[#allocation3 + $0x1c] sm:$0xf] %vm345, %v1664
      %1686 = vst.msk [vmem:[#allocation3 + $0x20] sm:$0xf] %vm345, %v1666
      %1687 = vst.msk [vmem:[#allocation3 + $0x24] sm:$0xf] %vm345, %v1667
      %1688 = vst.msk [vmem:[#allocation3 + $0x28] sm:$0xf] %vm345, %v1669
      %1689 = vst.msk [vmem:[#allocation3 + $0x2c] sm:$0xf] %vm345, %v1670
      %1690 = vst.msk [vmem:[#allocation3 + $0x30] sm:$0xf] %vm345, %v1672
      %1691 = vst.msk [vmem:[#allocation3 + $0x34] sm:$0xf] %vm345, %v1673
      %1692 = vst.msk [vmem:[#allocation3 + $0x38] sm:$0xf] %vm345, %v1675
      %1693 = vst.msk [vmem:[#allocation3 + $0x3c] sm:$0xf] %vm345, %v1676
      %v1695 = vshrl.u32 %v1654, 16
      %v1697 = vrot.slane %v1695, 4
      %v1698 = vshll.u32 %v1654, 16
      %v1700 = vrot.slane %v1698, 5
      %v1701 = vor.u32 %v1697, %v1700
      %v1702 = vrot.slane %v1701, 4
      %v1704 = vshll.u32 %v1655, 16
      %v1706 = vrot.slane %v1704, 5
      %v1707 = vsel %vm426, %v1702, %v1706
      %v1708 = vshrl.u32 %v1655, 16
      %v1710 = vrot.slane %v1708, 4
      %v1711 = vor.u32 %v1710, %v1706
      %v1712 = vrot.slane %v1711, 4
      %v1714 = vshll.u32 %v1656, 16
      %v1716 = vrot.slane %v1714, 5
      %v1717 = vsel %vm426, %v1712, %v1716
      %v1719 = vshrl.u32 %v1657, 16
      %v1721 = vrot.slane %v1719, 4
      %v1722 = vshll.u32 %v1657, 16
      %v1724 = vrot.slane %v1722, 5
      %v1725 = vor.u32 %v1721, %v1724
      %v1726 = vrot.slane %v1725, 4
      %v1728 = vshll.u32 %v1658, 16
      %v1730 = vrot.slane %v1728, 5
      %v1731 = vsel %vm426, %v1726, %v1730
      %v1732 = vshrl.u32 %v1658, 16
      %v1734 = vrot.slane %v1732, 4
      %v1735 = vor.u32 %v1734, %v1730
      %v1736 = vrot.slane %v1735, 4
      %v1738 = vshll.u32 %v1659, 16
      %v1740 = vrot.slane %v1738, 5
      %v1741 = vsel %vm426, %v1736, %v1740
      %v1743 = vshrl.u32 %v1660, 16
      %v1745 = vrot.slane %v1743, 4
      %v1746 = vshll.u32 %v1660, 16
      %v1748 = vrot.slane %v1746, 5
      %v1749 = vor.u32 %v1745, %v1748
      %v1750 = vrot.slane %v1749, 4
      %v1752 = vshll.u32 %v1661, 16
      %v1754 = vrot.slane %v1752, 5
      %v1755 = vsel %vm426, %v1750, %v1754
      %v1756 = vshrl.u32 %v1661, 16
      %v1758 = vrot.slane %v1756, 4
      %v1759 = vor.u32 %v1758, %v1754
      %v1760 = vrot.slane %v1759, 4
      %v1762 = vshll.u32 %v1662, 16
      %v1764 = vrot.slane %v1762, 5
      %v1765 = vsel %vm426, %v1760, %v1764
      %v1767 = vshrl.u32 %v1663, 16
      %v1769 = vrot.slane %v1767, 4
      %v1770 = vshll.u32 %v1663, 16
      %v1772 = vrot.slane %v1770, 5
      %v1773 = vor.u32 %v1769, %v1772
      %v1774 = vrot.slane %v1773, 4
      %v1776 = vshll.u32 %v1664, 16
      %v1778 = vrot.slane %v1776, 5
      %v1779 = vsel %vm426, %v1774, %v1778
      %v1780 = vshrl.u32 %v1664, 16
      %v1782 = vrot.slane %v1780, 4
      %v1783 = vor.u32 %v1782, %v1778
      %v1784 = vrot.slane %v1783, 4
      %v1786 = vshll.u32 %v1665, 16
      %v1788 = vrot.slane %v1786, 5
      %v1789 = vsel %vm426, %v1784, %v1788
      %v1791 = vshrl.u32 %v1666, 16
      %v1793 = vrot.slane %v1791, 4
      %v1794 = vshll.u32 %v1666, 16
      %v1796 = vrot.slane %v1794, 5
      %v1797 = vor.u32 %v1793, %v1796
      %v1798 = vrot.slane %v1797, 4
      %v1800 = vshll.u32 %v1667, 16
      %v1802 = vrot.slane %v1800, 5
      %v1803 = vsel %vm426, %v1798, %v1802
      %v1804 = vshrl.u32 %v1667, 16
      %v1806 = vrot.slane %v1804, 4
      %v1807 = vor.u32 %v1806, %v1802
      %v1808 = vrot.slane %v1807, 4
      %v1810 = vshll.u32 %v1668, 16
      %v1812 = vrot.slane %v1810, 5
      %v1813 = vsel %vm426, %v1808, %v1812
      %v1815 = vshrl.u32 %v1669, 16
      %v1817 = vrot.slane %v1815, 4
      %v1818 = vshll.u32 %v1669, 16
      %v1820 = vrot.slane %v1818, 5
      %v1821 = vor.u32 %v1817, %v1820
      %v1822 = vrot.slane %v1821, 4
      %v1824 = vshll.u32 %v1670, 16
      %v1826 = vrot.slane %v1824, 5
      %v1827 = vsel %vm426, %v1822, %v1826
      %v1828 = vshrl.u32 %v1670, 16
      %v1830 = vrot.slane %v1828, 4
      %v1831 = vor.u32 %v1830, %v1826
      %v1832 = vrot.slane %v1831, 4
      %v1834 = vshll.u32 %v1671, 16
      %v1836 = vrot.slane %v1834, 5
      %v1837 = vsel %vm426, %v1832, %v1836
      %v1839 = vshrl.u32 %v1672, 16
      %v1841 = vrot.slane %v1839, 4
      %v1842 = vshll.u32 %v1672, 16
      %v1844 = vrot.slane %v1842, 5
      %v1845 = vor.u32 %v1841, %v1844
      %v1846 = vrot.slane %v1845, 4
      %v1848 = vshll.u32 %v1673, 16
      %v1850 = vrot.slane %v1848, 5
      %v1851 = vsel %vm426, %v1846, %v1850
      %v1852 = vshrl.u32 %v1673, 16
      %v1854 = vrot.slane %v1852, 4
      %v1855 = vor.u32 %v1854, %v1850
      %v1856 = vrot.slane %v1855, 4
      %v1858 = vshll.u32 %v1674, 16
      %v1860 = vrot.slane %v1858, 5
      %v1861 = vsel %vm426, %v1856, %v1860
      %v1863 = vshrl.u32 %v1675, 16
      %v1865 = vrot.slane %v1863, 4
      %v1866 = vshll.u32 %v1675, 16
      %v1868 = vrot.slane %v1866, 5
      %v1869 = vor.u32 %v1865, %v1868
      %v1870 = vrot.slane %v1869, 4
      %v1872 = vshll.u32 %v1676, 16
      %v1874 = vrot.slane %v1872, 5
      %v1875 = vsel %vm426, %v1870, %v1874
      %v1876 = vshrl.u32 %v1676, 16
      %v1878 = vrot.slane %v1876, 4
      %v1879 = vor.u32 %v1878, %v1874
      %v1880 = vrot.slane %v1879, 4
      %v1882 = vshll.u32 %v1677, 16
      %v1884 = vrot.slane %v1882, 5
      %v1885 = vsel %vm426, %v1880, %v1884
      %1886 = vrot.lane.b32.xlu0 %v1707, 3
      %v1887 = vpop.permute.xlu0 %1886
      %1888 = vrot.lane.b32.xlu0 %v1717, 3
      %v1889 = vpop.permute.xlu0 %1888
      %1890 = vrot.lane.b32.xlu0 %v1731, 3
      %v1891 = vpop.permute.xlu0 %1890
      %1892 = vrot.lane.b32.xlu0 %v1741, 3
      %v1893 = vpop.permute.xlu0 %1892
      %1894 = vrot.lane.b32.xlu0 %v1755, 3
      %v1895 = vpop.permute.xlu0 %1894
      %1896 = vrot.lane.b32.xlu0 %v1765, 3
      %v1897 = vpop.permute.xlu0 %1896
      %1898 = vrot.lane.b32.xlu0 %v1779, 3
      %v1899 = vpop.permute.xlu0 %1898
      %1900 = vrot.lane.b32.xlu0 %v1789, 3
      %v1901 = vpop.permute.xlu0 %1900
      %1902 = vrot.lane.b32.xlu0 %v1803, 3
      %v1903 = vpop.permute.xlu0 %1902
      %1904 = vrot.lane.b32.xlu0 %v1813, 3
      %v1905 = vpop.permute.xlu0 %1904
      %1906 = vrot.lane.b32.xlu0 %v1827, 3
      %v1907 = vpop.permute.xlu0 %1906
      %1908 = vrot.lane.b32.xlu0 %v1837, 3
      %v1909 = vpop.permute.xlu0 %1908
      %1910 = vrot.lane.b32.xlu0 %v1851, 3
      %v1911 = vpop.permute.xlu0 %1910
      %1912 = vrot.lane.b32.xlu0 %v1861, 3
      %v1913 = vpop.permute.xlu0 %1912
      %1914 = vrot.lane.b32.xlu0 %v1875, 3
      %v1915 = vpop.permute.xlu0 %1914
      %1916 = vrot.lane.b32.xlu0 %v1885, 3
      %v1917 = vpop.permute.xlu0 %1916
      %1934 = vst.msk [vmem:[#allocation3] sm:$0xf] %vm667, %v1887
      %1935 = vst.msk [vmem:[#allocation3 + $0x4] sm:$0xf] %vm667, %v1889
      %1936 = vst.msk [vmem:[#allocation3 + $0x8] sm:$0xf] %vm667, %v1891
      %1937 = vst.msk [vmem:[#allocation3 + $0xc] sm:$0xf] %vm667, %v1893
      %1938 = vst.msk [vmem:[#allocation3 + $0x10] sm:$0xf] %vm667, %v1895
      %1939 = vst.msk [vmem:[#allocation3 + $0x14] sm:$0xf] %vm667, %v1897
      %1940 = vst.msk [vmem:[#allocation3 + $0x18] sm:$0xf] %vm667, %v1899
      %1941 = vst.msk [vmem:[#allocation3 + $0x1c] sm:$0xf] %vm667, %v1901
      %1942 = vst.msk [vmem:[#allocation3 + $0x20] sm:$0xf] %vm667, %v1903
      %1943 = vst.msk [vmem:[#allocation3 + $0x24] sm:$0xf] %vm667, %v1905
      %1944 = vst.msk [vmem:[#allocation3 + $0x28] sm:$0xf] %vm667, %v1907
      %1945 = vst.msk [vmem:[#allocation3 + $0x2c] sm:$0xf] %vm667, %v1909
      %1946 = vst.msk [vmem:[#allocation3 + $0x30] sm:$0xf] %vm667, %v1911
      %1947 = vst.msk [vmem:[#allocation3 + $0x34] sm:$0xf] %vm667, %v1913
      %1948 = vst.msk [vmem:[#allocation3 + $0x38] sm:$0xf] %vm667, %v1915
      %1949 = vst.msk [vmem:[#allocation3 + $0x3c] sm:$0xf] %vm667, %v1917
      %v1974 = vrot.slane %v1654, 5
      %v1975 = vrot.slane %v1974, 4
      %v1976 = vrot.slane %v1655, 5
      %v1977 = vsel %vm710, %v1975, %v1976
      %v1978 = vrot.slane %v1976, 4
      %v1979 = vrot.slane %v1656, 5
      %v1980 = vsel %vm710, %v1978, %v1979
      %v1981 = vrot.slane %v1657, 5
      %v1982 = vrot.slane %v1981, 4
      %v1983 = vrot.slane %v1658, 5
      %v1984 = vsel %vm710, %v1982, %v1983
      %v1985 = vrot.slane %v1983, 4
      %v1986 = vrot.slane %v1659, 5
      %v1987 = vsel %vm710, %v1985, %v1986
      %v1988 = vrot.slane %v1660, 5
      %v1989 = vrot.slane %v1988, 4
      %v1990 = vrot.slane %v1661, 5
      %v1991 = vsel %vm710, %v1989, %v1990
      %v1992 = vrot.slane %v1990, 4
      %v1993 = vrot.slane %v1662, 5
      %v1994 = vsel %vm710, %v1992, %v1993
      %v1995 = vrot.slane %v1663, 5
      %v1996 = vrot.slane %v1995, 4
      %v1997 = vrot.slane %v1664, 5
      %v1998 = vsel %vm710, %v1996, %v1997
      %v1999 = vrot.slane %v1997, 4
      %v2000 = vrot.slane %v1665, 5
      %v2001 = vsel %vm710, %v1999, %v2000
      %v2002 = vrot.slane %v1666, 5
      %v2003 = vrot.slane %v2002, 4
      %v2004 = vrot.slane %v1667, 5
      %v2005 = vsel %vm710, %v2003, %v2004
      %v2006 = vrot.slane %v2004, 4
      %v2007 = vrot.slane %v1668, 5
      %v2008 = vsel %vm710, %v2006, %v2007
      %v2009 = vrot.slane %v1669, 5
      %v2010 = vrot.slane %v2009, 4
      %v2011 = vrot.slane %v1670, 5
      %v2012 = vsel %vm710, %v2010, %v2011
      %v2013 = vrot.slane %v2011, 4
      %v2014 = vrot.slane %v1671, 5
      %v2015 = vsel %vm710, %v2013, %v2014
      %v2016 = vrot.slane %v1672, 5
      %v2017 = vrot.slane %v2016, 4
      %v2018 = vrot.slane %v1673, 5
      %v2019 = vsel %vm710, %v2017, %v2018
      %v2020 = vrot.slane %v2018, 4
      %v2021 = vrot.slane %v1674, 5
      %v2022 = vsel %vm710, %v2020, %v2021
      %v2023 = vrot.slane %v1675, 5
      %v2024 = vrot.slane %v2023, 4
      %v2025 = vrot.slane %v1676, 5
      %v2026 = vsel %vm710, %v2024, %v2025
      %v2027 = vrot.slane %v2025, 4
      %v2028 = vrot.slane %v1677, 5
      %v2029 = vsel %vm710, %v2027, %v2028
      %2030 = vrot.lane.b32.xlu0 %v1977, 6
      %v2031 = vpop.permute.xlu0 %2030
      %2032 = vrot.lane.b32.xlu0 %v1980, 6
      %v2033 = vpop.permute.xlu0 %2032
      %2034 = vrot.lane.b32.xlu0 %v1984, 6
      %v2035 = vpop.permute.xlu0 %2034
      %2036 = vrot.lane.b32.xlu0 %v1987, 6
      %v2037 = vpop.permute.xlu0 %2036
      %2038 = vrot.lane.b32.xlu0 %v1991, 6
      %v2039 = vpop.permute.xlu0 %2038
      %2040 = vrot.lane.b32.xlu0 %v1994, 6
      %v2041 = vpop.permute.xlu0 %2040
      %2042 = vrot.lane.b32.xlu0 %v1998, 6
      %v2043 = vpop.permute.xlu0 %2042
      %2044 = vrot.lane.b32.xlu0 %v2001, 6
      %v2045 = vpop.permute.xlu0 %2044
      %2046 = vrot.lane.b32.xlu0 %v2005, 6
      %v2047 = vpop.permute.xlu0 %2046
      %2048 = vrot.lane.b32.xlu0 %v2008, 6
      %v2049 = vpop.permute.xlu0 %2048
      %2050 = vrot.lane.b32.xlu0 %v2012, 6
      %v2051 = vpop.permute.xlu0 %2050
      %2052 = vrot.lane.b32.xlu0 %v2015, 6
      %v2053 = vpop.permute.xlu0 %2052
      %2054 = vrot.lane.b32.xlu0 %v2019, 6
      %v2055 = vpop.permute.xlu0 %2054
      %2056 = vrot.lane.b32.xlu0 %v2022, 6
      %v2057 = vpop.permute.xlu0 %2056
      %2058 = vrot.lane.b32.xlu0 %v2026, 6
      %v2059 = vpop.permute.xlu0 %2058
      %2060 = vrot.lane.b32.xlu0 %v2029, 6
      %v2061 = vpop.permute.xlu0 %2060
      %2078 = vst.msk [vmem:[#allocation3] sm:$0xf] %vm815, %v2031
      %2079 = vst.msk [vmem:[#allocation3 + $0x4] sm:$0xf] %vm815, %v2033
      %2080 = vst.msk [vmem:[#allocation3 + $0x8] sm:$0xf] %vm815, %v2035
      %2081 = vst.msk [vmem:[#allocation3 + $0xc] sm:$0xf] %vm815, %v2037
      %2082 = vst.msk [vmem:[#allocation3 + $0x10] sm:$0xf] %vm815, %v2039
      %2083 = vst.msk [vmem:[#allocation3 + $0x14] sm:$0xf] %vm815, %v2041
      %2084 = vst.msk [vmem:[#allocation3 + $0x18] sm:$0xf] %vm815, %v2043
      %2085 = vst.msk [vmem:[#allocation3 + $0x1c] sm:$0xf] %vm815, %v2045
      %2086 = vst.msk [vmem:[#allocation3 + $0x20] sm:$0xf] %vm815, %v2047
      %2087 = vst.msk [vmem:[#allocation3 + $0x24] sm:$0xf] %vm815, %v2049
      %2088 = vst.msk [vmem:[#allocation3 + $0x28] sm:$0xf] %vm815, %v2051
      %2089 = vst.msk [vmem:[#allocation3 + $0x2c] sm:$0xf] %vm815, %v2053
      %2090 = vst.msk [vmem:[#allocation3 + $0x30] sm:$0xf] %vm815, %v2055
      %2091 = vst.msk [vmem:[#allocation3 + $0x34] sm:$0xf] %vm815, %v2057
      %2092 = vst.msk [vmem:[#allocation3 + $0x38] sm:$0xf] %vm815, %v2059
      %2093 = vst.msk [vmem:[#allocation3 + $0x3c] sm:$0xf] %vm815, %v2061
      %v2094 = vld [vmem:[#allocation3] sm:$0xf]
      %v2095 = vld [vmem:[#allocation3 + $0x4] sm:$0xf]
      %v2096 = vld [vmem:[#allocation3 + $0x8] sm:$0xf]
      %v2097 = vld [vmem:[#allocation3 + $0xc] sm:$0xf]
      %v2098 = vld [vmem:[#allocation3 + $0x10] sm:$0xf]
      %v2099 = vld [vmem:[#allocation3 + $0x14] sm:$0xf]
      %v2100 = vld [vmem:[#allocation3 + $0x18] sm:$0xf]
      %v2101 = vld [vmem:[#allocation3 + $0x1c] sm:$0xf]
      %v2102 = vld [vmem:[#allocation3 + $0x20] sm:$0xf]
      %v2103 = vld [vmem:[#allocation3 + $0x24] sm:$0xf]
      %v2104 = vld [vmem:[#allocation3 + $0x28] sm:$0xf]
      %v2105 = vld [vmem:[#allocation3 + $0x2c] sm:$0xf]
      %v2106 = vld [vmem:[#allocation3 + $0x30] sm:$0xf]
      %v2107 = vld [vmem:[#allocation3 + $0x34] sm:$0xf]
      %v2108 = vld [vmem:[#allocation3 + $0x38] sm:$0xf]
      %v2109 = vld [vmem:[#allocation3 + $0x3c] sm:$0xf]
      %s2110 = scalar_lea.vmem %s2, 16
      %v2111 = vld [vmem:[%s2110] sm:$0xf]
      %v2112 = vld [vmem:[%s2110 + $0x4] sm:$0x1]
      %v2129 = vunpack.c.l.b16 %v2094
      %v2130 = vunpack.c.l.b16 %v2095
      %v2131 = vunpack.c.l.b16 %v2096
      %v2132 = vunpack.c.l.b16 %v2097
      %v2133 = vunpack.c.l.b16 %v2098
      %v2134 = vunpack.c.l.b16 %v2099
      %v2135 = vunpack.c.l.b16 %v2100
      %v2136 = vunpack.c.l.b16 %v2101
      %v2137 = vunpack.c.l.b16 %v2102
      %v2138 = vunpack.c.l.b16 %v2103
      %v2139 = vunpack.c.l.b16 %v2104
      %v2140 = vunpack.c.l.b16 %v2105
      %v2141 = vunpack.c.l.b16 %v2106
      %v2142 = vunpack.c.l.b16 %v2107
      %v2143 = vunpack.c.l.b16 %v2108
      %v2144 = vunpack.c.l.b16 %v2109
      %v2145 = vpack.c.b16 %v2130, %v2129
      %v2146 = vpack.c.b16 %v2132, %v2131
      %v2147 = vpack.c.b16 %v2134, %v2133
      %v2148 = vpack.c.b16 %v2136, %v2135
      %v2149 = vpack.c.b16 %v2138, %v2137
      %v2150 = vpack.c.b16 %v2140, %v2139
      %v2151 = vpack.c.b16 %v2142, %v2141
      %v2152 = vpack.c.b16 %v2144, %v2143
      %v2155 = vunpack.c.l.b16 %v2111
      %v2156 = vunpack.c.l.b16 %v2112
      %v2157 = vpack.c.b16 %v2156, %v2155
      %v2159 = vsel %vm1355, %v2145, 0
      %v2162 = vsel %vm1355, %v2146, 0
      %v2165 = vsel %vm1355, %v2147, 0
      %v2168 = vsel %vm1355, %v2148, 0
      %v2171 = vsel %vm1355, %v2149, 0
      %v2174 = vsel %vm1355, %v2150, 0
      %v2177 = vsel %vm1355, %v2151, 0
      %v2180 = vsel %vm1355, %v2152, 0
      %v2183 = vand.u32 %v2157, %v1383
      %2185 = vmatprep.subr.bf16.mxu0 0
      %2186 = vmatpush1.bf16.msra.mxu0 0
      %2187 = vmatprep.subr.bf16.mxu0 0
      %2188 = vmatpush1.bf16.msra.mxu0 0
      %2189 = vmatprep.subr.bf16.mxu0 0
      %2190 = vmatpush1.bf16.msra.mxu0 0
      %2191 = vmatprep.subr.bf16.mxu0 0
      %2192 = vmatpush1.bf16.msra.mxu0 0
      %2193 = vmatprep.subr.bf16.mxu0 0
      %2194 = vmatpush1.bf16.msra.mxu0 0
      %2195 = vmatprep.subr.bf16.mxu0 0
      %2196 = vmatpush1.bf16.msra.mxu0 0
      %2197 = vmatprep.subr.bf16.mxu0 0
      %2198 = vmatpush1.bf16.msra.mxu0 0
      %2199 = vmatprep.subr.bf16.mxu0 0
      %2200 = vmatpush1.bf16.msra.mxu0 %v2183
      %2201 = vmatprep.subr.bf16.mxu0 0
      %2202 = vmatpush2.bf16.msra.mxu0 0
      %2203 = vmatprep.subr.bf16.mxu0 0
      %2204 = vmatpush2.bf16.msra.mxu0 0
      %2205 = vmatprep.subr.bf16.mxu0 0
      %2206 = vmatpush2.bf16.msra.mxu0 0
      %2207 = vmatprep.subr.bf16.mxu0 0
      %2208 = vmatpush2.bf16.msra.mxu0 0
      %2209 = vmatprep.subr.bf16.mxu0 0
      %2210 = vmatpush2.bf16.msra.mxu0 0
      %2211 = vmatprep.subr.bf16.mxu0 0
      %2212 = vmatpush2.bf16.msra.mxu0 0
      %2213 = vmatprep.subr.bf16.mxu0 0
      %2214 = vmatpush2.bf16.msra.mxu0 0
      %2215 = vmatprep.subr.bf16.mxu0 0
      %2216 = vmatpush2.bf16.msra.mxu0 0
      %2217 = vmatprep.mubr.bf16.mxu0 0
      %2218 = vmatmul.mubr.bf16.gmra.mxu0 %v2159
      %v2219 = vpop.f32.mrf.mxu0
      %v2220 = vadd.f32 0.0, %v2219
      %v2221 = vpop.f32.mrf.mxu0
      %v2222 = vpop.f32.mrf.mxu0
      %v2223 = vadd.f32 0.0, %v2222
      %v2224 = vpop.f32.mrf.mxu0
      %2225 = vmatprep.mubr.bf16.mxu0 0
      %2226 = vmatmul.mubr.bf16.gmra.mxu0 %v2162
      %v2227 = vpop.f32.mrf.mxu0
      %v2228 = vadd.f32 0.0, %v2227
      %v2229 = vpop.f32.mrf.mxu0
      %v2230 = vpop.f32.mrf.mxu0
      %v2231 = vadd.f32 0.0, %v2230
      %v2232 = vpop.f32.mrf.mxu0
      %2233 = vmatprep.mubr.bf16.mxu0 0
      %2234 = vmatmul.mubr.bf16.gmra.mxu0 %v2165
      %v2235 = vpop.f32.mrf.mxu0
      %v2236 = vadd.f32 0.0, %v2235
      %v2237 = vpop.f32.mrf.mxu0
      %v2238 = vpop.f32.mrf.mxu0
      %v2239 = vadd.f32 0.0, %v2238
      %v2240 = vpop.f32.mrf.mxu0
      %2241 = vmatprep.mubr.bf16.mxu0 0
      %2242 = vmatmul.mubr.bf16.gmra.mxu0 %v2168
      %v2243 = vpop.f32.mrf.mxu0
      %v2244 = vadd.f32 0.0, %v2243
      %v2245 = vpop.f32.mrf.mxu0
      %v2246 = vpop.f32.mrf.mxu0
      %v2247 = vadd.f32 0.0, %v2246
      %v2248 = vpop.f32.mrf.mxu0
      %2249 = vmatprep.mubr.bf16.mxu0 0
      %2250 = vmatmul.mubr.bf16.gmra.mxu0 %v2171
      %v2251 = vpop.f32.mrf.mxu0
      %v2252 = vadd.f32 0.0, %v2251
      %v2253 = vpop.f32.mrf.mxu0
      %v2254 = vpop.f32.mrf.mxu0
      %v2255 = vadd.f32 0.0, %v2254
      %v2256 = vpop.f32.mrf.mxu0
      %2257 = vmatprep.mubr.bf16.mxu0 0
      %2258 = vmatmul.mubr.bf16.gmra.mxu0 %v2174
      %v2259 = vpop.f32.mrf.mxu0
      %v2260 = vadd.f32 0.0, %v2259
      %v2261 = vpop.f32.mrf.mxu0
      %v2262 = vpop.f32.mrf.mxu0
      %v2263 = vadd.f32 0.0, %v2262
      %v2264 = vpop.f32.mrf.mxu0
      %2265 = vmatprep.mubr.bf16.mxu0 0
      %2266 = vmatmul.mubr.bf16.gmra.mxu0 %v2177
      %v2267 = vpop.f32.mrf.mxu0
      %v2268 = vadd.f32 0.0, %v2267
      %v2269 = vpop.f32.mrf.mxu0
      %v2270 = vpop.f32.mrf.mxu0
      %v2271 = vadd.f32 0.0, %v2270
      %v2272 = vpop.f32.mrf.mxu0
      %2273 = vmatprep.mubr.bf16.mxu0 0
      %2274 = vmatmul.mubr.bf16.gmra.mxu0 %v2180
      %v2275 = vpop.f32.mrf.mxu0
      %v2276 = vadd.f32 0.0, %v2275
      %v2277 = vpop.f32.mrf.mxu0
      %v2278 = vpop.f32.mrf.mxu0
      %v2279 = vadd.f32 0.0, %v2278
      %v2280 = vpop.f32.mrf.mxu0
      %2281 = vdwg.mxu0
      %v2282 = vadd.f32 %v1591, %v2220
      %v2283 = vadd.f32 %v1594, %v2223
      %v2284 = vadd.f32 %v1599, %v2228
      %v2285 = vadd.f32 %v1602, %v2231
      %v2286 = vadd.f32 %v1607, %v2236
      %v2287 = vadd.f32 %v1610, %v2239
      %v2288 = vadd.f32 %v1615, %v2244
      %v2289 = vadd.f32 %v1618, %v2247
      %v2290 = vadd.f32 %v1623, %v2252
      %v2291 = vadd.f32 %v1626, %v2255
      %v2292 = vadd.f32 %v1631, %v2260
      %v2293 = vadd.f32 %v1634, %v2263
      %v2294 = vadd.f32 %v1639, %v2268
      %v2295 = vadd.f32 %v1642, %v2271
      %v2296 = vadd.f32 %v1647, %v2276
      %v2297 = vadd.f32 %v1650, %v2279
      %v2298 = vld [vmem:[%s3] sm:$0x1]
      %v2300 = vlaneseq
      %v2301 = vshrl.u32 %v2300, 7
      %v2302 = vsub.s32 0, %v2301
      %v2303 = vrot.slane %v2298, %v2302
      %v2305 = vadd.f32 %v2282, %v2303
      %v2306 = vadd.f32 %v2283, %v2303
      %v2307 = vadd.f32 %v2284, %v2303
      %v2308 = vadd.f32 %v2285, %v2303
      %v2309 = vadd.f32 %v2286, %v2303
      %v2310 = vadd.f32 %v2287, %v2303
      %v2311 = vadd.f32 %v2288, %v2303
      %v2312 = vadd.f32 %v2289, %v2303
      %v2313 = vadd.f32 %v2290, %v2303
      %v2314 = vadd.f32 %v2291, %v2303
      %v2315 = vadd.f32 %v2292, %v2303
      %v2316 = vadd.f32 %v2293, %v2303
      %v2317 = vadd.f32 %v2294, %v2303
      %v2318 = vadd.f32 %v2295, %v2303
      %v2319 = vadd.f32 %v2296, %v2303
      %v2320 = vadd.f32 %v2297, %v2303
      %v2321 = vmax.f32 %v2305, 0.0
      %v2322 = vmax.f32 %v2306, 0.0
      %v2323 = vmax.f32 %v2307, 0.0
      %v2324 = vmax.f32 %v2308, 0.0
      %v2325 = vmax.f32 %v2309, 0.0
      %v2326 = vmax.f32 %v2310, 0.0
      %v2327 = vmax.f32 %v2311, 0.0
      %v2328 = vmax.f32 %v2312, 0.0
      %v2329 = vmax.f32 %v2313, 0.0
      %v2330 = vmax.f32 %v2314, 0.0
      %v2331 = vmax.f32 %v2315, 0.0
      %v2332 = vmax.f32 %v2316, 0.0
      %v2333 = vmax.f32 %v2317, 0.0
      %v2334 = vmax.f32 %v2318, 0.0
      %v2335 = vmax.f32 %v2319, 0.0
      %v2336 = vmax.f32 %v2320, 0.0
      %v2337 = vmax.f32 %v2321, %v2323
      %v2338 = vmax.f32 %v2322, %v2324
      %v2339 = vmax.f32 %v2325, %v2327
      %v2340 = vmax.f32 %v2326, %v2328
      %v2341 = vmax.f32 %v2329, %v2331
      %v2342 = vmax.f32 %v2330, %v2332
      %v2343 = vmax.f32 %v2333, %v2335
      %v2344 = vmax.f32 %v2334, %v2336
      %v2345 = vpack.c.bf16 %v2338, %v2337
      %v2346 = vpack.c.bf16 %v2340, %v2339
      %v2347 = vpack.c.bf16 %v2342, %v2341
      %v2348 = vpack.c.bf16 %v2344, %v2343
      %v2353 = vunpack.c.l.b16 %v2345
      %v2354 = vunpack.c.h.b16 %v2345
      %v2355 = vunpack.c.l.b16 %v2346
      %v2356 = vunpack.c.h.b16 %v2346
      %v2357 = vunpack.c.l.b16 %v2347
      %v2358 = vunpack.c.h.b16 %v2347
      %v2359 = vunpack.c.l.b16 %v2348
      %v2360 = vunpack.c.h.b16 %v2348
      %v2361 = vpack.c.b16 %v2353, %v2353
      %v2362 = vpack.c.b16 %v2354, %v2354
      %v2363 = vpack.c.b16 %v2355, %v2355
      %v2364 = vpack.c.b16 %v2356, %v2356
      %v2365 = vpack.c.b16 %v2357, %v2357
      %v2366 = vpack.c.b16 %v2358, %v2358
      %v2367 = vpack.c.b16 %v2359, %v2359
      %v2368 = vpack.c.b16 %v2360, %v2360
      %vm2377 = vcmask 60416
      %2378 = vst.msk [vmem:[%s318] sm:$0xf] %vm2377, %v2361
      %2379 = vst.msk [vmem:[%s318 + $0x4] sm:$0xf] %vm2377, %v2362
      %2380 = vst.msk [vmem:[%s318 + $0x8] sm:$0xf] %vm2377, %v2363
      %2381 = vst.msk [vmem:[%s318 + $0xc] sm:$0xf] %vm2377, %v2364
      %2382 = vst.msk [vmem:[%s318 + $0x10] sm:$0xf] %vm2377, %v2365
      %2383 = vst.msk [vmem:[%s318 + $0x14] sm:$0xf] %vm2377, %v2366
      %2384 = vst.msk [vmem:[%s318 + $0x18] sm:$0xf] %vm2377, %v2367
      %2385 = vst.msk [vmem:[%s318 + $0x1c] sm:$0xf] %vm2377, %v2368
      %s2386 = smul.u32 4, %s20
      %p2387 = scmp.lt.s32.totalorder %s19, 1
      %s2388 = scalar_select %p2387, %s19, 1
      %p2389 = scmp.lt.s32.totalorder %s2386, 7
      %s2390 = scalar_select %p2389, %s2386, 7
      %s2391 = smul.addr %s2390, 2
      %s2392 = smul.addr %s2388, 16
      %s2393 = sadd.s32 %s2391, %s2392
      %s2394 = smul.addr %s2393, 4
      %s2395 = scalar_lea.vmem %s4, %s2394
      // Predicated region
      $region37: #{vgg_forward.7} parent=35 // pred_check
        %p2396 = pneg %p149
      $region38: #{vgg_forward.7} parent=35 // pred_check_branch
        %2398 = sbr.rel (%p2396) target = $region40
      $region39: #{vgg_forward.7} parent=35 // pred_region
        %s2399 = smul.u32 4, %s20
      $region40: #{vgg_forward.7} parent=35 // pred_fallthru
        _
    $region36: #{vgg_forward.7} parent=5 // pred_fallthru
      _
    %p2400 = scmp.le.s32.totalorder 2, %s10
    // Predicated region
    $region41: #{vgg_forward.7} parent=5 // pred_check
      %p2401 = pneg %p2400
    $region42: #{vgg_forward.7} parent=5 // pred_check_branch
      %2403 = sbr.rel (%p2401) target = $region44
    $region43: #{vgg_forward.7} parent=5 // pred_region
      %s2404 = ssub.s32 %s10, 2
      // Predicated region
      $region45: #{vgg_forward.7} parent=43 // pred_check
        %p2405 = pneg %p155
      $region46: #{vgg_forward.7} parent=43 // pred_check_branch
        %2407 = sbr.rel (%p2405) target = $region48
      $region47: #{vgg_forward.7} parent=43 // pred_region
        %s2408 = smul.u32 4, %s22
        %p2409 = scmp.lt.s32.totalorder %s21, 1
        %s2410 = scalar_select %p2409, %s21, 1
        %p2411 = scmp.lt.s32.totalorder %s2408, 7
        %s2412 = scalar_select %p2411, %s2408, 7
        %s2413 = smul.addr %s2412, 2
        %s2414 = smul.addr %s2410, 16
        %s2415 = sadd.s32 %s2413, %s2414
        %s2416 = smul.addr %s2415, 4
        %s2417 = scalar_lea.vmem %s4, %s2416
      $region48: #{vgg_forward.7} parent=43 // pred_fallthru
        _
    $region44: #{vgg_forward.7} parent=5 // pred_fallthru
      _
  $region6: #{vgg_forward.7} parent=0 // loop_footer
    %s14 = sadd.s32 1, %s10
  $region7: #{vgg_forward.7} parent=0 // loop_footer_branch
    %9 = sbr.rel target = $region3
  $region8: #{vgg_forward.7} parent=0 // loop_exit
    _

// kernel: vgg_forward.12
$region0: #{vgg_forward.12}
  #allocation0 [shape = 'u32[]', space=smem, size = 0x4, offset = 0x4, fixed_abs, tag = 'smem constant byte address 0x4 - core index']
  #allocation1 [shape = 'u32[144,128]{1,0:T(1,128)}', space=vmem, size = 0x12000, scoped, tag = 'internal scratch']
  %s0 = inlined_call_operand.vmem [shape: bf16[16,128], index: 0, kind: input, shape index: {}]
  %s1 = inlined_call_operand.vmem [shape: bf16[128,128], index: 1, kind: input, shape index: {}]
  %s2 = inlined_call_operand.vmem [shape: f32[1,128], index: 2, kind: input, shape index: {}]
  %s3 = inlined_call_operand.vmem [shape: bf16[16,128], index: 3, kind: output, shape index: {}]
  %s4 = sld [smem:[#allocation0]]
  $region22: #{vgg_forward.12} parent=0
    _
  %s6 = ssub.s32 1, %s4
  %s7 = scalar_select 0, %s6, %s4
  // Predicated region
  $region2: #{vgg_forward.12} parent=0 // pred_check
    _
  $region3: #{vgg_forward.12} parent=0 // pred_check_branch
    %9 = sbr.rel (0) target = $region5
  $region4: #{vgg_forward.12} parent=0 // pred_region
    _
  $region5: #{vgg_forward.12} parent=0 // pred_fallthru
    _
  // Predicated region
  $region6: #{vgg_forward.12} parent=0 // pred_check
    _
  $region7: #{vgg_forward.12} parent=0 // pred_check_branch
    %11 = sbr.rel (0) target = $region9
  $region8: #{vgg_forward.12} parent=0 // pred_region
    _
  $region9: #{vgg_forward.12} parent=0 // pred_fallthru
    _
  // Predicated region
  $region10: #{vgg_forward.12} parent=0 // pred_check
    _
  $region11: #{vgg_forward.12} parent=0 // pred_check_branch
    %13 = sbr.rel (0) target = $region13
  $region12: #{vgg_forward.12} parent=0 // pred_region
    _
  $region13: #{vgg_forward.12} parent=0 // pred_fallthru
    _
  %v15 = vld [vmem:[%s0] sm:$0xf]
  %v16 = vld [vmem:[%s0 + $0x4] sm:$0xf]
  %v17 = vld [vmem:[%s1] sm:$0xf]
  %v18 = vld [vmem:[%s1 + $0x4] sm:$0xf]
  %v19 = vld [vmem:[%s1 + $0x8] sm:$0xf]
  %v20 = vld [vmem:[%s1 + $0xc] sm:$0xf]
  %v21 = vld [vmem:[%s1 + $0x10] sm:$0xf]
  %v22 = vld [vmem:[%s1 + $0x14] sm:$0xf]
  %v23 = vld [vmem:[%s1 + $0x18] sm:$0xf]
  %v24 = vld [vmem:[%s1 + $0x1c] sm:$0xf]
  %v25 = vld [vmem:[%s1 + $0x20] sm:$0xf]
  %v26 = vld [vmem:[%s1 + $0x24] sm:$0xf]
  %v27 = vld [vmem:[%s1 + $0x28] sm:$0xf]
  %v28 = vld [vmem:[%s1 + $0x2c] sm:$0xf]
  %v29 = vld [vmem:[%s1 + $0x30] sm:$0xf]
  %v30 = vld [vmem:[%s1 + $0x34] sm:$0xf]
  %v31 = vld [vmem:[%s1 + $0x38] sm:$0xf]
  %v32 = vld [vmem:[%s1 + $0x3c] sm:$0xf]
  %v33 = vld [vmem:[%s2] sm:$0x1]
  %v35 = vlaneseq
  %v36 = vshrl.u32 %v35, 7
  %v37 = vsub.s32 0, %v36
  %v38 = vrot.slane %v33, %v37
  %v42 = vunpack.c.l.b16 %v15
  %v43 = vunpack.c.l.b16 %v16
  %v44 = vpack.c.b16 %v43, %v42
  %v62 = vunpack.c.l.b16 %v17
  %v63 = vunpack.c.l.b16 %v18
  %v64 = vunpack.c.l.b16 %v19
  %v65 = vunpack.c.l.b16 %v20
  %v66 = vunpack.c.l.b16 %v21
  %v67 = vunpack.c.l.b16 %v22
  %v68 = vunpack.c.l.b16 %v23
  %v69 = vunpack.c.l.b16 %v24
  %v70 = vunpack.c.l.b16 %v25
  %v71 = vunpack.c.l.b16 %v26
  %v72 = vunpack.c.l.b16 %v27
  %v73 = vunpack.c.l.b16 %v28
  %v74 = vunpack.c.l.b16 %v29
  %v75 = vunpack.c.l.b16 %v30
  %v76 = vunpack.c.l.b16 %v31
  %v77 = vunpack.c.l.b16 %v32
  %v78 = vpack.c.b16 %v63, %v62
  %v79 = vpack.c.b16 %v65, %v64
  %v80 = vpack.c.b16 %v67, %v66
  %v81 = vpack.c.b16 %v69, %v68
  %v82 = vpack.c.b16 %v71, %v70
  %v83 = vpack.c.b16 %v73, %v72
  %v84 = vpack.c.b16 %v75, %v74
  %v85 = vpack.c.b16 %v77, %v76
  %94 = vmatprep.subr.bf16.mxu0 0
  %95 = vmatpush1.bf16.msra.mxu0 %v85
  %96 = vmatprep.subr.bf16.mxu0 0
  %97 = vmatpush1.bf16.msra.mxu0 %v84
  %98 = vmatprep.subr.bf16.mxu0 0
  %99 = vmatpush1.bf16.msra.mxu0 %v83
  %100 = vmatprep.subr.bf16.mxu0 0
  %101 = vmatpush1.bf16.msra.mxu0 %v82
  %102 = vmatprep.subr.bf16.mxu0 0
  %103 = vmatpush1.bf16.msra.mxu0 %v81
  %104 = vmatprep.subr.bf16.mxu0 0
  %105 = vmatpush1.bf16.msra.mxu0 %v80
  %106 = vmatprep.subr.bf16.mxu0 0
  %107 = vmatpush1.bf16.msra.mxu0 %v79
  %108 = vmatprep.subr.bf16.mxu0 0
  %109 = vmatpush1.bf16.msra.mxu0 %v78
  %110 = vmatprep.subr.bf16.mxu0 0
  %111 = vmatpush2.bf16.msra.mxu0 0
  %112 = vmatprep.subr.bf16.mxu0 0
  %113 = vmatpush2.bf16.msra.mxu0 0
  %114 = vmatprep.subr.bf16.mxu0 0
  %115 = vmatpush2.bf16.msra.mxu0 0
  %116 = vmatprep.subr.bf16.mxu0 0
  %117 = vmatpush2.bf16.msra.mxu0 0
  %118 = vmatprep.subr.bf16.mxu0 0
  %119 = vmatpush2.bf16.msra.mxu0 0
  %120 = vmatprep.subr.bf16.mxu0 0
  %121 = vmatpush2.bf16.msra.mxu0 0
  %122 = vmatprep.subr.bf16.mxu0 0
  %123 = vmatpush2.bf16.msra.mxu0 0
  %124 = vmatprep.subr.bf16.mxu0 0
  %125 = vmatpush2.bf16.msra.mxu0 0
  %126 = vmatprep.mubr.bf16.mxu0 0
  %127 = vmatmul.mubr.bf16.gmra.mxu0 %v44
  %v128 = vpop.f32.mrf.mxu0
  %v129 = vadd.f32 %v38, %v128
  %v130 = vpop.f32.mrf.mxu0
  %v131 = vpop.f32.mrf.mxu0
  %v132 = vadd.f32 %v38, %v131
  %v133 = vpop.f32.mrf.mxu0
  %134 = vdwg.mxu0
  %v135 = vmax.f32 %v129, 0.0
  %v136 = vmax.f32 %v132, 0.0
  %v137 = vpack.c.bf16 %v136, %v135
  %v139 = vunpack.c.l.b16 %v137
  %v140 = vunpack.c.h.b16 %v137
  %v141 = vpack.c.b16 %v139, %v139
  %v142 = vpack.c.b16 %v140, %v140
  %145 = vst [vmem:[%s3] sm:$0xf] %v141
  %146 = vst [vmem:[%s3 + $0x4] sm:$0xf] %v142
  // Predicated region
  $region14: #{vgg_forward.12} parent=0 // pred_check
    _
  $region15: #{vgg_forward.12} parent=0 // pred_check_branch
    %148 = sbr.rel (0) target = $region17
  $region16: #{vgg_forward.12} parent=0 // pred_region
    _
  $region17: #{vgg_forward.12} parent=0 // pred_fallthru
    _
  // Predicated region
  $region18: #{vgg_forward.12} parent=0 // pred_check
    _
  $region19: #{vgg_forward.12} parent=0 // pred_check_branch
    %150 = sbr.rel (0) target = $region21
  $region20: #{vgg_forward.12} parent=0 // pred_region
    _
  $region21: #{vgg_forward.12} parent=0 // pred_fallthru
    _

// kernel: vgg_forward.13
$region0: #{vgg_forward.13}
  #allocation0 [shape = 'u32[]', space=smem, size = 0x4, offset = 0x4, fixed_abs, tag = 'smem constant byte address 0x4 - core index']
  #allocation1 [shape = 'u32[144,128]{1,0:T(1,128)}', space=vmem, size = 0x12000, scoped, tag = 'internal scratch']
  %s0 = inlined_call_operand.vmem [shape: bf16[16,128], index: 0, kind: input, shape index: {}]
  %s1 = inlined_call_operand.vmem [shape: bf16[128,128], index: 1, kind: input, shape index: {}]
  %s2 = inlined_call_operand.vmem [shape: f32[1,128], index: 2, kind: input, shape index: {}]
  %s3 = inlined_call_operand.vmem [shape: f32[16,128], index: 3, kind: output, shape index: {}]
  %s4 = sld [smem:[#allocation0]]
  $region22: #{vgg_forward.13} parent=0
    _
  %s6 = ssub.s32 1, %s4
  %s7 = scalar_select 0, %s6, %s4
  // Predicated region
  $region2: #{vgg_forward.13} parent=0 // pred_check
    _
  $region3: #{vgg_forward.13} parent=0 // pred_check_branch
    %9 = sbr.rel (0) target = $region5
  $region4: #{vgg_forward.13} parent=0 // pred_region
    _
  $region5: #{vgg_forward.13} parent=0 // pred_fallthru
    _
  // Predicated region
  $region6: #{vgg_forward.13} parent=0 // pred_check
    _
  $region7: #{vgg_forward.13} parent=0 // pred_check_branch
    %11 = sbr.rel (0) target = $region9
  $region8: #{vgg_forward.13} parent=0 // pred_region
    _
  $region9: #{vgg_forward.13} parent=0 // pred_fallthru
    _
  // Predicated region
  $region10: #{vgg_forward.13} parent=0 // pred_check
    _
  $region11: #{vgg_forward.13} parent=0 // pred_check_branch
    %13 = sbr.rel (0) target = $region13
  $region12: #{vgg_forward.13} parent=0 // pred_region
    _
  $region13: #{vgg_forward.13} parent=0 // pred_fallthru
    _
  %v15 = vld [vmem:[%s0] sm:$0xf]
  %v16 = vld [vmem:[%s0 + $0x4] sm:$0xf]
  %v17 = vld [vmem:[%s1] sm:$0xf]
  %v18 = vld [vmem:[%s1 + $0x4] sm:$0xf]
  %v19 = vld [vmem:[%s1 + $0x8] sm:$0xf]
  %v20 = vld [vmem:[%s1 + $0xc] sm:$0xf]
  %v21 = vld [vmem:[%s1 + $0x10] sm:$0xf]
  %v22 = vld [vmem:[%s1 + $0x14] sm:$0xf]
  %v23 = vld [vmem:[%s1 + $0x18] sm:$0xf]
  %v24 = vld [vmem:[%s1 + $0x1c] sm:$0xf]
  %v25 = vld [vmem:[%s1 + $0x20] sm:$0xf]
  %v26 = vld [vmem:[%s1 + $0x24] sm:$0xf]
  %v27 = vld [vmem:[%s1 + $0x28] sm:$0xf]
  %v28 = vld [vmem:[%s1 + $0x2c] sm:$0xf]
  %v29 = vld [vmem:[%s1 + $0x30] sm:$0xf]
  %v30 = vld [vmem:[%s1 + $0x34] sm:$0xf]
  %v31 = vld [vmem:[%s1 + $0x38] sm:$0xf]
  %v32 = vld [vmem:[%s1 + $0x3c] sm:$0xf]
  %v33 = vld [vmem:[%s2] sm:$0x1]
  %v35 = vlaneseq
  %v36 = vshrl.u32 %v35, 7
  %v37 = vsub.s32 0, %v36
  %v38 = vrot.slane %v33, %v37
  %v42 = vunpack.c.l.b16 %v15
  %v43 = vunpack.c.l.b16 %v16
  %v44 = vpack.c.b16 %v43, %v42
  %v62 = vunpack.c.l.b16 %v17
  %v63 = vunpack.c.l.b16 %v18
  %v64 = vunpack.c.l.b16 %v19
  %v65 = vunpack.c.l.b16 %v20
  %v66 = vunpack.c.l.b16 %v21
  %v67 = vunpack.c.l.b16 %v22
  %v68 = vunpack.c.l.b16 %v23
  %v69 = vunpack.c.l.b16 %v24
  %v70 = vunpack.c.l.b16 %v25
  %v71 = vunpack.c.l.b16 %v26
  %v72 = vunpack.c.l.b16 %v27
  %v73 = vunpack.c.l.b16 %v28
  %v74 = vunpack.c.l.b16 %v29
  %v75 = vunpack.c.l.b16 %v30
  %v76 = vunpack.c.l.b16 %v31
  %v77 = vunpack.c.l.b16 %v32
  %v78 = vpack.c.b16 %v63, %v62
  %v79 = vpack.c.b16 %v65, %v64
  %v80 = vpack.c.b16 %v67, %v66
  %v81 = vpack.c.b16 %v69, %v68
  %v82 = vpack.c.b16 %v71, %v70
  %v83 = vpack.c.b16 %v73, %v72
  %v84 = vpack.c.b16 %v75, %v74
  %v85 = vpack.c.b16 %v77, %v76
  %94 = vmatprep.subr.bf16.mxu0 0
  %95 = vmatpush1.bf16.msra.mxu0 %v85
  %96 = vmatprep.subr.bf16.mxu0 0
  %97 = vmatpush1.bf16.msra.mxu0 %v84
  %98 = vmatprep.subr.bf16.mxu0 0
  %99 = vmatpush1.bf16.msra.mxu0 %v83
  %100 = vmatprep.subr.bf16.mxu0 0
  %101 = vmatpush1.bf16.msra.mxu0 %v82
  %102 = vmatprep.subr.bf16.mxu0 0
  %103 = vmatpush1.bf16.msra.mxu0 %v81
  %104 = vmatprep.subr.bf16.mxu0 0
  %105 = vmatpush1.bf16.msra.mxu0 %v80
  %106 = vmatprep.subr.bf16.mxu0 0
  %107 = vmatpush1.bf16.msra.mxu0 %v79
  %108 = vmatprep.subr.bf16.mxu0 0
  %109 = vmatpush1.bf16.msra.mxu0 %v78
  %110 = vmatprep.subr.bf16.mxu0 0
  %111 = vmatpush2.bf16.msra.mxu0 0
  %112 = vmatprep.subr.bf16.mxu0 0
  %113 = vmatpush2.bf16.msra.mxu0 0
  %114 = vmatprep.subr.bf16.mxu0 0
  %115 = vmatpush2.bf16.msra.mxu0 0
  %116 = vmatprep.subr.bf16.mxu0 0
  %117 = vmatpush2.bf16.msra.mxu0 0
  %118 = vmatprep.subr.bf16.mxu0 0
  %119 = vmatpush2.bf16.msra.mxu0 0
  %120 = vmatprep.subr.bf16.mxu0 0
  %121 = vmatpush2.bf16.msra.mxu0 0
  %122 = vmatprep.subr.bf16.mxu0 0
  %123 = vmatpush2.bf16.msra.mxu0 0
  %124 = vmatprep.subr.bf16.mxu0 0
  %125 = vmatpush2.bf16.msra.mxu0 0
  %126 = vmatprep.mubr.bf16.mxu0 0
  %127 = vmatmul.mubr.bf16.gmra.mxu0 %v44
  %v128 = vpop.f32.mrf.mxu0
  %v129 = vadd.f32 %v38, %v128
  %v130 = vpop.f32.mrf.mxu0
  %v131 = vpop.f32.mrf.mxu0
  %v132 = vadd.f32 %v38, %v131
  %v133 = vpop.f32.mrf.mxu0
  %134 = vdwg.mxu0
  %135 = vst [vmem:[%s3] sm:$0xff] %v129
  %136 = vst [vmem:[%s3 + $0x8] sm:$0xff] %v132
  // Predicated region
  $region14: #{vgg_forward.13} parent=0 // pred_check
    _
  $region15: #{vgg_forward.13} parent=0 // pred_check_branch
    %138 = sbr.rel (0) target = $region17
  $region16: #{vgg_forward.13} parent=0 // pred_region
    _
  $region17: #{vgg_forward.13} parent=0 // pred_fallthru
    _
  // Predicated region
  $region18: #{vgg_forward.13} parent=0 // pred_check
    _
  $region19: #{vgg_forward.13} parent=0 // pred_check_branch
    %140 = sbr.rel (0) target = $region21
  $region20: #{vgg_forward.13} parent=0 // pred_region
    _
  $region21: #{vgg_forward.13} parent=0 // pred_fallthru
    _

</llo_original>
